<compile_context>
chip_gen: v7x
topology: tpu7x:2x2x1
jax: 0.10.0
libtpu: 0.0.40
codegen_flags: <defaults>
</compile_context>

<pallas_src>
import functools

import numpy as np
import jax
import jax.numpy as jnp
from jax import lax
from jax.experimental import pallas as pl
from jax.experimental.pallas import tpu as pltpu


def _round_up(x, m):
    return (x + m - 1) // m * m


def _cdiv(a, b):
    return -(-a // b)


def _vmem_capacity_bytes():
    """Generation-aware physical VMEM size (64 MiB v7x, 128 MiB v5e/v6e)."""
    try:
        cap = getattr(pltpu.get_tpu_info(), "vmem_capacity_bytes", None)
        if cap:
            return int(cap)
    except Exception:
        pass
    return 64 << 20        # most conservative (v7x-sized) fallback


def postnet_fused_kernel(xcol_ref, w0_ref, b0_ref, wr_ref, br_ref, o_ref,
                         buf_a, buf_b, *, K, L, T, LPt, H, num_layers,
                         pad_left, compute_dtype):
    """All PostNet layers for one (batch, length-tile) grid point.

    xcol_ref: (1, 1, LPt, K*Cin0)  im2col'ed layer-0 input (compute dtype)
    w0_ref  : (K*Cin0, Cp)         layer-0 weights (compute dtype)
    b0_ref  : (1, Cp)              layer-0 bias (f32)
    wr_ref  : (NL-1, K, Cp, Cp)    remaining layers' weights (compute dtype)
    br_ref  : (NL-1, 1, Cp)        remaining layers' biases (f32)
    o_ref   : (1, 1, T, Cp)        output tile (f32, lane-dense Cp)
    buf_a/b : (LPt, Cp)            ping-pong activation scratch (compute dtype)
    """
    Cp = o_ref.shape[-1]
    nl_rest = num_layers - 1

    # Which extended-tile rows correspond to global positions inside [0, L).
    # Rows outside are kept exactly 0 so the next layer's 'same' zero padding
    # (and the roll wrap-around) is reproduced exactly.
    t = pl.program_id(1)
    g0 = t * T - H                                    # global row of tile row 0
    g = lax.broadcasted_iota(jnp.int32, (LPt, Cp), 0) + g0
    row_valid = jnp.logical_and(g >= 0, g < L)
    # NOTE: interior tiles have row_valid == all-True; the select there is pure
    # VPU filler under the MXU (only a minor v5e concern).

    # 32-bit activations: rolling the input costs the same bytes as rolling the
    # result and keeps the MXU->accumulate chain XLU-free.  Packed (bf16)
    # activations: roll the f32 matmul result instead (safe lowering path).
    roll_input = np.dtype(compute_dtype).itemsize == 4

    # ---- Layer 0: pre-im2col'ed input -> a single well-filled MXU matmul ----
    acc = jnp.dot(xcol_ref[0, 0], w0_ref[...],
                  preferred_element_type=jnp.float32)
    acc = acc + b0_ref[...]
    acc = jnp.where(row_valid, acc, 0.0)
    buf_a[...] = jnp.tanh(acc).astype(compute_dtype)  # tanh(0)=0 keeps halo zero

    # ---- Layers 1 .. NL-1: K MXU taps, accumulated in f32 ----
    bufs = (buf_a, buf_b)
    for li in range(nl_rest):
        last = li == nl_rest - 1
        x_in = bufs[li % 2][...]
        acc = jnp.zeros((LPt, Cp), jnp.float32)
        for k in range(K):                             # static unroll, K small
            shift = (pad_left - k) % LPt
            if roll_input:
                xk = pltpu.roll(x_in, shift, 0) if shift else x_in
                acc = acc + jnp.dot(xk, wr_ref[li, k],
                                    preferred_element_type=jnp.float32)
            else:
                yk = jnp.dot(x_in, wr_ref[li, k],
                             preferred_element_type=jnp.float32)
                acc = acc + (pltpu.roll(yk, shift, 0) if shift else yk)
        acc = acc + br_ref[li]                         # (1, Cp) broadcast
        if last:
            # Final layer: no tanh, no mask needed; emit only the central T
            # rows (sublane-aligned slice since H % 8 == 0).  The +/-H halo
            # absorbs all tile-edge / roll-wrap error.
            o_ref[0, 0] = acc[H:H + T].astype(o_ref.dtype)
        else:
            acc = jnp.where(row_valid, acc, 0.0)
            bufs[(li + 1) % 2][...] = jnp.tanh(acc).astype(compute_dtype)


def init_postnet_params(key, input_units, num_layers=5, kernel_size=5,
                        channels=512):
    """Deterministic init mimicking nn.Conv1d defaults (+/- 1/sqrt(fan_in)).

    Weights are in PyTorch layout (Cout, Cin, K).
    """
    params = []
    cin = input_units
    for _ in range(num_layers):
        key, kw, kb = jax.random.split(key, 3)
        bound = 1.0 / (cin * kernel_size) ** 0.5
        w = jax.random.uniform(kw, (channels, cin, kernel_size),
                               jnp.float32, -bound, bound)
        b = jax.random.uniform(kb, (channels,), jnp.float32, -bound, bound)
        params.append((w, b))
        cin = channels
    return params


def prepare_postnet_params(torch_layout_params, *, compute_dtype=jnp.bfloat16,
                           lane_multiple=128):
    """One-time weight prep: transpose, lane-pad channels, cast.

    bfloat16 is the default compute dtype (MXU bf16 path, halved weight VMEM);
    pass compute_dtype=jnp.float32 for strict PyTorch parity.
    BatchNorm is training-only in this module, so there is nothing to fold;
    if a BN-in-eval variant is needed, fold running stats/affine here.
    """
    assert len(torch_layout_params) >= 2
    w_first, b_first = torch_layout_params[0]
    C, Cin0, K = w_first.shape
    assert K % 2 == 1, "padding='same' reproduction assumes odd kernel_size"
    Cp = _round_up(C, lane_multiple)

    def pad_cout(w_kic):                       # (K, Cin, C) -> (K, Cin, Cp)
        return jnp.pad(w_kic, ((0, 0), (0, 0), (0, Cp - C)))

    def prep_b(b):
        return jnp.pad(b, (0, Cp - C)).reshape(1, Cp).astype(jnp.float32)

    # Layer 0 in im2col layout: (Cout, Cin0, K) -> (K*Cin0, Cp), k-major rows.
    w0 = pad_cout(jnp.transpose(w_first, (2, 1, 0))).reshape(K * Cin0, Cp)
    w0 = w0.astype(compute_dtype)
    b0 = prep_b(b_first)

    wr, br = [], []
    for w, b in torch_layout_params[1:]:
        assert w.shape == (C, C, K)
        wp = pad_cout(jnp.transpose(w, (2, 1, 0)))            # (K, C, Cp)
        wp = jnp.pad(wp, ((0, 0), (0, Cp - C), (0, 0)))       # zero-pad Cin too
        wr.append(wp.astype(compute_dtype))
        br.append(prep_b(b))

    return dict(
        w0=w0, b0=b0, wr=jnp.stack(wr), br=jnp.stack(br),
        channels=C, channels_padded=Cp, kernel_size=K, input_units=Cin0,
        num_layers=len(torch_layout_params), compute_dtype=compute_dtype,
    )


def postnet_forward(x_ncl, params, *, tile_rows=512, channels_last_output=False):
    """PostNet forward.  x_ncl: (B, input_units, L), like the PyTorch module.

    Returns (B, channels, L) by default (module layout).  Set
    channels_last_output=True to skip the final transpose (saves one un-hidden
    HBM pass if the consumer accepts (B, L, channels)).
    """
    K = params["kernel_size"]
    C = params["channels"]
    Cp = params["channels_padded"]
    NL = params["num_layers"]
    cdt = params["compute_dtype"]
    Cin0 = params["input_units"]
    pad_left = (K - 1) // 2

    B, cin, L = x_ncl.shape
    assert cin == Cin0, (cin, Cin0)
    assert params["w0"].shape[0] == K * Cin0

    # Length tiling: T output rows per tile + H halo rows on each side.
    H = _round_up(NL * pad_left, 8)            # >= receptive-field growth, 8-aligned
    T = min(_round_up(tile_rows, 8), _round_up(L, 8))
    n_tiles = _cdiv(L, T)
    LPt = T + 2 * H                            # extended (halo'ed) tile rows
    assert H >= NL * pad_left and H % 8 == 0 and LPt % 8 == 0
    assert LPt >= T + 2 * NL * pad_left        # roll-wrap / halo margin

    # ---- Layer-0 im2col in the wrapper (tiny tensor; removes K-1 under-filled
    # MXU taps and all layer-0 in-kernel rolls). ----
    x_nlc = jnp.transpose(x_ncl, (0, 2, 1))                       # (B, L, Cin0)
    xz = jnp.pad(x_nlc, ((0, 0), (pad_left, pad_left), (0, 0)))
    xcol = jnp.concatenate([xz[:, k:k + L, :] for k in range(K)],
                           axis=-1)                               # (B, L, K*Cin0)

    # ---- Overlapped length tiles with H-row halos (zero outside [0, L)). ----
    total = n_tiles * T + 2 * H
    xcol = jnp.pad(xcol, ((0, 0), (H, total - H - L), (0, 0)))
    x_tiles = jnp.stack([xcol[:, t * T: t * T + LPt, :]
                         for t in range(n_tiles)], axis=1).astype(cdt)

    w0, b0, wr, br = params["w0"], params["b0"], params["wr"], params["br"]

    kernel = functools.partial(
        postnet_fused_kernel, K=K, L=L, T=T, LPt=LPt, H=H, num_layers=NL,
        pad_left=pad_left, compute_dtype=cdt)

    itemsize = np.dtype(cdt).itemsize
    vmem_est = (2 * (LPt * K * Cin0 * itemsize + w0.nbytes + b0.nbytes
                     + wr.nbytes + br.nbytes + T * Cp * 4)
                + 2 * LPt * Cp * itemsize)
    vmem_cap = _vmem_capacity_bytes()
    vmem_limit = int(min(max(vmem_est + (8 << 20), 32 << 20),
                         int(vmem_cap * 0.9)))

    out = pl.pallas_call(
        kernel,
        out_shape=jax.ShapeDtypeStruct((B, n_tiles, T, Cp), jnp.float32),
        grid_spec=pltpu.PrefetchScalarGridSpec(
            num_scalar_prefetch=0,
            grid=(B, n_tiles),
            in_specs=[
                pl.BlockSpec((1, 1, LPt, K * Cin0), lambda b, t: (b, t, 0, 0)),
                pl.BlockSpec(w0.shape, lambda b, t: (0, 0)),
                pl.BlockSpec(b0.shape, lambda b, t: (0, 0)),
                pl.BlockSpec(wr.shape, lambda b, t: (0, 0, 0, 0)),
                pl.BlockSpec(br.shape, lambda b, t: (0, 0, 0)),
            ],
            out_specs=pl.BlockSpec((1, 1, T, Cp), lambda b, t: (b, t, 0, 0)),
            scratch_shapes=[pltpu.VMEM((LPt, Cp), cdt),
                            pltpu.VMEM((LPt, Cp), cdt)],
        ),
        compiler_params=pltpu.CompilerParams(
            dimension_semantics=("parallel", "parallel"),
            vmem_limit_bytes=vmem_limit),
    )(x_tiles, w0, b0, wr, br)

    out = out.reshape(B, n_tiles * T, Cp)[:, :L, :C]   # drop tile/lane padding
    if channels_last_output:
        return out                                     # (B, L, C)
    return jnp.transpose(out, (0, 2, 1))               # (B, C, L), module layout


def ref_forward(x_ncl, torch_layout_params):
    """Pure-JAX reference (lax conv), same eval-mode semantics."""
    y = x_ncl
    n = len(torch_layout_params)
    for i, (w, b) in enumerate(torch_layout_params):
        y = lax.conv_general_dilated(
            y, w, window_strides=(1,), padding="SAME",
            dimension_numbers=("NCH", "OIH", "NCH"))
        y = y + b[None, :, None]
        if i < n - 1:
            y = jnp.tanh(y)
    return y


if __name__ == "__main__":
    # Small shapes consistent with the module: batch=2, input_units=16,
    # postnet_channels=32, kernel_size=5, 5 layers; two sequence lengths to
    # exercise both the single-tile and the multi-length-tile paths.
    B, INPUT_UNITS = 2, 16
    CHANNELS, K, NUM_LAYERS = 32, 5, 5

    key = jax.random.PRNGKey(0)
    key, k1, k2 = jax.random.split(key, 3)
    raw_params = init_postnet_params(key, INPUT_UNITS, NUM_LAYERS, K, CHANNELS)

    x1 = jax.random.normal(k1, (B, INPUT_UNITS, 24), jnp.float32)
    x2 = jax.random.normal(k2, (B, INPUT_UNITS, 53), jnp.float32)
    ref1 = ref_forward(x1, raw_params)
    ref2 = ref_forward(x2, raw_params)

    # ---- f32 compute path: strict parity with the (eval-mode) module ----
    p_f32 = prepare_postnet_params(raw_params, compute_dtype=jnp.float32)

    fwd = jax.jit(functools.partial(postnet_forward, params=p_f32))
    out = jax.block_until_ready(fwd(x1))
    assert out.shape == (B, CHANNELS, 24), out.shape
    assert jnp.allclose(out, ref1, atol=2e-4, rtol=2e-4)

    fwd_tiled = jax.jit(functools.partial(postnet_forward, params=p_f32,
                                          tile_rows=16))
    out = jax.block_until_ready(fwd_tiled(x2))          # 4 length tiles
    assert out.shape == (B, CHANNELS, 53), out.shape
    assert jnp.allclose(out, ref2, atol=2e-4, rtol=2e-4)

    # ---- bf16 compute path (default): MXU-friendly; accum/bias/tanh in f32 ----
    p_bf16 = prepare_postnet_params(raw_params)         # bf16 is the default

    fwd = jax.jit(functools.partial(postnet_forward, params=p_bf16))
    out = jax.block_until_ready(fwd(x1))
    assert out.shape == (B, CHANNELS, 24), out.shape
    assert jnp.allclose(out, ref1, atol=5e-2, rtol=5e-2)

    fwd_tiled = jax.jit(functools.partial(postnet_forward, params=p_bf16,
                                          tile_rows=16))
    out = jax.block_until_ready(fwd_tiled(x2))
    assert out.shape == (B, CHANNELS, 53), out.shape
    assert jnp.allclose(out, ref2, atol=5e-2, rtol=5e-2)

    print("KERNEL_OK")
</pallas_src>

<mosaic_0001>
module attributes {stable_mosaic.version = 11 : i64} {
  func.func @postnet_fused_kernel(%arg0: i32, %arg1: i32, %arg2: memref<1x1x56x80xf32, #tpu.memory_space<vmem>>, %arg3: memref<80x128xf32, #tpu.memory_space<vmem>>, %arg4: memref<1x128xf32, #tpu.memory_space<vmem>>, %arg5: memref<4x5x128x128xf32, #tpu.memory_space<vmem>>, %arg6: memref<4x1x128xf32, #tpu.memory_space<vmem>>, %arg7: memref<1x1x24x128xf32, #tpu.memory_space<vmem>>, %arg8: memref<56x128xf32, #tpu.memory_space<vmem>>, %arg9: memref<56x128xf32, #tpu.memory_space<vmem>>) attributes {dimension_semantics = [#tpu.dimension_semantics<parallel>, #tpu.dimension_semantics<parallel>], iteration_bounds = array<i64: 2, 1>, scalar_prefetch = 0 : i64, scratch_operands = 2 : i64, tpu.core_type = #tpu.core_type<tc>, window_params = [{transform_indices = @transform_0, window_bounds = array<i64: 1, 1, 56, 80>}, {pipeline_mode = #tpu.pipeline_mode<synchronous>, transform_indices = @transform_1, window_bounds = array<i64: 80, 128>}, {pipeline_mode = #tpu.pipeline_mode<synchronous>, transform_indices = @transform_2, window_bounds = array<i64: 1, 128>}, {pipeline_mode = #tpu.pipeline_mode<synchronous>, transform_indices = @transform_3, window_bounds = array<i64: 4, 5, 128, 128>}, {pipeline_mode = #tpu.pipeline_mode<synchronous>, transform_indices = @transform_4, window_bounds = array<i64: 4, 1, 128>}, {transform_indices = @transform_5, window_bounds = array<i64: 1, 1, 24, 128>}]} {
    %c24_i32 = arith.constant 24 : i32
    %0 = arith.muli %arg1, %c24_i32 : i32
    %c16_i32 = arith.constant 16 : i32
    %1 = arith.subi %0, %c16_i32 : i32
    %2 = tpu.iota {dimensions = array<i32: 0>} : vector<56x128xi32>
    %3 = vector.broadcast %1 : i32 to vector<56x128xi32>
    %4 = arith.addi %2, %3 : vector<56x128xi32>
    %c0_i32 = arith.constant 0 : i32
    %5 = vector.broadcast %c0_i32 : i32 to vector<56x128xi32>
    %6 = arith.cmpi sge, %4, %5 : vector<56x128xi32>
    %c24_i32_0 = arith.constant 24 : i32
    %7 = vector.broadcast %c24_i32_0 : i32 to vector<56x128xi32>
    %8 = arith.cmpi slt, %4, %7 : vector<56x128xi32>
    %9 = arith.andi %6, %8 : vector<56x128xi1>
    %c0 = arith.constant 0 : index
    %c0_1 = arith.constant 0 : index
    %c0_2 = arith.constant 0 : index
    %c0_3 = arith.constant 0 : index
    %10 = vector.load %arg2[%c0, %c0_1, %c0_2, %c0_3] : memref<1x1x56x80xf32, #tpu.memory_space<vmem>>, vector<1x1x56x80xf32>
    %11 = vector.shape_cast %10 : vector<1x1x56x80xf32> to vector<56x80xf32>
    %c0_4 = arith.constant 0 : index
    %c0_5 = arith.constant 0 : index
    %12 = vector.load %arg3[%c0_4, %c0_5] : memref<80x128xf32, #tpu.memory_space<vmem>>, vector<80x128xf32>
    %cst = arith.constant dense<0.000000e+00> : vector<56x128xf32>
    %13 = tpu.matmul %11, %12, %cst {dimension_numbers = #tpu.dot_dimension_numbers<[1], [0], [0], [1], [0, 0, 1, 1], [], []>} : vector<56x80xf32>, vector<80x128xf32>, vector<56x128xf32> -> vector<56x128xf32>
    %c0_6 = arith.constant 0 : index
    %c0_7 = arith.constant 0 : index
    %14 = vector.load %arg4[%c0_6, %c0_7] : memref<1x128xf32, #tpu.memory_space<vmem>>, vector<1x128xf32>
    %15 = vector.broadcast %14 : vector<1x128xf32> to vector<56x128xf32>
    %16 = arith.addf %13, %15 : vector<56x128xf32>
    %cst_8 = arith.constant 0.000000e+00 : f32
    %17 = vector.broadcast %cst_8 : f32 to vector<56x128xf32>
    %18 = arith.select %9, %16, %17 : vector<56x128xi1>, vector<56x128xf32>
    %19 = math.tanh %18 : vector<56x128xf32>
    %c0_9 = arith.constant 0 : index
    %c0_10 = arith.constant 0 : index
    %20 = vector.load %arg8[%c0_9, %c0_10] : memref<56x128xf32, #tpu.memory_space<vmem>>, vector<56x128xf32>
    tpu.vector_store %arg8[%c0_9, %c0_10], %19 {strides = array<i32>} : memref<56x128xf32, #tpu.memory_space<vmem>>, vector<56x128xf32>,
    %c0_11 = arith.constant 0 : index
    %c0_12 = arith.constant 0 : index
    %21 = vector.load %arg8[%c0_11, %c0_12] : memref<56x128xf32, #tpu.memory_space<vmem>>, vector<56x128xf32>
    %cst_13 = arith.constant 0.000000e+00 : f32
    %22 = vector.broadcast %cst_13 : f32 to vector<56x128xf32>
    %c2_i32 = arith.constant 2 : i32
    %23 = tpu.dynamic_rotate %21 by %c2_i32 dim 0 : vector<56x128xf32>, i32 -> vector<56x128xf32>
    %c0_14 = arith.constant 0 : index
    %c0_15 = arith.constant 0 : index
    %c0_16 = arith.constant 0 : index
    %c0_17 = arith.constant 0 : index
    %24 = vector.load %arg5[%c0_14, %c0_15, %c0_16, %c0_17] : memref<4x5x128x128xf32, #tpu.memory_space<vmem>>, vector<1x1x128x128xf32>
    %25 = vector.shape_cast %24 : vector<1x1x128x128xf32> to vector<128x128xf32>
    %cst_18 = arith.constant dense<0.000000e+00> : vector<56x128xf32>
    %26 = tpu.matmul %23, %25, %cst_18 {dimension_numbers = #tpu.dot_dimension_numbers<[1], [0], [0], [1], [0, 0, 1, 1], [], []>} : vector<56x128xf32>, vector<128x128xf32>, vector<56x128xf32> -> vector<56x128xf32>
    %27 = arith.addf %22, %26 : vector<56x128xf32>
    %c1_i32 = arith.constant 1 : i32
    %28 = tpu.dynamic_rotate %21 by %c1_i32 dim 0 : vector<56x128xf32>, i32 -> vector<56x128xf32>
    %c0_19 = arith.constant 0 : index
    %c1 = arith.constant 1 : index
    %c0_20 = arith.constant 0 : index
    %c0_21 = arith.constant 0 : index
    %29 = vector.load %arg5[%c0_19, %c1, %c0_20, %c0_21] : memref<4x5x128x128xf32, #tpu.memory_space<vmem>>, vector<1x1x128x128xf32>
    %30 = vector.shape_cast %29 : vector<1x1x128x128xf32> to vector<128x128xf32>
    %cst_22 = arith.constant dense<0.000000e+00> : vector<56x128xf32>
    %31 = tpu.matmul %28, %30, %cst_22 {dimension_numbers = #tpu.dot_dimension_numbers<[1], [0], [0], [1], [0, 0, 1, 1], [], []>} : vector<56x128xf32>, vector<128x128xf32>, vector<56x128xf32> -> vector<56x128xf32>
    %32 = arith.addf %27, %31 : vector<56x128xf32>
    %c0_23 = arith.constant 0 : index
    %c2 = arith.constant 2 : index
    %c0_24 = arith.constant 0 : index
    %c0_25 = arith.constant 0 : index
    %33 = vector.load %arg5[%c0_23, %c2, %c0_24, %c0_25] : memref<4x5x128x128xf32, #tpu.memory_space<vmem>>, vector<1x1x128x128xf32>
    %34 = vector.shape_cast %33 : vector<1x1x128x128xf32> to vector<128x128xf32>
    %cst_26 = arith.constant dense<0.000000e+00> : vector<56x128xf32>
    %35 = tpu.matmul %21, %34, %cst_26 {dimension_numbers = #tpu.dot_dimension_numbers<[1], [0], [0], [1], [0, 0, 1, 1], [], []>} : vector<56x128xf32>, vector<128x128xf32>, vector<56x128xf32> -> vector<56x128xf32>
    %36 = arith.addf %32, %35 : vector<56x128xf32>
    %c55_i32 = arith.constant 55 : i32
    %37 = tpu.dynamic_rotate %21 by %c55_i32 dim 0 : vector<56x128xf32>, i32 -> vector<56x128xf32>
    %c0_27 = arith.constant 0 : index
    %c3 = arith.constant 3 : index
    %c0_28 = arith.constant 0 : index
    %c0_29 = arith.constant 0 : index
    %38 = vector.load %arg5[%c0_27, %c3, %c0_28, %c0_29] : memref<4x5x128x128xf32, #tpu.memory_space<vmem>>, vector<1x1x128x128xf32>
    %39 = vector.shape_cast %38 : vector<1x1x128x128xf32> to vector<128x128xf32>
    %cst_30 = arith.constant dense<0.000000e+00> : vector<56x128xf32>
    %40 = tpu.matmul %37, %39, %cst_30 {dimension_numbers = #tpu.dot_dimension_numbers<[1], [0], [0], [1], [0, 0, 1, 1], [], []>} : vector<56x128xf32>, vector<128x128xf32>, vector<56x128xf32> -> vector<56x128xf32>
    %41 = arith.addf %36, %40 : vector<56x128xf32>
    %c54_i32 = arith.constant 54 : i32
    %42 = tpu.dynamic_rotate %21 by %c54_i32 dim 0 : vector<56x128xf32>, i32 -> vector<56x128xf32>
    %c0_31 = arith.constant 0 : index
    %c4 = arith.constant 4 : index
    %c0_32 = arith.constant 0 : index
    %c0_33 = arith.constant 0 : index
    %43 = vector.load %arg5[%c0_31, %c4, %c0_32, %c0_33] : memref<4x5x128x128xf32, #tpu.memory_space<vmem>>, vector<1x1x128x128xf32>
    %44 = vector.shape_cast %43 : vector<1x1x128x128xf32> to vector<128x128xf32>
    %cst_34 = arith.constant dense<0.000000e+00> : vector<56x128xf32>
    %45 = tpu.matmul %42, %44, %cst_34 {dimension_numbers = #tpu.dot_dimension_numbers<[1], [0], [0], [1], [0, 0, 1, 1], [], []>} : vector<56x128xf32>, vector<128x128xf32>, vector<56x128xf32> -> vector<56x128xf32>
    %46 = arith.addf %41, %45 : vector<56x128xf32>
    %c0_35 = arith.constant 0 : index
    %c0_36 = arith.constant 0 : index
    %c0_37 = arith.constant 0 : index
    %47 = vector.load %arg6[%c0_35, %c0_36, %c0_37] : memref<4x1x128xf32, #tpu.memory_space<vmem>>, vector<1x1x128xf32>
    %48 = vector.shape_cast %47 : vector<1x1x128xf32> to vector<1x128xf32>
    %49 = vector.broadcast %48 : vector<1x128xf32> to vector<56x128xf32>
    %50 = arith.addf %46, %49 : vector<56x128xf32>
    %cst_38 = arith.constant 0.000000e+00 : f32
    %51 = vector.broadcast %cst_38 : f32 to vector<56x128xf32>
    %52 = arith.select %9, %50, %51 : vector<56x128xi1>, vector<56x128xf32>
    %53 = math.tanh %52 : vector<56x128xf32>
    %c0_39 = arith.constant 0 : index
    %c0_40 = arith.constant 0 : index
    %54 = vector.load %arg9[%c0_39, %c0_40] : memref<56x128xf32, #tpu.memory_space<vmem>>, vector<56x128xf32>
    tpu.vector_store %arg9[%c0_39, %c0_40], %53 {strides = array<i32>} : memref<56x128xf32, #tpu.memory_space<vmem>>, vector<56x128xf32>,
    %c0_41 = arith.constant 0 : index
    %c0_42 = arith.constant 0 : index
    %55 = vector.load %arg9[%c0_41, %c0_42] : memref<56x128xf32, #tpu.memory_space<vmem>>, vector<56x128xf32>
    %cst_43 = arith.constant 0.000000e+00 : f32
    %56 = vector.broadcast %cst_43 : f32 to vector<56x128xf32>
    %c2_i32_44 = arith.constant 2 : i32
    %57 = tpu.dynamic_rotate %55 by %c2_i32_44 dim 0 : vector<56x128xf32>, i32 -> vector<56x128xf32>
    %c1_45 = arith.constant 1 : index
    %c0_46 = arith.constant 0 : index
    %c0_47 = arith.constant 0 : index
    %c0_48 = arith.constant 0 : index
    %58 = vector.load %arg5[%c1_45, %c0_46, %c0_47, %c0_48] : memref<4x5x128x128xf32, #tpu.memory_space<vmem>>, vector<1x1x128x128xf32>
    %59 = vector.shape_cast %58 : vector<1x1x128x128xf32> to vector<128x128xf32>
    %cst_49 = arith.constant dense<0.000000e+00> : vector<56x128xf32>
    %60 = tpu.matmul %57, %59, %cst_49 {dimension_numbers = #tpu.dot_dimension_numbers<[1], [0], [0], [1], [0, 0, 1, 1], [], []>} : vector<56x128xf32>, vector<128x128xf32>, vector<56x128xf32> -> vector<56x128xf32>
    %61 = arith.addf %56, %60 : vector<56x128xf32>
    %c1_i32_50 = arith.constant 1 : i32
    %62 = tpu.dynamic_rotate %55 by %c1_i32_50 dim 0 : vector<56x128xf32>, i32 -> vector<56x128xf32>
    %c1_51 = arith.constant 1 : index
    %c1_52 = arith.constant 1 : index
    %c0_53 = arith.constant 0 : index
    %c0_54 = arith.constant 0 : index
    %63 = vector.load %arg5[%c1_51, %c1_52, %c0_53, %c0_54] : memref<4x5x128x128xf32, #tpu.memory_space<vmem>>, vector<1x1x128x128xf32>
    %64 = vector.shape_cast %63 : vector<1x1x128x128xf32> to vector<128x128xf32>
    %cst_55 = arith.constant dense<0.000000e+00> : vector<56x128xf32>
    %65 = tpu.matmul %62, %64, %cst_55 {dimension_numbers = #tpu.dot_dimension_numbers<[1], [0], [0], [1], [0, 0, 1, 1], [], []>} : vector<56x128xf32>, vector<128x128xf32>, vector<56x128xf32> -> vector<56x128xf32>
    %66 = arith.addf %61, %65 : vector<56x128xf32>
    %c1_56 = arith.constant 1 : index
    %c2_57 = arith.constant 2 : index
    %c0_58 = arith.constant 0 : index
    %c0_59 = arith.constant 0 : index
    %67 = vector.load %arg5[%c1_56, %c2_57, %c0_58, %c0_59] : memref<4x5x128x128xf32, #tpu.memory_space<vmem>>, vector<1x1x128x128xf32>
    %68 = vector.shape_cast %67 : vector<1x1x128x128xf32> to vector<128x128xf32>
    %cst_60 = arith.constant dense<0.000000e+00> : vector<56x128xf32>
    %69 = tpu.matmul %55, %68, %cst_60 {dimension_numbers = #tpu.dot_dimension_numbers<[1], [0], [0], [1], [0, 0, 1, 1], [], []>} : vector<56x128xf32>, vector<128x128xf32>, vector<56x128xf32> -> vector<56x128xf32>
    %70 = arith.addf %66, %69 : vector<56x128xf32>
    %c55_i32_61 = arith.constant 55 : i32
    %71 = tpu.dynamic_rotate %55 by %c55_i32_61 dim 0 : vector<56x128xf32>, i32 -> vector<56x128xf32>
    %c1_62 = arith.constant 1 : index
    %c3_63 = arith.constant 3 : index
    %c0_64 = arith.constant 0 : index
    %c0_65 = arith.constant 0 : index
    %72 = vector.load %arg5[%c1_62, %c3_63, %c0_64, %c0_65] : memref<4x5x128x128xf32, #tpu.memory_space<vmem>>, vector<1x1x128x128xf32>
    %73 = vector.shape_cast %72 : vector<1x1x128x128xf32> to vector<128x128xf32>
    %cst_66 = arith.constant dense<0.000000e+00> : vector<56x128xf32>
    %74 = tpu.matmul %71, %73, %cst_66 {dimension_numbers = #tpu.dot_dimension_numbers<[1], [0], [0], [1], [0, 0, 1, 1], [], []>} : vector<56x128xf32>, vector<128x128xf32>, vector<56x128xf32> -> vector<56x128xf32>
    %75 = arith.addf %70, %74 : vector<56x128xf32>
    %c54_i32_67 = arith.constant 54 : i32
    %76 = tpu.dynamic_rotate %55 by %c54_i32_67 dim 0 : vector<56x128xf32>, i32 -> vector<56x128xf32>
    %c1_68 = arith.constant 1 : index
    %c4_69 = arith.constant 4 : index
    %c0_70 = arith.constant 0 : index
    %c0_71 = arith.constant 0 : index
    %77 = vector.load %arg5[%c1_68, %c4_69, %c0_70, %c0_71] : memref<4x5x128x128xf32, #tpu.memory_space<vmem>>, vector<1x1x128x128xf32>
    %78 = vector.shape_cast %77 : vector<1x1x128x128xf32> to vector<128x128xf32>
    %cst_72 = arith.constant dense<0.000000e+00> : vector<56x128xf32>
    %79 = tpu.matmul %76, %78, %cst_72 {dimension_numbers = #tpu.dot_dimension_numbers<[1], [0], [0], [1], [0, 0, 1, 1], [], []>} : vector<56x128xf32>, vector<128x128xf32>, vector<56x128xf32> -> vector<56x128xf32>
    %80 = arith.addf %75, %79 : vector<56x128xf32>
    %c1_73 = arith.constant 1 : index
    %c0_74 = arith.constant 0 : index
    %c0_75 = arith.constant 0 : index
    %81 = vector.load %arg6[%c1_73, %c0_74, %c0_75] : memref<4x1x128xf32, #tpu.memory_space<vmem>>, vector<1x1x128xf32>
    %82 = vector.shape_cast %81 : vector<1x1x128xf32> to vector<1x128xf32>
    %83 = vector.broadcast %82 : vector<1x128xf32> to vector<56x128xf32>
    %84 = arith.addf %80, %83 : vector<56x128xf32>
    %cst_76 = arith.constant 0.000000e+00 : f32
    %85 = vector.broadcast %cst_76 : f32 to vector<56x128xf32>
    %86 = arith.select %9, %84, %85 : vector<56x128xi1>, vector<56x128xf32>
    %87 = math.tanh %86 : vector<56x128xf32>
    %c0_77 = arith.constant 0 : index
    %c0_78 = arith.constant 0 : index
    %88 = vector.load %arg8[%c0_77, %c0_78] : memref<56x128xf32, #tpu.memory_space<vmem>>, vector<56x128xf32>
    tpu.vector_store %arg8[%c0_77, %c0_78], %87 {strides = array<i32>} : memref<56x128xf32, #tpu.memory_space<vmem>>, vector<56x128xf32>,
    %c0_79 = arith.constant 0 : index
    %c0_80 = arith.constant 0 : index
    %89 = vector.load %arg8[%c0_79, %c0_80] : memref<56x128xf32, #tpu.memory_space<vmem>>, vector<56x128xf32>
    %cst_81 = arith.constant 0.000000e+00 : f32
    %90 = vector.broadcast %cst_81 : f32 to vector<56x128xf32>
    %c2_i32_82 = arith.constant 2 : i32
    %91 = tpu.dynamic_rotate %89 by %c2_i32_82 dim 0 : vector<56x128xf32>, i32 -> vector<56x128xf32>
    %c2_83 = arith.constant 2 : index
    %c0_84 = arith.constant 0 : index
    %c0_85 = arith.constant 0 : index
    %c0_86 = arith.constant 0 : index
    %92 = vector.load %arg5[%c2_83, %c0_84, %c0_85, %c0_86] : memref<4x5x128x128xf32, #tpu.memory_space<vmem>>, vector<1x1x128x128xf32>
    %93 = vector.shape_cast %92 : vector<1x1x128x128xf32> to vector<128x128xf32>
    %cst_87 = arith.constant dense<0.000000e+00> : vector<56x128xf32>
    %94 = tpu.matmul %91, %93, %cst_87 {dimension_numbers = #tpu.dot_dimension_numbers<[1], [0], [0], [1], [0, 0, 1, 1], [], []>} : vector<56x128xf32>, vector<128x128xf32>, vector<56x128xf32> -> vector<56x128xf32>
    %95 = arith.addf %90, %94 : vector<56x128xf32>
    %c1_i32_88 = arith.constant 1 : i32
    %96 = tpu.dynamic_rotate %89 by %c1_i32_88 dim 0 : vector<56x128xf32>, i32 -> vector<56x128xf32>
    %c2_89 = arith.constant 2 : index
    %c1_90 = arith.constant 1 : index
    %c0_91 = arith.constant 0 : index
    %c0_92 = arith.constant 0 : index
    %97 = vector.load %arg5[%c2_89, %c1_90, %c0_91, %c0_92] : memref<4x5x128x128xf32, #tpu.memory_space<vmem>>, vector<1x1x128x128xf32>
    %98 = vector.shape_cast %97 : vector<1x1x128x128xf32> to vector<128x128xf32>
    %cst_93 = arith.constant dense<0.000000e+00> : vector<56x128xf32>
    %99 = tpu.matmul %96, %98, %cst_93 {dimension_numbers = #tpu.dot_dimension_numbers<[1], [0], [0], [1], [0, 0, 1, 1], [], []>} : vector<56x128xf32>, vector<128x128xf32>, vector<56x128xf32> -> vector<56x128xf32>
    %100 = arith.addf %95, %99 : vector<56x128xf32>
    %c2_94 = arith.constant 2 : index
    %c2_95 = arith.constant 2 : index
    %c0_96 = arith.constant 0 : index
    %c0_97 = arith.constant 0 : index
    %101 = vector.load %arg5[%c2_94, %c2_95, %c0_96, %c0_97] : memref<4x5x128x128xf32, #tpu.memory_space<vmem>>, vector<1x1x128x128xf32>
    %102 = vector.shape_cast %101 : vector<1x1x128x128xf32> to vector<128x128xf32>
    %cst_98 = arith.constant dense<0.000000e+00> : vector<56x128xf32>
    %103 = tpu.matmul %89, %102, %cst_98 {dimension_numbers = #tpu.dot_dimension_numbers<[1], [0], [0], [1], [0, 0, 1, 1], [], []>} : vector<56x128xf32>, vector<128x128xf32>, vector<56x128xf32> -> vector<56x128xf32>
    %104 = arith.addf %100, %103 : vector<56x128xf32>
    %c55_i32_99 = arith.constant 55 : i32
    %105 = tpu.dynamic_rotate %89 by %c55_i32_99 dim 0 : vector<56x128xf32>, i32 -> vector<56x128xf32>
    %c2_100 = arith.constant 2 : index
    %c3_101 = arith.constant 3 : index
    %c0_102 = arith.constant 0 : index
    %c0_103 = arith.constant 0 : index
    %106 = vector.load %arg5[%c2_100, %c3_101, %c0_102, %c0_103] : memref<4x5x128x128xf32, #tpu.memory_space<vmem>>, vector<1x1x128x128xf32>
    %107 = vector.shape_cast %106 : vector<1x1x128x128xf32> to vector<128x128xf32>
    %cst_104 = arith.constant dense<0.000000e+00> : vector<56x128xf32>
    %108 = tpu.matmul %105, %107, %cst_104 {dimension_numbers = #tpu.dot_dimension_numbers<[1], [0], [0], [1], [0, 0, 1, 1], [], []>} : vector<56x128xf32>, vector<128x128xf32>, vector<56x128xf32> -> vector<56x128xf32>
    %109 = arith.addf %104, %108 : vector<56x128xf32>
    %c54_i32_105 = arith.constant 54 : i32
    %110 = tpu.dynamic_rotate %89 by %c54_i32_105 dim 0 : vector<56x128xf32>, i32 -> vector<56x128xf32>
    %c2_106 = arith.constant 2 : index
    %c4_107 = arith.constant 4 : index
    %c0_108 = arith.constant 0 : index
    %c0_109 = arith.constant 0 : index
    %111 = vector.load %arg5[%c2_106, %c4_107, %c0_108, %c0_109] : memref<4x5x128x128xf32, #tpu.memory_space<vmem>>, vector<1x1x128x128xf32>
    %112 = vector.shape_cast %111 : vector<1x1x128x128xf32> to vector<128x128xf32>
    %cst_110 = arith.constant dense<0.000000e+00> : vector<56x128xf32>
    %113 = tpu.matmul %110, %112, %cst_110 {dimension_numbers = #tpu.dot_dimension_numbers<[1], [0], [0], [1], [0, 0, 1, 1], [], []>} : vector<56x128xf32>, vector<128x128xf32>, vector<56x128xf32> -> vector<56x128xf32>
    %114 = arith.addf %109, %113 : vector<56x128xf32>
    %c2_111 = arith.constant 2 : index
    %c0_112 = arith.constant 0 : index
    %c0_113 = arith.constant 0 : index
    %115 = vector.load %arg6[%c2_111, %c0_112, %c0_113] : memref<4x1x128xf32, #tpu.memory_space<vmem>>, vector<1x1x128xf32>
    %116 = vector.shape_cast %115 : vector<1x1x128xf32> to vector<1x128xf32>
    %117 = vector.broadcast %116 : vector<1x128xf32> to vector<56x128xf32>
    %118 = arith.addf %114, %117 : vector<56x128xf32>
    %cst_114 = arith.constant 0.000000e+00 : f32
    %119 = vector.broadcast %cst_114 : f32 to vector<56x128xf32>
    %120 = arith.select %9, %118, %119 : vector<56x128xi1>, vector<56x128xf32>
    %121 = math.tanh %120 : vector<56x128xf32>
    %c0_115 = arith.constant 0 : index
    %c0_116 = arith.constant 0 : index
    %122 = vector.load %arg9[%c0_115, %c0_116] : memref<56x128xf32, #tpu.memory_space<vmem>>, vector<56x128xf32>
    tpu.vector_store %arg9[%c0_115, %c0_116], %121 {strides = array<i32>} : memref<56x128xf32, #tpu.memory_space<vmem>>, vector<56x128xf32>,
    %c0_117 = arith.constant 0 : index
    %c0_118 = arith.constant 0 : index
    %123 = vector.load %arg9[%c0_117, %c0_118] : memref<56x128xf32, #tpu.memory_space<vmem>>, vector<56x128xf32>
    %cst_119 = arith.constant 0.000000e+00 : f32
    %124 = vector.broadcast %cst_119 : f32 to vector<56x128xf32>
    %c2_i32_120 = arith.constant 2 : i32
    %125 = tpu.dynamic_rotate %123 by %c2_i32_120 dim 0 : vector<56x128xf32>, i32 -> vector<56x128xf32>
    %c3_121 = arith.constant 3 : index
    %c0_122 = arith.constant 0 : index
    %c0_123 = arith.constant 0 : index
    %c0_124 = arith.constant 0 : index
    %126 = vector.load %arg5[%c3_121, %c0_122, %c0_123, %c0_124] : memref<4x5x128x128xf32, #tpu.memory_space<vmem>>, vector<1x1x128x128xf32>
    %127 = vector.shape_cast %126 : vector<1x1x128x128xf32> to vector<128x128xf32>
    %cst_125 = arith.constant dense<0.000000e+00> : vector<56x128xf32>
    %128 = tpu.matmul %125, %127, %cst_125 {dimension_numbers = #tpu.dot_dimension_numbers<[1], [0], [0], [1], [0, 0, 1, 1], [], []>} : vector<56x128xf32>, vector<128x128xf32>, vector<56x128xf32> -> vector<56x128xf32>
    %129 = arith.addf %124, %128 : vector<56x128xf32>
    %c1_i32_126 = arith.constant 1 : i32
    %130 = tpu.dynamic_rotate %123 by %c1_i32_126 dim 0 : vector<56x128xf32>, i32 -> vector<56x128xf32>
    %c3_127 = arith.constant 3 : index
    %c1_128 = arith.constant 1 : index
    %c0_129 = arith.constant 0 : index
    %c0_130 = arith.constant 0 : index
    %131 = vector.load %arg5[%c3_127, %c1_128, %c0_129, %c0_130] : memref<4x5x128x128xf32, #tpu.memory_space<vmem>>, vector<1x1x128x128xf32>
    %132 = vector.shape_cast %131 : vector<1x1x128x128xf32> to vector<128x128xf32>
    %cst_131 = arith.constant dense<0.000000e+00> : vector<56x128xf32>
    %133 = tpu.matmul %130, %132, %cst_131 {dimension_numbers = #tpu.dot_dimension_numbers<[1], [0], [0], [1], [0, 0, 1, 1], [], []>} : vector<56x128xf32>, vector<128x128xf32>, vector<56x128xf32> -> vector<56x128xf32>
    %134 = arith.addf %129, %133 : vector<56x128xf32>
    %c3_132 = arith.constant 3 : index
    %c2_133 = arith.constant 2 : index
    %c0_134 = arith.constant 0 : index
    %c0_135 = arith.constant 0 : index
    %135 = vector.load %arg5[%c3_132, %c2_133, %c0_134, %c0_135] : memref<4x5x128x128xf32, #tpu.memory_space<vmem>>, vector<1x1x128x128xf32>
    %136 = vector.shape_cast %135 : vector<1x1x128x128xf32> to vector<128x128xf32>
    %cst_136 = arith.constant dense<0.000000e+00> : vector<56x128xf32>
    %137 = tpu.matmul %123, %136, %cst_136 {dimension_numbers = #tpu.dot_dimension_numbers<[1], [0], [0], [1], [0, 0, 1, 1], [], []>} : vector<56x128xf32>, vector<128x128xf32>, vector<56x128xf32> -> vector<56x128xf32>
    %138 = arith.addf %134, %137 : vector<56x128xf32>
    %c55_i32_137 = arith.constant 55 : i32
    %139 = tpu.dynamic_rotate %123 by %c55_i32_137 dim 0 : vector<56x128xf32>, i32 -> vector<56x128xf32>
    %c3_138 = arith.constant 3 : index
    %c3_139 = arith.constant 3 : index
    %c0_140 = arith.constant 0 : index
    %c0_141 = arith.constant 0 : index
    %140 = vector.load %arg5[%c3_138, %c3_139, %c0_140, %c0_141] : memref<4x5x128x128xf32, #tpu.memory_space<vmem>>, vector<1x1x128x128xf32>
    %141 = vector.shape_cast %140 : vector<1x1x128x128xf32> to vector<128x128xf32>
    %cst_142 = arith.constant dense<0.000000e+00> : vector<56x128xf32>
    %142 = tpu.matmul %139, %141, %cst_142 {dimension_numbers = #tpu.dot_dimension_numbers<[1], [0], [0], [1], [0, 0, 1, 1], [], []>} : vector<56x128xf32>, vector<128x128xf32>, vector<56x128xf32> -> vector<56x128xf32>
    %143 = arith.addf %138, %142 : vector<56x128xf32>
    %c54_i32_143 = arith.constant 54 : i32
    %144 = tpu.dynamic_rotate %123 by %c54_i32_143 dim 0 : vector<56x128xf32>, i32 -> vector<56x128xf32>
    %c3_144 = arith.constant 3 : index
    %c4_145 = arith.constant 4 : index
    %c0_146 = arith.constant 0 : index
    %c0_147 = arith.constant 0 : index
    %145 = vector.load %arg5[%c3_144, %c4_145, %c0_146, %c0_147] : memref<4x5x128x128xf32, #tpu.memory_space<vmem>>, vector<1x1x128x128xf32>
    %146 = vector.shape_cast %145 : vector<1x1x128x128xf32> to vector<128x128xf32>
    %cst_148 = arith.constant dense<0.000000e+00> : vector<56x128xf32>
    %147 = tpu.matmul %144, %146, %cst_148 {dimension_numbers = #tpu.dot_dimension_numbers<[1], [0], [0], [1], [0, 0, 1, 1], [], []>} : vector<56x128xf32>, vector<128x128xf32>, vector<56x128xf32> -> vector<56x128xf32>
    %148 = arith.addf %143, %147 : vector<56x128xf32>
    %c3_149 = arith.constant 3 : index
    %c0_150 = arith.constant 0 : index
    %c0_151 = arith.constant 0 : index
    %149 = vector.load %arg6[%c3_149, %c0_150, %c0_151] : memref<4x1x128xf32, #tpu.memory_space<vmem>>, vector<1x1x128xf32>
    %150 = vector.shape_cast %149 : vector<1x1x128xf32> to vector<1x128xf32>
    %151 = vector.broadcast %150 : vector<1x128xf32> to vector<56x128xf32>
    %152 = arith.addf %148, %151 : vector<56x128xf32>
    %153 = vector.extract_strided_slice %152 {offsets = [16, 0], sizes = [24, 128], strides = [1, 1]} : vector<56x128xf32> to vector<24x128xf32>
    %c0_152 = arith.constant 0 : index
    %c0_153 = arith.constant 0 : index
    %c0_154 = arith.constant 0 : index
    %c0_155 = arith.constant 0 : index
    %154 = vector.load %arg7[%c0_152, %c0_153, %c0_154, %c0_155] : memref<1x1x24x128xf32, #tpu.memory_space<vmem>>, vector<1x1x24x128xf32>
    %155 = vector.shape_cast %154 : vector<1x1x24x128xf32> to vector<24x128xf32>
    %156 = vector.shape_cast %153 : vector<24x128xf32> to vector<1x1x24x128xf32>
    tpu.vector_store %arg7[%c0_152, %c0_153, %c0_154, %c0_155], %156 {strides = array<i32>} : memref<1x1x24x128xf32, #tpu.memory_space<vmem>>, vector<1x1x24x128xf32>,
    return
  }
  func.func @transform_0(%arg0: i32, %arg1: i32) -> (i32, i32, i32, i32) {
    %c0_i32 = arith.constant 0 : i32
    %c0_i32_0 = arith.constant 0 : i32
    %c0_i32_1 = arith.constant 0 : i32
    return %arg0, %arg1, %c0_i32, %c0_i32_0 : i32, i32, i32, i32
  }
  func.func @transform_1(%arg0: i32, %arg1: i32) -> (i32, i32) {
    %c0_i32 = arith.constant 0 : i32
    %c0_i32_0 = arith.constant 0 : i32
    %c0_i32_1 = arith.constant 0 : i32
    return %c0_i32, %c0_i32_0 : i32, i32
  }
  func.func @transform_2(%arg0: i32, %arg1: i32) -> (i32, i32) {
    %c0_i32 = arith.constant 0 : i32
    %c0_i32_0 = arith.constant 0 : i32
    %c0_i32_1 = arith.constant 0 : i32
    return %c0_i32, %c0_i32_0 : i32, i32
  }
  func.func @transform_3(%arg0: i32, %arg1: i32) -> (i32, i32, i32, i32) {
    %c0_i32 = arith.constant 0 : i32
    %c0_i32_0 = arith.constant 0 : i32
    %c0_i32_1 = arith.constant 0 : i32
    %c0_i32_2 = arith.constant 0 : i32
    %c0_i32_3 = arith.constant 0 : i32
    return %c0_i32, %c0_i32_0, %c0_i32_1, %c0_i32_2 : i32, i32, i32, i32
  }
  func.func @transform_4(%arg0: i32, %arg1: i32) -> (i32, i32, i32) {
    %c0_i32 = arith.constant 0 : i32
    %c0_i32_0 = arith.constant 0 : i32
    %c0_i32_1 = arith.constant 0 : i32
    %c0_i32_2 = arith.constant 0 : i32
    return %c0_i32, %c0_i32_0, %c0_i32_1 : i32, i32, i32
  }
  func.func @transform_5(%arg0: i32, %arg1: i32) -> (i32, i32, i32, i32) {
    %c0_i32 = arith.constant 0 : i32
    %c0_i32_0 = arith.constant 0 : i32
    %c0_i32_1 = arith.constant 0 : i32
    return %arg0, %arg1, %c0_i32, %c0_i32_0 : i32, i32, i32, i32
  }
}

</mosaic_0001>

<llo_original>
// kernel: postnet_forward.1
$region0: #{postnet_forward.1}
  #allocation0 [shape = 'u32[]', space=smem, size = 0x4, offset = 0x4, fixed_abs, tag = 'smem constant byte address 0x4 - core index']
  #allocation1 [shape = 'u32[144,128]{1,0:T(1,128)}', space=vmem, size = 0x12000, scoped, tag = 'internal scratch']
  #allocation2 [shape = 'f32[56,128]{1,0:T(8,128)}', space=vmem, size = 0x7000, scoped, tag = 'scratch operand']
  #allocation3 [shape = 'f32[56,128]{1,0:T(8,128)}', space=vmem, size = 0x7000, scoped, tag = 'scratch operand']
  %s0 = inlined_call_operand.vmem [shape: f32[2,1,56,80], index: 0, kind: input, shape index: {}]
  %s1 = inlined_call_operand.hbm [shape: f32[80,128], index: 1, kind: input, shape index: {}]
  %s2 = inlined_call_operand.hbm [shape: f32[1,128], index: 2, kind: input, shape index: {}]
  %s3 = inlined_call_operand.hbm [shape: f32[4,5,128,128], index: 3, kind: input, shape index: {}]
  %s4 = inlined_call_operand.hbm [shape: f32[4,1,128], index: 4, kind: input, shape index: {}]
  %s5 = inlined_call_operand.vmem [shape: f32[2,1,24,128], index: 5, kind: output, shape index: {}]
  %s6 = sld [smem:[#allocation0]]
  $region69: #{postnet_forward.1} parent=0
    _
  %s8 = ssub.s32 1, %s6
  %s9 = scalar_select 0, %s8, %s6
  $region1: #{postnet_forward.1} parent=0
    #allocation4 [shape = 'u8[40960]{0}', space=vmem, size = 0xa000, scoped, tag = 'input window, operand 1, single buffered']
    #allocation5 [shape = 's32[2]{0}', space=sflag, size = 0x8, scoped, tag = 'scoped memory for postnet_forward.1']
    #allocation6 [shape = 'u8[512]{0}', space=vmem, size = 0x400, scoped, tag = 'input window, operand 2, single buffered']
    #allocation7 [shape = 's32[1]{0}', space=sflag, size = 0x4, scoped, tag = 'scoped memory for postnet_forward.1']
    #allocation8 [shape = 'u8[1310720]{0}', space=vmem, size = 0x140000, scoped, tag = 'input window, operand 3, single buffered']
    #allocation9 [shape = 'u8[2048]{0}', space=vmem, size = 0x800, scoped, tag = 'input window, operand 4, single buffered']
    #allocation10 [shape = 's32[1]{0}', space=sflag, size = 0x4, scoped, tag = 'scoped memory for postnet_forward.1']
    %10 = vsyncpa [#allocation5], 0
    %11 = vsyncpa [#allocation7], 0
    %12 = vsyncpa [#allocation10], 0
    loop: start=0, step=1, limit=4
    $region2: #{postnet_forward.1} parent=1 // loop_pre_header
      _
    $region3: #{postnet_forward.1} parent=1 // loop_header
      %s14 = sphi 0, %s18
      %p15 = scmp.ge.s32.totalorder %s14, 4
      %s21 = sphi 0, %s33
      %s22 = sphi 0, %s29
      %s23 = sphi 0, %s21
      %s24 = sphi 0, %s22
      %s25 = sphi 0, %s23
      %s26 = sphi 0, %s24
      %s38 = sphi 0, %s40
      %s41 = sphi 0, %s38
      %s42 = sphi 0, %s41
      %s58 = sphi 0, %s42
      %s62 = sphi 0, %s62
      %s64 = sphi 0, %s62
      %s65 = sphi 0, %s64
      %s79 = sphi 0, %s65
      %s83 = sphi 0, %s83
      %s85 = sphi 0, %s83
      %s86 = sphi 0, %s85
      %s100 = sphi 0, %s86
      %s104 = sphi 0, %s104
      %s106 = sphi 0, %s104
      %s107 = sphi 0, %s106
      %s121 = sphi 0, %s107
      %s125 = sphi 0, %s125
      %s127 = sphi 0, %s125
      %s128 = sphi 0, %s127
      %s142 = sphi 0, %s128
      %s150 = sphi 0, %s152
      %s153 = sphi 0, %s150
      %s154 = sphi 0, %s153
      %s170 = sphi 0, %s154
    $region4: #{postnet_forward.1} parent=1 // loop_header_branch
      %17 = sbr.rel (%p15) target = $region8
    $region5: #{postnet_forward.1} parent=1 // loop_body
      %s19 = ssub.s32 %s14, 1
      %s20 = ssub.s32 %s14, 2
      %s27 = sadd.s32 1, %s22
      %p28 = scmp.ge.s32.totalorder %s27, 1
      %s29 = scalar_select %p28, 0, %s27
      %s30 = sadd.s32 1, %s21
      %s31 = scalar_select %p28, %s30, %s21
      %p32 = scmp.ge.s32.totalorder %s31, 2
      %s33 = scalar_select %p32, 0, %s31
      %s34 = ssub.s32 %s21, %s33
      %s35 = ssub.s32 %s22, %s29
      %s36 = sor.u32 %s34, %s35
      %p37 = scmp.eq.s32.totalorder %s36, 0
      %s39 = sadd.s32 %s38, 1
      %s40 = scalar_select %p37, %s38, %s39
      %p43 = pneg %p37
      %p44 = scmp.eq.s32.totalorder %s14, 1
      %p45 = por %p43, %p44
      %p46 = scmp.ne.s32.totalorder %s38, %s41
      %p47 = scmp.eq.s32.totalorder %s14, 0
      %p48 = por %p46, %p47
      %p49 = scmp.ne.s32.totalorder %s38, %s41
      %p50 = scmp.eq.s32.totalorder %s19, 1
      %p51 = por %p49, %p50
      %p52 = scmp.ne.s32.totalorder %s41, %s42
      %p53 = scmp.eq.s32.totalorder %s19, 0
      %p54 = por %p52, %p53
      %p55 = scmp.ne.s32.totalorder %s41, %s42
      %p56 = scmp.eq.s32.totalorder %s20, 1
      %p57 = por %p55, %p56
      %p59 = scmp.ne.s32.totalorder %s42, %s58
      %p60 = scmp.eq.s32.totalorder %s20, 0
      %p61 = por %p59, %p60
      %s63 = sadd.s32 %s62, 1
      %p66 = scmp.eq.s32.totalorder %s14, 1
      %p67 = scmp.ne.s32.totalorder %s62, %s64
      %p68 = scmp.eq.s32.totalorder %s14, 0
      %p69 = por %p67, %p68
      %p70 = scmp.ne.s32.totalorder %s62, %s64
      %p71 = scmp.eq.s32.totalorder %s19, 1
      %p72 = por %p70, %p71
      %p73 = scmp.ne.s32.totalorder %s64, %s65
      %p74 = scmp.eq.s32.totalorder %s19, 0
      %p75 = por %p73, %p74
      %p76 = scmp.ne.s32.totalorder %s64, %s65
      %p77 = scmp.eq.s32.totalorder %s20, 1
      %p78 = por %p76, %p77
      %p80 = scmp.ne.s32.totalorder %s65, %s79
      %p81 = scmp.eq.s32.totalorder %s20, 0
      %p82 = por %p80, %p81
      %s84 = sadd.s32 %s83, 1
      %p87 = scmp.eq.s32.totalorder %s14, 1
      %p88 = scmp.ne.s32.totalorder %s83, %s85
      %p89 = scmp.eq.s32.totalorder %s14, 0
      %p90 = por %p88, %p89
      %p91 = scmp.ne.s32.totalorder %s83, %s85
      %p92 = scmp.eq.s32.totalorder %s19, 1
      %p93 = por %p91, %p92
      %p94 = scmp.ne.s32.totalorder %s85, %s86
      %p95 = scmp.eq.s32.totalorder %s19, 0
      %p96 = por %p94, %p95
      %p97 = scmp.ne.s32.totalorder %s85, %s86
      %p98 = scmp.eq.s32.totalorder %s20, 1
      %p99 = por %p97, %p98
      %p101 = scmp.ne.s32.totalorder %s86, %s100
      %p102 = scmp.eq.s32.totalorder %s20, 0
      %p103 = por %p101, %p102
      %s105 = sadd.s32 %s104, 1
      %p108 = scmp.eq.s32.totalorder %s14, 1
      %p109 = scmp.ne.s32.totalorder %s104, %s106
      %p110 = scmp.eq.s32.totalorder %s14, 0
      %p111 = por %p109, %p110
      %p112 = scmp.ne.s32.totalorder %s104, %s106
      %p113 = scmp.eq.s32.totalorder %s19, 1
      %p114 = por %p112, %p113
      %p115 = scmp.ne.s32.totalorder %s106, %s107
      %p116 = scmp.eq.s32.totalorder %s19, 0
      %p117 = por %p115, %p116
      %p118 = scmp.ne.s32.totalorder %s106, %s107
      %p119 = scmp.eq.s32.totalorder %s20, 1
      %p120 = por %p118, %p119
      %p122 = scmp.ne.s32.totalorder %s107, %s121
      %p123 = scmp.eq.s32.totalorder %s20, 0
      %p124 = por %p122, %p123
      %s126 = sadd.s32 %s125, 1
      %p129 = scmp.eq.s32.totalorder %s14, 1
      %p130 = scmp.ne.s32.totalorder %s125, %s127
      %p131 = scmp.eq.s32.totalorder %s14, 0
      %p132 = por %p130, %p131
      %p133 = scmp.ne.s32.totalorder %s125, %s127
      %p134 = scmp.eq.s32.totalorder %s19, 1
      %p135 = por %p133, %p134
      %p136 = scmp.ne.s32.totalorder %s127, %s128
      %p137 = scmp.eq.s32.totalorder %s19, 0
      %p138 = por %p136, %p137
      %p139 = scmp.ne.s32.totalorder %s127, %s128
      %p140 = scmp.eq.s32.totalorder %s20, 1
      %p141 = por %p139, %p140
      %p143 = scmp.ne.s32.totalorder %s128, %s142
      %p144 = scmp.eq.s32.totalorder %s20, 0
      %p145 = por %p143, %p144
      %s146 = ssub.s32 %s21, %s33
      %s147 = ssub.s32 %s22, %s29
      %s148 = sor.u32 %s146, %s147
      %p149 = scmp.eq.s32.totalorder %s148, 0
      %s151 = sadd.s32 %s150, 1
      %s152 = scalar_select %p149, %s150, %s151
      %p155 = pneg %p149
      %p156 = scmp.eq.s32.totalorder %s14, 1
      %p157 = por %p155, %p156
      %p158 = scmp.ne.s32.totalorder %s150, %s153
      %p159 = scmp.eq.s32.totalorder %s14, 0
      %p160 = por %p158, %p159
      %p161 = scmp.ne.s32.totalorder %s150, %s153
      %p162 = scmp.eq.s32.totalorder %s19, 1
      %p163 = por %p161, %p162
      %p164 = scmp.ne.s32.totalorder %s153, %s154
      %p165 = scmp.eq.s32.totalorder %s19, 0
      %p166 = por %p164, %p165
      %p167 = scmp.ne.s32.totalorder %s153, %s154
      %p168 = scmp.eq.s32.totalorder %s20, 1
      %p169 = por %p167, %p168
      %p171 = scmp.ne.s32.totalorder %s154, %s170
      %p172 = scmp.eq.s32.totalorder %s20, 0
      %p173 = por %p171, %p172
      %p174 = scmp.le.s32.totalorder 1, %s14
      %p175 = scmp.lt.s32.totalorder %s14, 3
      %p176 = pnand %p174, %p175
      %p177 = pneg %p176
      // Predicated region
      $region9: #{postnet_forward.1} parent=5 // pred_check
        _
      $region10: #{postnet_forward.1} parent=5 // pred_check_branch
        %179 = sbr.rel (%p176) target = $region12
      $region11: #{postnet_forward.1} parent=5 // pred_region
        %s180 = ssub.s32 %s14, 1
        // Predicated region
        $region13: #{postnet_forward.1} parent=11 // pred_check
          %p181 = pneg %p75
        $region14: #{postnet_forward.1} parent=11 // pred_check_branch
          %183 = sbr.rel (%p181) target = $region16
        $region15: #{postnet_forward.1} parent=11 // pred_region
          %s185 = ssub.s32 1280, 1280
          %186 = vsyncadd [#allocation5], %s185
          %s187 = sshll.u32 [#allocation4], 4
          %s188 = int_to_ptr.vmem [resolvable:$true] %s187
          %193 = dma.hbm_to_vmem [thread:$0]  %s1, 1280, %s188, [#allocation5], 128, 128, 8
        $region16: #{postnet_forward.1} parent=11 // pred_fallthru
          _
        // Predicated region
        $region17: #{postnet_forward.1} parent=11 // pred_check
          %p194 = pneg %p96
        $region18: #{postnet_forward.1} parent=11 // pred_check_branch
          %196 = sbr.rel (%p194) target = $region20
        $region19: #{postnet_forward.1} parent=11 // pred_region
          %s198 = ssub.s32 16, 16
          %199 = vsyncadd [#allocation7], %s198
          %s201 = sshll.u32 [#allocation6], 4
          %s202 = int_to_ptr.vmem [resolvable:$true] %s201
          %204 = dma.hbm_to_vmem [thread:$0]  %s2, 16, %s202, [#allocation7]
        $region20: #{postnet_forward.1} parent=11 // pred_fallthru
          _
        // Predicated region
        $region21: #{postnet_forward.1} parent=11 // pred_check
          %p205 = pneg %p117
        $region22: #{postnet_forward.1} parent=11 // pred_check_branch
          %207 = sbr.rel (%p205) target = $region24
        $region23: #{postnet_forward.1} parent=11 // pred_region
          %s209 = ssub.s32 40960, 40960
          %210 = vsyncadd [#allocation7], %s209
          %s211 = sshll.u32 [#allocation8], 4
          %s212 = int_to_ptr.vmem [resolvable:$true] %s211
          %217 = dma.hbm_to_vmem [thread:$0]  %s3, 40960, %s212, [#allocation7], 128, 128, 8
        $region24: #{postnet_forward.1} parent=11 // pred_fallthru
          _
        // Predicated region
        $region25: #{postnet_forward.1} parent=11 // pred_check
          %p218 = pneg %p138
        $region26: #{postnet_forward.1} parent=11 // pred_check_branch
          %220 = sbr.rel (%p218) target = $region28
        $region27: #{postnet_forward.1} parent=11 // pred_region
          %s222 = ssub.s32 64, 64
          %223 = vsyncadd [#allocation10], %s222
          %s224 = sshll.u32 [#allocation9], 4
          %s225 = int_to_ptr.vmem [resolvable:$true] %s224
          %230 = dma.hbm_to_vmem [thread:$0]  %s4, 64, %s225, [#allocation10], 16, 16, 1
        $region28: #{postnet_forward.1} parent=11 // pred_fallthru
          _
      $region12: #{postnet_forward.1} parent=5 // pred_fallthru
        _
      %p231 = scmp.lt.s32.totalorder %s14, 2
      // Predicated region
      $region29: #{postnet_forward.1} parent=5 // pred_check
        %p232 = pneg %p231
      $region30: #{postnet_forward.1} parent=5 // pred_check_branch
        %234 = sbr.rel (%p232) target = $region32
      $region31: #{postnet_forward.1} parent=5 // pred_region
        // Predicated region
        $region33: #{postnet_forward.1} parent=31 // pred_check
          %p235 = pneg %p48
        $region34: #{postnet_forward.1} parent=31 // pred_check_branch
          %237 = sbr.rel (%p235) target = $region36
        $region35: #{postnet_forward.1} parent=31 // pred_region
          %p238 = scmp.lt.s32.totalorder %s21, 1
          %s239 = scalar_select %p238, %s21, 1
          %p240 = scmp.lt.s32.totalorder %s22, 0
          %s241 = scalar_select %p240, %s22, 0
          %s242 = smul.addr %s241, 7
          %s243 = smul.addr %s239, 7
          %s244 = sadd.s32 %s242, %s243
          %s245 = smul.addr %s244, 8
          %s246 = scalar_lea.vmem %s0, %s245
        $region36: #{postnet_forward.1} parent=31 // pred_fallthru
          _
      $region32: #{postnet_forward.1} parent=5 // pred_fallthru
        _
      %p247 = scmp.le.s32.totalorder 1, %s14
      %p248 = scmp.lt.s32.totalorder %s14, 3
      %p249 = pnand %p247, %p248
      %p250 = pneg %p249
      // Predicated region
      $region37: #{postnet_forward.1} parent=5 // pred_check
        _
      $region38: #{postnet_forward.1} parent=5 // pred_check_branch
        %252 = sbr.rel (%p249) target = $region40
      $region39: #{postnet_forward.1} parent=5 // pred_region
        %s253 = ssub.s32 %s14, 1
        // Predicated region
        $region41: #{postnet_forward.1} parent=39 // pred_check
          %p254 = pneg %p75
        $region42: #{postnet_forward.1} parent=39 // pred_check_branch
          %256 = sbr.rel (%p254) target = $region44
        $region43: #{postnet_forward.1} parent=39 // pred_region
          %257 = dma.done [#allocation5], 1280
        $region44: #{postnet_forward.1} parent=39 // pred_fallthru
          _
        // Predicated region
        $region45: #{postnet_forward.1} parent=39 // pred_check
          %p258 = pneg %p96
        $region46: #{postnet_forward.1} parent=39 // pred_check_branch
          %260 = sbr.rel (%p258) target = $region48
        $region47: #{postnet_forward.1} parent=39 // pred_region
          %261 = dma.done [#allocation7], 16
        $region48: #{postnet_forward.1} parent=39 // pred_fallthru
          _
        // Predicated region
        $region49: #{postnet_forward.1} parent=39 // pred_check
          %p262 = pneg %p117
        $region50: #{postnet_forward.1} parent=39 // pred_check_branch
          %264 = sbr.rel (%p262) target = $region52
        $region51: #{postnet_forward.1} parent=39 // pred_region
          %265 = dma.done [#allocation7], 40960
        $region52: #{postnet_forward.1} parent=39 // pred_fallthru
          _
        // Predicated region
        $region53: #{postnet_forward.1} parent=39 // pred_check
          %p266 = pneg %p138
        $region54: #{postnet_forward.1} parent=39 // pred_check_branch
          %268 = sbr.rel (%p266) target = $region56
        $region55: #{postnet_forward.1} parent=39 // pred_region
          %269 = dma.done [#allocation10], 64
        $region56: #{postnet_forward.1} parent=39 // pred_fallthru
          _
        %p270 = scmp.lt.s32.totalorder %s23, 1
        %s271 = scalar_select %p270, %s23, 1
        %p272 = scmp.lt.s32.totalorder %s24, 0
        %s273 = scalar_select %p272, %s24, 0
        %s274 = smul.addr %s273, 7
        %s275 = smul.addr %s271, 7
        %s276 = sadd.s32 %s274, %s275
        %s277 = smul.addr %s276, 8
        %s278 = scalar_lea.vmem %s0, %s277
        %p279 = pneg %p54
        %p280 = pneg %p51
        %p281 = pneg %p75
        %p282 = pneg %p72
        %p283 = pneg %p96
        %p284 = pneg %p93
        %p285 = pneg %p117
        %p286 = pneg %p114
        %p287 = pneg %p138
        %p288 = pneg %p135
        %p289 = pneg %p166
        %p290 = pneg %p163
        %p291 = scmp.lt.s32.totalorder %s23, 1
        %s292 = scalar_select %p291, %s23, 1
        %p293 = scmp.lt.s32.totalorder %s24, 0
        %s294 = scalar_select %p293, %s24, 0
        %s295 = smul.addr %s294, 3
        %s296 = smul.addr %s292, 3
        %s297 = sadd.s32 %s295, %s296
        %s298 = smul.addr %s297, 8
        %s299 = scalar_lea.vmem %s5, %s298
        %p300 = scmp.lt.s32.totalorder %s23, 1
        %s301 = scalar_select %p300, %s23, 1
        %p302 = scmp.lt.s32.totalorder %s24, 0
        %s303 = scalar_select %p302, %s24, 0
        %s304 = smul.addr %s303, 7
        %s305 = smul.addr %s301, 7
        %s306 = sadd.s32 %s304, %s305
        %s307 = smul.addr %s306, 8
        %s308 = scalar_lea.vmem %s0, %s307
        %p309 = scmp.lt.s32.totalorder %s23, 1
        %s310 = scalar_select %p309, %s23, 1
        %p311 = scmp.lt.s32.totalorder %s24, 0
        %s312 = scalar_select %p311, %s24, 0
        %s313 = smul.addr %s312, 3
        %s314 = smul.addr %s310, 3
        %s315 = sadd.s32 %s313, %s314
        %s316 = smul.addr %s315, 8
        %s317 = scalar_lea.vmem %s5, %s316
        %s318 = smul.u32 %s24, 24
        %s319 = ssub.s32 %s318, 16
        %v320 = vlaneseq
        %v321 = vshrl.u32 %v320, 7
        %v322 = vadd.s32 %v321, 8
        %v323 = vadd.s32 %v321, 16
        %v324 = vadd.s32 %v321, 24
        %v325 = vadd.s32 %v321, 32
        %v326 = vadd.s32 %v321, 40
        %v327 = vadd.s32 %v321, 48
        %v328 = vstv %s319
        %v329 = vadd.s32 %v321, %v328
        %v330 = vadd.s32 %v322, %v328
        %v331 = vadd.s32 %v323, %v328
        %v332 = vadd.s32 %v324, %v328
        %v333 = vadd.s32 %v325, %v328
        %v334 = vadd.s32 %v326, %v328
        %v335 = vadd.s32 %v327, %v328
        %vm336 = vcmp.ge.s32.totalorder %v329, 0
        %vm337 = vcmp.ge.s32.totalorder %v330, 0
        %vm338 = vcmp.ge.s32.totalorder %v331, 0
        %vm339 = vcmp.ge.s32.totalorder %v332, 0
        %vm340 = vcmp.ge.s32.totalorder %v333, 0
        %vm341 = vcmp.ge.s32.totalorder %v334, 0
        %vm342 = vcmp.ge.s32.totalorder %v335, 0
        %vm343 = vcmp.lt.s32.totalorder %v329, 24
        %vm344 = vcmp.lt.s32.totalorder %v330, 24
        %vm345 = vcmp.lt.s32.totalorder %v331, 24
        %vm346 = vcmp.lt.s32.totalorder %v332, 24
        %vm347 = vcmp.lt.s32.totalorder %v333, 24
        %vm348 = vcmp.lt.s32.totalorder %v334, 24
        %vm349 = vcmp.lt.s32.totalorder %v335, 24
        %vm350 = vmand %vm336, %vm343
        %vm351 = vmand %vm337, %vm344
        %vm352 = vmand %vm338, %vm345
        %vm353 = vmand %vm339, %vm346
        %vm354 = vmand %vm340, %vm347
        %vm355 = vmand %vm341, %vm348
        %vm356 = vmand %vm342, %vm349
        %v357 = vld [vmem:[%s308] sm:$0xff]
        %v358 = vld [vmem:[%s308 + $0x8] sm:$0xff]
        %v359 = vld [vmem:[%s308 + $0x10] sm:$0xff]
        %v360 = vld [vmem:[%s308 + $0x18] sm:$0xff]
        %v361 = vld [vmem:[%s308 + $0x20] sm:$0xff]
        %v362 = vld [vmem:[%s308 + $0x28] sm:$0xff]
        %v363 = vld [vmem:[%s308 + $0x30] sm:$0xff]
        %v364 = vld [vmem:[#allocation4] sm:$0xff]
        %v365 = vld [vmem:[#allocation4 + $0x8] sm:$0xff]
        %v366 = vld [vmem:[#allocation4 + $0x10] sm:$0xff]
        %v367 = vld [vmem:[#allocation4 + $0x18] sm:$0xff]
        %v368 = vld [vmem:[#allocation4 + $0x20] sm:$0xff]
        %v369 = vld [vmem:[#allocation4 + $0x28] sm:$0xff]
        %v370 = vld [vmem:[#allocation4 + $0x30] sm:$0xff]
        %v371 = vld [vmem:[#allocation4 + $0x38] sm:$0xff]
        %v372 = vld [vmem:[#allocation4 + $0x40] sm:$0xff]
        %v373 = vld [vmem:[#allocation4 + $0x48] sm:$0xff]
        %v374 = vld [vmem:[#allocation6] sm:$0x1]
        %v376 = vlaneseq
        %v377 = vshrl.u32 %v376, 7
        %v378 = vsub.s32 0, %v377
        %v379 = vrot.slane %v374, %v378
        %vm381 = vcmask 654336
        %v383 = vsel %vm381, %v357, 0
        %v386 = vsel %vm381, %v358, 0
        %v389 = vsel %vm381, %v359, 0
        %v392 = vsel %vm381, %v360, 0
        %v395 = vsel %vm381, %v361, 0
        %v398 = vsel %vm381, %v362, 0
        %v401 = vsel %vm381, %v363, 0
        %403 = vmatprep.subr.mxu0 0.0
        %404 = vmatpush1.msra.mxu0 %v364
        %405 = vmatprep.subr.mxu0 0.0
        %406 = vmatpush1.msra.mxu0 %v365
        %407 = vmatprep.subr.mxu0 0.0
        %408 = vmatpush1.msra.mxu0 %v366
        %409 = vmatprep.subr.mxu0 0.0
        %410 = vmatpush1.msra.mxu0 %v367
        %411 = vmatprep.subr.mxu0 0.0
        %412 = vmatpush1.msra.mxu0 %v368
        %413 = vmatprep.subr.mxu0 0.0
        %414 = vmatpush1.msra.mxu0 %v369
        %415 = vmatprep.subr.mxu0 0.0
        %416 = vmatpush1.msra.mxu0 %v370
        %417 = vmatprep.subr.mxu0 0.0
        %418 = vmatpush1.msra.mxu0 %v371
        %419 = vmatprep.subr.mxu0 0.0
        %420 = vmatpush1.msra.mxu0 %v372
        %421 = vmatprep.subr.mxu0 0.0
        %422 = vmatpush1.msra.mxu0 %v373
        %423 = vmatprep.subr.mxu0 0.0
        %424 = vmatpush1.msra.mxu0 0.0
        %425 = vmatprep.subr.mxu0 0.0
        %426 = vmatpush1.msra.mxu0 0.0
        %427 = vmatprep.subr.mxu0 0.0
        %428 = vmatpush1.msra.mxu0 0.0
        %429 = vmatprep.subr.mxu0 0.0
        %430 = vmatpush1.msra.mxu0 0.0
        %431 = vmatprep.subr.mxu0 0.0
        %432 = vmatpush1.msra.mxu0 0.0
        %433 = vmatprep.subr.mxu0 0.0
        %434 = vmatpush1.msra.mxu0 0.0
        %435 = vmatprep.subr.mxu0 0.0
        %436 = vmatpush1.msra.mxu0 0.0
        %437 = vmatprep.subr.mxu0 0.0
        %438 = vmatpush1.msra.mxu0 0.0
        %439 = vmatprep.subr.mxu0 0.0
        %440 = vmatpush1.msra.mxu0 0.0
        %441 = vmatprep.subr.mxu0 0.0
        %442 = vmatpush1.msra.mxu0 0.0
        %443 = vmatprep.subr.mxu0 0.0
        %444 = vmatpush1.msra.mxu0 0.0
        %445 = vmatprep.subr.mxu0 0.0
        %446 = vmatpush1.msra.mxu0 0.0
        %447 = vmatprep.subr.mxu0 0.0
        %448 = vmatpush1.msra.mxu0 0.0
        %449 = vmatprep.subr.mxu0 0.0
        %450 = vmatpush1.msra.mxu0 0.0
        %451 = vmatprep.subr.mxu0 0.0
        %452 = vmatpush1.msra.mxu0 0.0
        %453 = vmatprep.subr.mxu0 0.0
        %454 = vmatpush1.msra.mxu0 0.0
        %455 = vmatprep.subr.mxu0 0.0
        %456 = vmatpush1.msra.mxu0 0.0
        %457 = vmatprep.subr.mxu0 0.0
        %458 = vmatpush1.msra.mxu0 0.0
        %459 = vmatprep.subr.mxu0 0.0
        %460 = vmatpush1.msra.mxu0 0.0
        %461 = vmatprep.subr.mxu0 0.0
        %462 = vmatpush1.msra.mxu0 0.0
        %463 = vmatprep.subr.mxu0 0.0
        %464 = vmatpush1.msra.mxu0 0.0
        %465 = vmatprep.subr.mxu0 0.0
        %466 = vmatpush1.msra.mxu0 0.0
        %467 = vmatprep.mubr.f32.mxu0 0.0
        %468 = vmatmul.mubr.f32.gmra.mrb[0].mxu0 %v383
        %v469 = vpop.f32.mrb[0].mxu0
        %v470 = vadd.f32 %v379, %v469
        %v471 = vpop.f32.mrb[0].mxu0
        %472 = vmatprep.mubr.f32.mxu0 0.0
        %473 = vmatmul.mubr.f32.gmra.mrb[0].mxu0 %v386
        %v474 = vpop.f32.mrb[0].mxu0
        %v475 = vadd.f32 %v379, %v474
        %v476 = vpop.f32.mrb[0].mxu0
        %477 = vmatprep.mubr.f32.mxu0 0.0
        %478 = vmatmul.mubr.f32.gmra.mrb[0].mxu0 %v389
        %v479 = vpop.f32.mrb[0].mxu0
        %v480 = vadd.f32 %v379, %v479
        %v481 = vpop.f32.mrb[0].mxu0
        %482 = vmatprep.mubr.f32.mxu0 0.0
        %483 = vmatmul.mubr.f32.gmra.mrb[0].mxu0 %v392
        %v484 = vpop.f32.mrb[0].mxu0
        %v485 = vadd.f32 %v379, %v484
        %v486 = vpop.f32.mrb[0].mxu0
        %487 = vmatprep.mubr.f32.mxu0 0.0
        %488 = vmatmul.mubr.f32.gmra.mrb[0].mxu0 %v395
        %v489 = vpop.f32.mrb[0].mxu0
        %v490 = vadd.f32 %v379, %v489
        %v491 = vpop.f32.mrb[0].mxu0
        %492 = vmatprep.mubr.f32.mxu0 0.0
        %493 = vmatmul.mubr.f32.gmra.mrb[0].mxu0 %v398
        %v494 = vpop.f32.mrb[0].mxu0
        %v495 = vadd.f32 %v379, %v494
        %v496 = vpop.f32.mrb[0].mxu0
        %497 = vmatprep.mubr.f32.mxu0 0.0
        %498 = vmatmul.mubr.f32.gmra.mrb[0].mxu0 %v401
        %v499 = vpop.f32.mrb[0].mxu0
        %v500 = vadd.f32 %v379, %v499
        %v501 = vpop.f32.mrb[0].mxu0
        %502 = vdwg.mxu0
        %v503 = vsel %vm350, %v470, 0.0
        %v504 = vsel %vm351, %v475, 0.0
        %v505 = vsel %vm352, %v480, 0.0
        %v506 = vsel %vm353, %v485, 0.0
        %v507 = vsel %vm354, %v490, 0.0
        %v508 = vsel %vm355, %v495, 0.0
        %v509 = vsel %vm356, %v500, 0.0
        %v510 = vtanh.pop %v503
        %v511 = vtanh.pop %v504
        %v512 = vtanh.pop %v505
        %v513 = vtanh.pop %v506
        %v514 = vtanh.pop %v507
        %v515 = vtanh.pop %v508
        %v516 = vtanh.pop %v509
        %517 = vst [vmem:[#allocation2] sm:$0xff] %v510
        %518 = vst [vmem:[#allocation2 + $0x8] sm:$0xff] %v511
        %519 = vst [vmem:[#allocation2 + $0x10] sm:$0xff] %v512
        %520 = vst [vmem:[#allocation2 + $0x18] sm:$0xff] %v513
        %521 = vst [vmem:[#allocation2 + $0x20] sm:$0xff] %v514
        %522 = vst [vmem:[#allocation2 + $0x28] sm:$0xff] %v515
        %523 = vst [vmem:[#allocation2 + $0x30] sm:$0xff] %v516
        %v524 = vld [vmem:[#allocation2] sm:$0xff]
        %v525 = vld [vmem:[#allocation2 + $0x8] sm:$0xff]
        %v526 = vld [vmem:[#allocation2 + $0x10] sm:$0xff]
        %v527 = vld [vmem:[#allocation2 + $0x18] sm:$0xff]
        %v528 = vld [vmem:[#allocation2 + $0x20] sm:$0xff]
        %v529 = vld [vmem:[#allocation2 + $0x28] sm:$0xff]
        %v530 = vld [vmem:[#allocation2 + $0x30] sm:$0xff]
        %v531 = vrot.slane %v524, 6
        %v532 = vrot.slane %v525, 6
        %v533 = vrot.slane %v526, 6
        %v534 = vrot.slane %v527, 6
        %v535 = vrot.slane %v528, 6
        %v536 = vrot.slane %v529, 6
        %v537 = vrot.slane %v530, 6
        %vm538 = vcmp.lt.s32.totalorder %v321, 2
        %v539 = vsel %vm538, %v536, %v537
        %v540 = vsel %vm538, %v535, %v536
        %v541 = vsel %vm538, %v534, %v535
        %v542 = vsel %vm538, %v533, %v534
        %v543 = vsel %vm538, %v532, %v533
        %v544 = vsel %vm538, %v531, %v532
        %v545 = vsel %vm538, %v537, %v531
        %v546 = vld [vmem:[#allocation8] sm:$0xff]
        %v547 = vld [vmem:[#allocation8 + $0x8] sm:$0xff]
        %v548 = vld [vmem:[#allocation8 + $0x10] sm:$0xff]
        %v549 = vld [vmem:[#allocation8 + $0x18] sm:$0xff]
        %v550 = vld [vmem:[#allocation8 + $0x20] sm:$0xff]
        %v551 = vld [vmem:[#allocation8 + $0x28] sm:$0xff]
        %v552 = vld [vmem:[#allocation8 + $0x30] sm:$0xff]
        %v553 = vld [vmem:[#allocation8 + $0x38] sm:$0xff]
        %v554 = vld [vmem:[#allocation8 + $0x40] sm:$0xff]
        %v555 = vld [vmem:[#allocation8 + $0x48] sm:$0xff]
        %v556 = vld [vmem:[#allocation8 + $0x50] sm:$0xff]
        %v557 = vld [vmem:[#allocation8 + $0x58] sm:$0xff]
        %v558 = vld [vmem:[#allocation8 + $0x60] sm:$0xff]
        %v559 = vld [vmem:[#allocation8 + $0x68] sm:$0xff]
        %v560 = vld [vmem:[#allocation8 + $0x70] sm:$0xff]
        %v561 = vld [vmem:[#allocation8 + $0x78] sm:$0xff]
        %v562 = vrot.slane %v524, 7
        %v563 = vrot.slane %v525, 7
        %v564 = vrot.slane %v526, 7
        %v565 = vrot.slane %v527, 7
        %v566 = vrot.slane %v528, 7
        %v567 = vrot.slane %v529, 7
        %v568 = vrot.slane %v530, 7
        %vm569 = vcmp.lt.s32.totalorder %v321, 1
        %v570 = vsel %vm569, %v567, %v568
        %v571 = vsel %vm569, %v566, %v567
        %v572 = vsel %vm569, %v565, %v566
        %v573 = vsel %vm569, %v564, %v565
        %v574 = vsel %vm569, %v563, %v564
        %v575 = vsel %vm569, %v562, %v563
        %v576 = vsel %vm569, %v568, %v562
        %s577 = scalar_lea.vmem [#allocation8], 128
        %v578 = vld [vmem:[%s577] sm:$0xff]
        %v579 = vld [vmem:[%s577 + $0x8] sm:$0xff]
        %v580 = vld [vmem:[%s577 + $0x10] sm:$0xff]
        %v581 = vld [vmem:[%s577 + $0x18] sm:$0xff]
        %v582 = vld [vmem:[%s577 + $0x20] sm:$0xff]
        %v583 = vld [vmem:[%s577 + $0x28] sm:$0xff]
        %v584 = vld [vmem:[%s577 + $0x30] sm:$0xff]
        %v585 = vld [vmem:[%s577 + $0x38] sm:$0xff]
        %v586 = vld [vmem:[%s577 + $0x40] sm:$0xff]
        %v587 = vld [vmem:[%s577 + $0x48] sm:$0xff]
        %v588 = vld [vmem:[%s577 + $0x50] sm:$0xff]
        %v589 = vld [vmem:[%s577 + $0x58] sm:$0xff]
        %v590 = vld [vmem:[%s577 + $0x60] sm:$0xff]
        %v591 = vld [vmem:[%s577 + $0x68] sm:$0xff]
        %v592 = vld [vmem:[%s577 + $0x70] sm:$0xff]
        %v593 = vld [vmem:[%s577 + $0x78] sm:$0xff]
        %594 = vmatprep.subr.mxu0 0.0
        %595 = vmatpush1.msra.mxu0 %v578
        %596 = vmatprep.subr.mxu0 0.0
        %597 = vmatpush1.msra.mxu0 %v579
        %598 = vmatprep.subr.mxu0 0.0
        %599 = vmatpush1.msra.mxu0 %v580
        %600 = vmatprep.subr.mxu0 0.0
        %601 = vmatpush1.msra.mxu0 %v581
        %602 = vmatprep.subr.mxu0 0.0
        %603 = vmatpush1.msra.mxu0 %v582
        %604 = vmatprep.subr.mxu0 0.0
        %605 = vmatpush1.msra.mxu0 %v583
        %606 = vmatprep.subr.mxu0 0.0
        %607 = vmatpush1.msra.mxu0 %v584
        %608 = vmatprep.subr.mxu0 0.0
        %609 = vmatpush1.msra.mxu0 %v585
        %610 = vmatprep.subr.mxu0 0.0
        %611 = vmatpush1.msra.mxu0 %v586
        %612 = vmatprep.subr.mxu0 0.0
        %613 = vmatpush1.msra.mxu0 %v587
        %614 = vmatprep.subr.mxu0 0.0
        %615 = vmatpush1.msra.mxu0 %v588
        %616 = vmatprep.subr.mxu0 0.0
        %617 = vmatpush1.msra.mxu0 %v589
        %618 = vmatprep.subr.mxu0 0.0
        %619 = vmatpush1.msra.mxu0 %v590
        %620 = vmatprep.subr.mxu0 0.0
        %621 = vmatpush1.msra.mxu0 %v591
        %622 = vmatprep.subr.mxu0 0.0
        %623 = vmatpush1.msra.mxu0 %v592
        %624 = vmatprep.subr.mxu0 0.0
        %625 = vmatpush1.msra.mxu0 %v593
        %626 = vmatprep.subr.mxu0 0.0
        %627 = vmatpush1.msra.mxu0 0.0
        %628 = vmatprep.subr.mxu0 0.0
        %629 = vmatpush1.msra.mxu0 0.0
        %630 = vmatprep.subr.mxu0 0.0
        %631 = vmatpush1.msra.mxu0 0.0
        %632 = vmatprep.subr.mxu0 0.0
        %633 = vmatpush1.msra.mxu0 0.0
        %634 = vmatprep.subr.mxu0 0.0
        %635 = vmatpush1.msra.mxu0 0.0
        %636 = vmatprep.subr.mxu0 0.0
        %637 = vmatpush1.msra.mxu0 0.0
        %638 = vmatprep.subr.mxu0 0.0
        %639 = vmatpush1.msra.mxu0 0.0
        %640 = vmatprep.subr.mxu0 0.0
        %641 = vmatpush1.msra.mxu0 0.0
        %642 = vmatprep.subr.mxu0 0.0
        %643 = vmatpush1.msra.mxu0 0.0
        %644 = vmatprep.subr.mxu0 0.0
        %645 = vmatpush1.msra.mxu0 0.0
        %646 = vmatprep.subr.mxu0 0.0
        %647 = vmatpush1.msra.mxu0 0.0
        %648 = vmatprep.subr.mxu0 0.0
        %649 = vmatpush1.msra.mxu0 0.0
        %650 = vmatprep.subr.mxu0 0.0
        %651 = vmatpush1.msra.mxu0 0.0
        %652 = vmatprep.subr.mxu0 0.0
        %653 = vmatpush1.msra.mxu0 0.0
        %654 = vmatprep.subr.mxu0 0.0
        %655 = vmatpush1.msra.mxu0 0.0
        %656 = vmatprep.subr.mxu0 0.0
        %657 = vmatpush1.msra.mxu0 0.0
        %658 = vmatprep.mubr.f32.mxu0 0.0
        %659 = vmatmul.mubr.f32.gmra.mrb[0].mxu0 %v576
        %v660 = vpop.f32.mrb[0].mxu0
        %v661 = vadd.f32 0.0, %v660
        %v662 = vpop.f32.mrb[0].mxu0
        %663 = vmatprep.mubr.f32.mxu0 0.0
        %664 = vmatmul.mubr.f32.gmra.mrb[0].mxu0 %v575
        %v665 = vpop.f32.mrb[0].mxu0
        %v666 = vadd.f32 0.0, %v665
        %v667 = vpop.f32.mrb[0].mxu0
        %668 = vmatprep.mubr.f32.mxu0 0.0
        %669 = vmatmul.mubr.f32.gmra.mrb[0].mxu0 %v574
        %v670 = vpop.f32.mrb[0].mxu0
        %v671 = vadd.f32 0.0, %v670
        %v672 = vpop.f32.mrb[0].mxu0
        %673 = vmatprep.mubr.f32.mxu0 0.0
        %674 = vmatmul.mubr.f32.gmra.mrb[0].mxu0 %v573
        %v675 = vpop.f32.mrb[0].mxu0
        %v676 = vadd.f32 0.0, %v675
        %v677 = vpop.f32.mrb[0].mxu0
        %678 = vmatprep.mubr.f32.mxu0 0.0
        %679 = vmatmul.mubr.f32.gmra.mrb[0].mxu0 %v572
        %v680 = vpop.f32.mrb[0].mxu0
        %v681 = vadd.f32 0.0, %v680
        %v682 = vpop.f32.mrb[0].mxu0
        %683 = vmatprep.mubr.f32.mxu0 0.0
        %684 = vmatmul.mubr.f32.gmra.mrb[0].mxu0 %v571
        %v685 = vpop.f32.mrb[0].mxu0
        %v686 = vadd.f32 0.0, %v685
        %v687 = vpop.f32.mrb[0].mxu0
        %688 = vmatprep.mubr.f32.mxu0 0.0
        %689 = vmatmul.mubr.f32.gmra.mrb[0].mxu0 %v570
        %v690 = vpop.f32.mrb[0].mxu0
        %v691 = vadd.f32 0.0, %v690
        %v692 = vpop.f32.mrb[0].mxu0
        %693 = vdwg.mxu0
        %694 = vmatprep.subr.mxu0 0.0
        %695 = vmatpush1.msra.mxu0 %v546
        %696 = vmatprep.subr.mxu0 0.0
        %697 = vmatpush1.msra.mxu0 %v547
        %698 = vmatprep.subr.mxu0 0.0
        %699 = vmatpush1.msra.mxu0 %v548
        %700 = vmatprep.subr.mxu0 0.0
        %701 = vmatpush1.msra.mxu0 %v549
        %702 = vmatprep.subr.mxu0 0.0
        %703 = vmatpush1.msra.mxu0 %v550
        %704 = vmatprep.subr.mxu0 0.0
        %705 = vmatpush1.msra.mxu0 %v551
        %706 = vmatprep.subr.mxu0 0.0
        %707 = vmatpush1.msra.mxu0 %v552
        %708 = vmatprep.subr.mxu0 0.0
        %709 = vmatpush1.msra.mxu0 %v553
        %710 = vmatprep.subr.mxu0 0.0
        %711 = vmatpush1.msra.mxu0 %v554
        %712 = vmatprep.subr.mxu0 0.0
        %713 = vmatpush1.msra.mxu0 %v555
        %714 = vmatprep.subr.mxu0 0.0
        %715 = vmatpush1.msra.mxu0 %v556
        %716 = vmatprep.subr.mxu0 0.0
        %717 = vmatpush1.msra.mxu0 %v557
        %718 = vmatprep.subr.mxu0 0.0
        %719 = vmatpush1.msra.mxu0 %v558
        %720 = vmatprep.subr.mxu0 0.0
        %721 = vmatpush1.msra.mxu0 %v559
        %722 = vmatprep.subr.mxu0 0.0
        %723 = vmatpush1.msra.mxu0 %v560
        %724 = vmatprep.subr.mxu0 0.0
        %725 = vmatpush1.msra.mxu0 %v561
        %726 = vmatprep.subr.mxu0 0.0
        %727 = vmatpush1.msra.mxu0 0.0
        %728 = vmatprep.subr.mxu0 0.0
        %729 = vmatpush1.msra.mxu0 0.0
        %730 = vmatprep.subr.mxu0 0.0
        %731 = vmatpush1.msra.mxu0 0.0
        %732 = vmatprep.subr.mxu0 0.0
        %733 = vmatpush1.msra.mxu0 0.0
        %734 = vmatprep.subr.mxu0 0.0
        %735 = vmatpush1.msra.mxu0 0.0
        %736 = vmatprep.subr.mxu0 0.0
        %737 = vmatpush1.msra.mxu0 0.0
        %738 = vmatprep.subr.mxu0 0.0
        %739 = vmatpush1.msra.mxu0 0.0
        %740 = vmatprep.subr.mxu0 0.0
        %741 = vmatpush1.msra.mxu0 0.0
        %742 = vmatprep.subr.mxu0 0.0
        %743 = vmatpush1.msra.mxu0 0.0
        %744 = vmatprep.subr.mxu0 0.0
        %745 = vmatpush1.msra.mxu0 0.0
        %746 = vmatprep.subr.mxu0 0.0
        %747 = vmatpush1.msra.mxu0 0.0
        %748 = vmatprep.subr.mxu0 0.0
        %749 = vmatpush1.msra.mxu0 0.0
        %750 = vmatprep.subr.mxu0 0.0
        %751 = vmatpush1.msra.mxu0 0.0
        %752 = vmatprep.subr.mxu0 0.0
        %753 = vmatpush1.msra.mxu0 0.0
        %754 = vmatprep.subr.mxu0 0.0
        %755 = vmatpush1.msra.mxu0 0.0
        %756 = vmatprep.subr.mxu0 0.0
        %757 = vmatpush1.msra.mxu0 0.0
        %758 = vmatprep.mubr.f32.mxu0 0.0
        %759 = vmatmul.mubr.f32.gmra.mrb[0].mxu0 %v545
        %v760 = vpop.f32.mrb[0].mxu0
        %v761 = vadd.f32 %v661, %v760
        %v762 = vpop.f32.mrb[0].mxu0
        %763 = vmatprep.mubr.f32.mxu0 0.0
        %764 = vmatmul.mubr.f32.gmra.mrb[0].mxu0 %v544
        %v765 = vpop.f32.mrb[0].mxu0
        %v766 = vadd.f32 %v666, %v765
        %v767 = vpop.f32.mrb[0].mxu0
        %768 = vmatprep.mubr.f32.mxu0 0.0
        %769 = vmatmul.mubr.f32.gmra.mrb[0].mxu0 %v543
        %v770 = vpop.f32.mrb[0].mxu0
        %v771 = vadd.f32 %v671, %v770
        %v772 = vpop.f32.mrb[0].mxu0
        %773 = vmatprep.mubr.f32.mxu0 0.0
        %774 = vmatmul.mubr.f32.gmra.mrb[0].mxu0 %v542
        %v775 = vpop.f32.mrb[0].mxu0
        %v776 = vadd.f32 %v676, %v775
        %v777 = vpop.f32.mrb[0].mxu0
        %778 = vmatprep.mubr.f32.mxu0 0.0
        %779 = vmatmul.mubr.f32.gmra.mrb[0].mxu0 %v541
        %v780 = vpop.f32.mrb[0].mxu0
        %v781 = vadd.f32 %v681, %v780
        %v782 = vpop.f32.mrb[0].mxu0
        %783 = vmatprep.mubr.f32.mxu0 0.0
        %784 = vmatmul.mubr.f32.gmra.mrb[0].mxu0 %v540
        %v785 = vpop.f32.mrb[0].mxu0
        %v786 = vadd.f32 %v686, %v785
        %v787 = vpop.f32.mrb[0].mxu0
        %788 = vmatprep.mubr.f32.mxu0 0.0
        %789 = vmatmul.mubr.f32.gmra.mrb[0].mxu0 %v539
        %v790 = vpop.f32.mrb[0].mxu0
        %v791 = vadd.f32 %v691, %v790
        %v792 = vpop.f32.mrb[0].mxu0
        %793 = vdwg.mxu0
        %s794 = scalar_lea.vmem [#allocation8], 256
        %v795 = vld [vmem:[%s794] sm:$0xff]
        %v796 = vld [vmem:[%s794 + $0x8] sm:$0xff]
        %v797 = vld [vmem:[%s794 + $0x10] sm:$0xff]
        %v798 = vld [vmem:[%s794 + $0x18] sm:$0xff]
        %v799 = vld [vmem:[%s794 + $0x20] sm:$0xff]
        %v800 = vld [vmem:[%s794 + $0x28] sm:$0xff]
        %v801 = vld [vmem:[%s794 + $0x30] sm:$0xff]
        %v802 = vld [vmem:[%s794 + $0x38] sm:$0xff]
        %v803 = vld [vmem:[%s794 + $0x40] sm:$0xff]
        %v804 = vld [vmem:[%s794 + $0x48] sm:$0xff]
        %v805 = vld [vmem:[%s794 + $0x50] sm:$0xff]
        %v806 = vld [vmem:[%s794 + $0x58] sm:$0xff]
        %v807 = vld [vmem:[%s794 + $0x60] sm:$0xff]
        %v808 = vld [vmem:[%s794 + $0x68] sm:$0xff]
        %v809 = vld [vmem:[%s794 + $0x70] sm:$0xff]
        %v810 = vld [vmem:[%s794 + $0x78] sm:$0xff]
        %811 = vmatprep.subr.mxu0 0.0
        %812 = vmatpush1.msra.mxu0 %v795
        %813 = vmatprep.subr.mxu0 0.0
        %814 = vmatpush1.msra.mxu0 %v796
        %815 = vmatprep.subr.mxu0 0.0
        %816 = vmatpush1.msra.mxu0 %v797
        %817 = vmatprep.subr.mxu0 0.0
        %818 = vmatpush1.msra.mxu0 %v798
        %819 = vmatprep.subr.mxu0 0.0
        %820 = vmatpush1.msra.mxu0 %v799
        %821 = vmatprep.subr.mxu0 0.0
        %822 = vmatpush1.msra.mxu0 %v800
        %823 = vmatprep.subr.mxu0 0.0
        %824 = vmatpush1.msra.mxu0 %v801
        %825 = vmatprep.subr.mxu0 0.0
        %826 = vmatpush1.msra.mxu0 %v802
        %827 = vmatprep.subr.mxu0 0.0
        %828 = vmatpush1.msra.mxu0 %v803
        %829 = vmatprep.subr.mxu0 0.0
        %830 = vmatpush1.msra.mxu0 %v804
        %831 = vmatprep.subr.mxu0 0.0
        %832 = vmatpush1.msra.mxu0 %v805
        %833 = vmatprep.subr.mxu0 0.0
        %834 = vmatpush1.msra.mxu0 %v806
        %835 = vmatprep.subr.mxu0 0.0
        %836 = vmatpush1.msra.mxu0 %v807
        %837 = vmatprep.subr.mxu0 0.0
        %838 = vmatpush1.msra.mxu0 %v808
        %839 = vmatprep.subr.mxu0 0.0
        %840 = vmatpush1.msra.mxu0 %v809
        %841 = vmatprep.subr.mxu0 0.0
        %842 = vmatpush1.msra.mxu0 %v810
        %843 = vmatprep.subr.mxu0 0.0
        %844 = vmatpush1.msra.mxu0 0.0
        %845 = vmatprep.subr.mxu0 0.0
        %846 = vmatpush1.msra.mxu0 0.0
        %847 = vmatprep.subr.mxu0 0.0
        %848 = vmatpush1.msra.mxu0 0.0
        %849 = vmatprep.subr.mxu0 0.0
        %850 = vmatpush1.msra.mxu0 0.0
        %851 = vmatprep.subr.mxu0 0.0
        %852 = vmatpush1.msra.mxu0 0.0
        %853 = vmatprep.subr.mxu0 0.0
        %854 = vmatpush1.msra.mxu0 0.0
        %855 = vmatprep.subr.mxu0 0.0
        %856 = vmatpush1.msra.mxu0 0.0
        %857 = vmatprep.subr.mxu0 0.0
        %858 = vmatpush1.msra.mxu0 0.0
        %859 = vmatprep.subr.mxu0 0.0
        %860 = vmatpush1.msra.mxu0 0.0
        %861 = vmatprep.subr.mxu0 0.0
        %862 = vmatpush1.msra.mxu0 0.0
        %863 = vmatprep.subr.mxu0 0.0
        %864 = vmatpush1.msra.mxu0 0.0
        %865 = vmatprep.subr.mxu0 0.0
        %866 = vmatpush1.msra.mxu0 0.0
        %867 = vmatprep.subr.mxu0 0.0
        %868 = vmatpush1.msra.mxu0 0.0
        %869 = vmatprep.subr.mxu0 0.0
        %870 = vmatpush1.msra.mxu0 0.0
        %871 = vmatprep.subr.mxu0 0.0
        %872 = vmatpush1.msra.mxu0 0.0
        %873 = vmatprep.subr.mxu0 0.0
        %874 = vmatpush1.msra.mxu0 0.0
        %875 = vmatprep.mubr.f32.mxu0 0.0
        %876 = vmatmul.mubr.f32.gmra.mrb[0].mxu0 %v524
        %v877 = vpop.f32.mrb[0].mxu0
        %v878 = vadd.f32 0.0, %v877
        %v879 = vpop.f32.mrb[0].mxu0
        %880 = vmatprep.mubr.f32.mxu0 0.0
        %881 = vmatmul.mubr.f32.gmra.mrb[0].mxu0 %v525
        %v882 = vpop.f32.mrb[0].mxu0
        %v883 = vadd.f32 0.0, %v882
        %v884 = vpop.f32.mrb[0].mxu0
        %885 = vmatprep.mubr.f32.mxu0 0.0
        %886 = vmatmul.mubr.f32.gmra.mrb[0].mxu0 %v526
        %v887 = vpop.f32.mrb[0].mxu0
        %v888 = vadd.f32 0.0, %v887
        %v889 = vpop.f32.mrb[0].mxu0
        %890 = vmatprep.mubr.f32.mxu0 0.0
        %891 = vmatmul.mubr.f32.gmra.mrb[0].mxu0 %v527
        %v892 = vpop.f32.mrb[0].mxu0
        %v893 = vadd.f32 0.0, %v892
        %v894 = vpop.f32.mrb[0].mxu0
        %895 = vmatprep.mubr.f32.mxu0 0.0
        %896 = vmatmul.mubr.f32.gmra.mrb[0].mxu0 %v528
        %v897 = vpop.f32.mrb[0].mxu0
        %v898 = vadd.f32 0.0, %v897
        %v899 = vpop.f32.mrb[0].mxu0
        %900 = vmatprep.mubr.f32.mxu0 0.0
        %901 = vmatmul.mubr.f32.gmra.mrb[0].mxu0 %v529
        %v902 = vpop.f32.mrb[0].mxu0
        %v903 = vadd.f32 0.0, %v902
        %v904 = vpop.f32.mrb[0].mxu0
        %905 = vmatprep.mubr.f32.mxu0 0.0
        %906 = vmatmul.mubr.f32.gmra.mrb[0].mxu0 %v530
        %v907 = vpop.f32.mrb[0].mxu0
        %v908 = vadd.f32 0.0, %v907
        %v909 = vpop.f32.mrb[0].mxu0
        %910 = vdwg.mxu0
        %v911 = vadd.f32 %v761, %v878
        %v912 = vadd.f32 %v766, %v883
        %v913 = vadd.f32 %v771, %v888
        %v914 = vadd.f32 %v776, %v893
        %v915 = vadd.f32 %v781, %v898
        %v916 = vadd.f32 %v786, %v903
        %v917 = vadd.f32 %v791, %v908
        %v918 = vrot.slane %v524, 1
        %v919 = vrot.slane %v525, 1
        %v920 = vrot.slane %v526, 1
        %v921 = vrot.slane %v527, 1
        %v922 = vrot.slane %v528, 1
        %v923 = vrot.slane %v529, 1
        %v924 = vrot.slane %v530, 1
        %vm925 = vcmp.lt.s32.totalorder %v321, 7
        %v926 = vsel %vm925, %v923, %v924
        %v927 = vsel %vm925, %v922, %v923
        %v928 = vsel %vm925, %v921, %v922
        %v929 = vsel %vm925, %v920, %v921
        %v930 = vsel %vm925, %v919, %v920
        %v931 = vsel %vm925, %v918, %v919
        %v932 = vsel %vm925, %v924, %v918
        %s933 = scalar_lea.vmem [#allocation8], 384
        %v934 = vld [vmem:[%s933] sm:$0xff]
        %v935 = vld [vmem:[%s933 + $0x8] sm:$0xff]
        %v936 = vld [vmem:[%s933 + $0x10] sm:$0xff]
        %v937 = vld [vmem:[%s933 + $0x18] sm:$0xff]
        %v938 = vld [vmem:[%s933 + $0x20] sm:$0xff]
        %v939 = vld [vmem:[%s933 + $0x28] sm:$0xff]
        %v940 = vld [vmem:[%s933 + $0x30] sm:$0xff]
        %v941 = vld [vmem:[%s933 + $0x38] sm:$0xff]
        %v942 = vld [vmem:[%s933 + $0x40] sm:$0xff]
        %v943 = vld [vmem:[%s933 + $0x48] sm:$0xff]
        %v944 = vld [vmem:[%s933 + $0x50] sm:$0xff]
        %v945 = vld [vmem:[%s933 + $0x58] sm:$0xff]
        %v946 = vld [vmem:[%s933 + $0x60] sm:$0xff]
        %v947 = vld [vmem:[%s933 + $0x68] sm:$0xff]
        %v948 = vld [vmem:[%s933 + $0x70] sm:$0xff]
        %v949 = vld [vmem:[%s933 + $0x78] sm:$0xff]
        %950 = vmatprep.subr.mxu0 0.0
        %951 = vmatpush1.msra.mxu0 %v934
        %952 = vmatprep.subr.mxu0 0.0
        %953 = vmatpush1.msra.mxu0 %v935
        %954 = vmatprep.subr.mxu0 0.0
        %955 = vmatpush1.msra.mxu0 %v936
        %956 = vmatprep.subr.mxu0 0.0
        %957 = vmatpush1.msra.mxu0 %v937
        %958 = vmatprep.subr.mxu0 0.0
        %959 = vmatpush1.msra.mxu0 %v938
        %960 = vmatprep.subr.mxu0 0.0
        %961 = vmatpush1.msra.mxu0 %v939
        %962 = vmatprep.subr.mxu0 0.0
        %963 = vmatpush1.msra.mxu0 %v940
        %964 = vmatprep.subr.mxu0 0.0
        %965 = vmatpush1.msra.mxu0 %v941
        %966 = vmatprep.subr.mxu0 0.0
        %967 = vmatpush1.msra.mxu0 %v942
        %968 = vmatprep.subr.mxu0 0.0
        %969 = vmatpush1.msra.mxu0 %v943
        %970 = vmatprep.subr.mxu0 0.0
        %971 = vmatpush1.msra.mxu0 %v944
        %972 = vmatprep.subr.mxu0 0.0
        %973 = vmatpush1.msra.mxu0 %v945
        %974 = vmatprep.subr.mxu0 0.0
        %975 = vmatpush1.msra.mxu0 %v946
        %976 = vmatprep.subr.mxu0 0.0
        %977 = vmatpush1.msra.mxu0 %v947
        %978 = vmatprep.subr.mxu0 0.0
        %979 = vmatpush1.msra.mxu0 %v948
        %980 = vmatprep.subr.mxu0 0.0
        %981 = vmatpush1.msra.mxu0 %v949
        %982 = vmatprep.subr.mxu0 0.0
        %983 = vmatpush1.msra.mxu0 0.0
        %984 = vmatprep.subr.mxu0 0.0
        %985 = vmatpush1.msra.mxu0 0.0
        %986 = vmatprep.subr.mxu0 0.0
        %987 = vmatpush1.msra.mxu0 0.0
        %988 = vmatprep.subr.mxu0 0.0
        %989 = vmatpush1.msra.mxu0 0.0
        %990 = vmatprep.subr.mxu0 0.0
        %991 = vmatpush1.msra.mxu0 0.0
        %992 = vmatprep.subr.mxu0 0.0
        %993 = vmatpush1.msra.mxu0 0.0
        %994 = vmatprep.subr.mxu0 0.0
        %995 = vmatpush1.msra.mxu0 0.0
        %996 = vmatprep.subr.mxu0 0.0
        %997 = vmatpush1.msra.mxu0 0.0
        %998 = vmatprep.subr.mxu0 0.0
        %999 = vmatpush1.msra.mxu0 0.0
        %1000 = vmatprep.subr.mxu0 0.0
        %1001 = vmatpush1.msra.mxu0 0.0
        %1002 = vmatprep.subr.mxu0 0.0
        %1003 = vmatpush1.msra.mxu0 0.0
        %1004 = vmatprep.subr.mxu0 0.0
        %1005 = vmatpush1.msra.mxu0 0.0
        %1006 = vmatprep.subr.mxu0 0.0
        %1007 = vmatpush1.msra.mxu0 0.0
        %1008 = vmatprep.subr.mxu0 0.0
        %1009 = vmatpush1.msra.mxu0 0.0
        %1010 = vmatprep.subr.mxu0 0.0
        %1011 = vmatpush1.msra.mxu0 0.0
        %1012 = vmatprep.subr.mxu0 0.0
        %1013 = vmatpush1.msra.mxu0 0.0
        %1014 = vmatprep.mubr.f32.mxu0 0.0
        %1015 = vmatmul.mubr.f32.gmra.mrb[0].mxu0 %v931
        %v1016 = vpop.f32.mrb[0].mxu0
        %v1017 = vadd.f32 0.0, %v1016
        %v1018 = vpop.f32.mrb[0].mxu0
        %1019 = vmatprep.mubr.f32.mxu0 0.0
        %1020 = vmatmul.mubr.f32.gmra.mrb[0].mxu0 %v930
        %v1021 = vpop.f32.mrb[0].mxu0
        %v1022 = vadd.f32 0.0, %v1021
        %v1023 = vpop.f32.mrb[0].mxu0
        %1024 = vmatprep.mubr.f32.mxu0 0.0
        %1025 = vmatmul.mubr.f32.gmra.mrb[0].mxu0 %v929
        %v1026 = vpop.f32.mrb[0].mxu0
        %v1027 = vadd.f32 0.0, %v1026
        %v1028 = vpop.f32.mrb[0].mxu0
        %1029 = vmatprep.mubr.f32.mxu0 0.0
        %1030 = vmatmul.mubr.f32.gmra.mrb[0].mxu0 %v928
        %v1031 = vpop.f32.mrb[0].mxu0
        %v1032 = vadd.f32 0.0, %v1031
        %v1033 = vpop.f32.mrb[0].mxu0
        %1034 = vmatprep.mubr.f32.mxu0 0.0
        %1035 = vmatmul.mubr.f32.gmra.mrb[0].mxu0 %v927
        %v1036 = vpop.f32.mrb[0].mxu0
        %v1037 = vadd.f32 0.0, %v1036
        %v1038 = vpop.f32.mrb[0].mxu0
        %1039 = vmatprep.mubr.f32.mxu0 0.0
        %1040 = vmatmul.mubr.f32.gmra.mrb[0].mxu0 %v926
        %v1041 = vpop.f32.mrb[0].mxu0
        %v1042 = vadd.f32 0.0, %v1041
        %v1043 = vpop.f32.mrb[0].mxu0
        %1044 = vmatprep.mubr.f32.mxu0 0.0
        %1045 = vmatmul.mubr.f32.gmra.mrb[0].mxu0 %v932
        %v1046 = vpop.f32.mrb[0].mxu0
        %v1047 = vadd.f32 0.0, %v1046
        %v1048 = vpop.f32.mrb[0].mxu0
        %1049 = vdwg.mxu0
        %v1050 = vadd.f32 %v911, %v1017
        %v1051 = vadd.f32 %v912, %v1022
        %v1052 = vadd.f32 %v913, %v1027
        %v1053 = vadd.f32 %v914, %v1032
        %v1054 = vadd.f32 %v915, %v1037
        %v1055 = vadd.f32 %v916, %v1042
        %v1056 = vadd.f32 %v917, %v1047
        %v1057 = vrot.slane %v524, 2
        %v1058 = vrot.slane %v525, 2
        %v1059 = vrot.slane %v526, 2
        %v1060 = vrot.slane %v527, 2
        %v1061 = vrot.slane %v528, 2
        %v1062 = vrot.slane %v529, 2
        %v1063 = vrot.slane %v530, 2
        %vm1064 = vcmp.lt.s32.totalorder %v321, 6
        %v1065 = vsel %vm1064, %v1062, %v1063
        %v1066 = vsel %vm1064, %v1061, %v1062
        %v1067 = vsel %vm1064, %v1060, %v1061
        %v1068 = vsel %vm1064, %v1059, %v1060
        %v1069 = vsel %vm1064, %v1058, %v1059
        %v1070 = vsel %vm1064, %v1057, %v1058
        %v1071 = vsel %vm1064, %v1063, %v1057
        %s1072 = scalar_lea.vmem [#allocation8], 512
        %v1073 = vld [vmem:[%s1072] sm:$0xff]
        %v1074 = vld [vmem:[%s1072 + $0x8] sm:$0xff]
        %v1075 = vld [vmem:[%s1072 + $0x10] sm:$0xff]
        %v1076 = vld [vmem:[%s1072 + $0x18] sm:$0xff]
        %v1077 = vld [vmem:[%s1072 + $0x20] sm:$0xff]
        %v1078 = vld [vmem:[%s1072 + $0x28] sm:$0xff]
        %v1079 = vld [vmem:[%s1072 + $0x30] sm:$0xff]
        %v1080 = vld [vmem:[%s1072 + $0x38] sm:$0xff]
        %v1081 = vld [vmem:[%s1072 + $0x40] sm:$0xff]
        %v1082 = vld [vmem:[%s1072 + $0x48] sm:$0xff]
        %v1083 = vld [vmem:[%s1072 + $0x50] sm:$0xff]
        %v1084 = vld [vmem:[%s1072 + $0x58] sm:$0xff]
        %v1085 = vld [vmem:[%s1072 + $0x60] sm:$0xff]
        %v1086 = vld [vmem:[%s1072 + $0x68] sm:$0xff]
        %v1087 = vld [vmem:[%s1072 + $0x70] sm:$0xff]
        %v1088 = vld [vmem:[%s1072 + $0x78] sm:$0xff]
        %1089 = vmatprep.subr.mxu0 0.0
        %1090 = vmatpush1.msra.mxu0 %v1073
        %1091 = vmatprep.subr.mxu0 0.0
        %1092 = vmatpush1.msra.mxu0 %v1074
        %1093 = vmatprep.subr.mxu0 0.0
        %1094 = vmatpush1.msra.mxu0 %v1075
        %1095 = vmatprep.subr.mxu0 0.0
        %1096 = vmatpush1.msra.mxu0 %v1076
        %1097 = vmatprep.subr.mxu0 0.0
        %1098 = vmatpush1.msra.mxu0 %v1077
        %1099 = vmatprep.subr.mxu0 0.0
        %1100 = vmatpush1.msra.mxu0 %v1078
        %1101 = vmatprep.subr.mxu0 0.0
        %1102 = vmatpush1.msra.mxu0 %v1079
        %1103 = vmatprep.subr.mxu0 0.0
        %1104 = vmatpush1.msra.mxu0 %v1080
        %1105 = vmatprep.subr.mxu0 0.0
        %1106 = vmatpush1.msra.mxu0 %v1081
        %1107 = vmatprep.subr.mxu0 0.0
        %1108 = vmatpush1.msra.mxu0 %v1082
        %1109 = vmatprep.subr.mxu0 0.0
        %1110 = vmatpush1.msra.mxu0 %v1083
        %1111 = vmatprep.subr.mxu0 0.0
        %1112 = vmatpush1.msra.mxu0 %v1084
        %1113 = vmatprep.subr.mxu0 0.0
        %1114 = vmatpush1.msra.mxu0 %v1085
        %1115 = vmatprep.subr.mxu0 0.0
        %1116 = vmatpush1.msra.mxu0 %v1086
        %1117 = vmatprep.subr.mxu0 0.0
        %1118 = vmatpush1.msra.mxu0 %v1087
        %1119 = vmatprep.subr.mxu0 0.0
        %1120 = vmatpush1.msra.mxu0 %v1088
        %1121 = vmatprep.subr.mxu0 0.0
        %1122 = vmatpush1.msra.mxu0 0.0
        %1123 = vmatprep.subr.mxu0 0.0
        %1124 = vmatpush1.msra.mxu0 0.0
        %1125 = vmatprep.subr.mxu0 0.0
        %1126 = vmatpush1.msra.mxu0 0.0
        %1127 = vmatprep.subr.mxu0 0.0
        %1128 = vmatpush1.msra.mxu0 0.0
        %1129 = vmatprep.subr.mxu0 0.0
        %1130 = vmatpush1.msra.mxu0 0.0
        %1131 = vmatprep.subr.mxu0 0.0
        %1132 = vmatpush1.msra.mxu0 0.0
        %1133 = vmatprep.subr.mxu0 0.0
        %1134 = vmatpush1.msra.mxu0 0.0
        %1135 = vmatprep.subr.mxu0 0.0
        %1136 = vmatpush1.msra.mxu0 0.0
        %1137 = vmatprep.subr.mxu0 0.0
        %1138 = vmatpush1.msra.mxu0 0.0
        %1139 = vmatprep.subr.mxu0 0.0
        %1140 = vmatpush1.msra.mxu0 0.0
        %1141 = vmatprep.subr.mxu0 0.0
        %1142 = vmatpush1.msra.mxu0 0.0
        %1143 = vmatprep.subr.mxu0 0.0
        %1144 = vmatpush1.msra.mxu0 0.0
        %1145 = vmatprep.subr.mxu0 0.0
        %1146 = vmatpush1.msra.mxu0 0.0
        %1147 = vmatprep.subr.mxu0 0.0
        %1148 = vmatpush1.msra.mxu0 0.0
        %1149 = vmatprep.subr.mxu0 0.0
        %1150 = vmatpush1.msra.mxu0 0.0
        %1151 = vmatprep.subr.mxu0 0.0
        %1152 = vmatpush1.msra.mxu0 0.0
        %1153 = vmatprep.mubr.f32.mxu0 0.0
        %1154 = vmatmul.mubr.f32.gmra.mrb[0].mxu0 %v1070
        %v1155 = vpop.f32.mrb[0].mxu0
        %v1156 = vadd.f32 0.0, %v1155
        %v1157 = vpop.f32.mrb[0].mxu0
        %1158 = vmatprep.mubr.f32.mxu0 0.0
        %1159 = vmatmul.mubr.f32.gmra.mrb[0].mxu0 %v1069
        %v1160 = vpop.f32.mrb[0].mxu0
        %v1161 = vadd.f32 0.0, %v1160
        %v1162 = vpop.f32.mrb[0].mxu0
        %1163 = vmatprep.mubr.f32.mxu0 0.0
        %1164 = vmatmul.mubr.f32.gmra.mrb[0].mxu0 %v1068
        %v1165 = vpop.f32.mrb[0].mxu0
        %v1166 = vadd.f32 0.0, %v1165
        %v1167 = vpop.f32.mrb[0].mxu0
        %1168 = vmatprep.mubr.f32.mxu0 0.0
        %1169 = vmatmul.mubr.f32.gmra.mrb[0].mxu0 %v1067
        %v1170 = vpop.f32.mrb[0].mxu0
        %v1171 = vadd.f32 0.0, %v1170
        %v1172 = vpop.f32.mrb[0].mxu0
        %1173 = vmatprep.mubr.f32.mxu0 0.0
        %1174 = vmatmul.mubr.f32.gmra.mrb[0].mxu0 %v1066
        %v1175 = vpop.f32.mrb[0].mxu0
        %v1176 = vadd.f32 0.0, %v1175
        %v1177 = vpop.f32.mrb[0].mxu0
        %1178 = vmatprep.mubr.f32.mxu0 0.0
        %1179 = vmatmul.mubr.f32.gmra.mrb[0].mxu0 %v1065
        %v1180 = vpop.f32.mrb[0].mxu0
        %v1181 = vadd.f32 0.0, %v1180
        %v1182 = vpop.f32.mrb[0].mxu0
        %1183 = vmatprep.mubr.f32.mxu0 0.0
        %1184 = vmatmul.mubr.f32.gmra.mrb[0].mxu0 %v1071
        %v1185 = vpop.f32.mrb[0].mxu0
        %v1186 = vadd.f32 0.0, %v1185
        %v1187 = vpop.f32.mrb[0].mxu0
        %1188 = vdwg.mxu0
        %v1189 = vadd.f32 %v1050, %v1156
        %v1190 = vadd.f32 %v1051, %v1161
        %v1191 = vadd.f32 %v1052, %v1166
        %v1192 = vadd.f32 %v1053, %v1171
        %v1193 = vadd.f32 %v1054, %v1176
        %v1194 = vadd.f32 %v1055, %v1181
        %v1195 = vadd.f32 %v1056, %v1186
        %v1196 = vld [vmem:[#allocation9] sm:$0x1]
        %v1198 = vlaneseq
        %v1199 = vshrl.u32 %v1198, 7
        %v1200 = vsub.s32 0, %v1199
        %v1201 = vrot.slane %v1196, %v1200
        %v1203 = vadd.f32 %v1189, %v1201
        %v1204 = vadd.f32 %v1190, %v1201
        %v1205 = vadd.f32 %v1191, %v1201
        %v1206 = vadd.f32 %v1192, %v1201
        %v1207 = vadd.f32 %v1193, %v1201
        %v1208 = vadd.f32 %v1194, %v1201
        %v1209 = vadd.f32 %v1195, %v1201
        %v1210 = vsel %vm350, %v1203, 0.0
        %v1211 = vsel %vm351, %v1204, 0.0
        %v1212 = vsel %vm352, %v1205, 0.0
        %v1213 = vsel %vm353, %v1206, 0.0
        %v1214 = vsel %vm354, %v1207, 0.0
        %v1215 = vsel %vm355, %v1208, 0.0
        %v1216 = vsel %vm356, %v1209, 0.0
        %v1217 = vtanh.pop %v1210
        %v1218 = vtanh.pop %v1211
        %v1219 = vtanh.pop %v1212
        %v1220 = vtanh.pop %v1213
        %v1221 = vtanh.pop %v1214
        %v1222 = vtanh.pop %v1215
        %v1223 = vtanh.pop %v1216
        %1224 = vst [vmem:[#allocation3] sm:$0xff] %v1217
        %1225 = vst [vmem:[#allocation3 + $0x8] sm:$0xff] %v1218
        %1226 = vst [vmem:[#allocation3 + $0x10] sm:$0xff] %v1219
        %1227 = vst [vmem:[#allocation3 + $0x18] sm:$0xff] %v1220
        %1228 = vst [vmem:[#allocation3 + $0x20] sm:$0xff] %v1221
        %1229 = vst [vmem:[#allocation3 + $0x28] sm:$0xff] %v1222
        %1230 = vst [vmem:[#allocation3 + $0x30] sm:$0xff] %v1223
        %v1231 = vld [vmem:[#allocation3] sm:$0xff]
        %v1232 = vld [vmem:[#allocation3 + $0x8] sm:$0xff]
        %v1233 = vld [vmem:[#allocation3 + $0x10] sm:$0xff]
        %v1234 = vld [vmem:[#allocation3 + $0x18] sm:$0xff]
        %v1235 = vld [vmem:[#allocation3 + $0x20] sm:$0xff]
        %v1236 = vld [vmem:[#allocation3 + $0x28] sm:$0xff]
        %v1237 = vld [vmem:[#allocation3 + $0x30] sm:$0xff]
        %v1238 = vrot.slane %v1231, 6
        %v1239 = vrot.slane %v1232, 6
        %v1240 = vrot.slane %v1233, 6
        %v1241 = vrot.slane %v1234, 6
        %v1242 = vrot.slane %v1235, 6
        %v1243 = vrot.slane %v1236, 6
        %v1244 = vrot.slane %v1237, 6
        %v1245 = vsel %vm538, %v1243, %v1244
        %v1246 = vsel %vm538, %v1242, %v1243
        %v1247 = vsel %vm538, %v1241, %v1242
        %v1248 = vsel %vm538, %v1240, %v1241
        %v1249 = vsel %vm538, %v1239, %v1240
        %v1250 = vsel %vm538, %v1238, %v1239
        %v1251 = vsel %vm538, %v1244, %v1238
        %s1252 = scalar_lea.vmem [#allocation8], 640
        %v1253 = vld [vmem:[%s1252] sm:$0xff]
        %v1254 = vld [vmem:[%s1252 + $0x8] sm:$0xff]
        %v1255 = vld [vmem:[%s1252 + $0x10] sm:$0xff]
        %v1256 = vld [vmem:[%s1252 + $0x18] sm:$0xff]
        %v1257 = vld [vmem:[%s1252 + $0x20] sm:$0xff]
        %v1258 = vld [vmem:[%s1252 + $0x28] sm:$0xff]
        %v1259 = vld [vmem:[%s1252 + $0x30] sm:$0xff]
        %v1260 = vld [vmem:[%s1252 + $0x38] sm:$0xff]
        %v1261 = vld [vmem:[%s1252 + $0x40] sm:$0xff]
        %v1262 = vld [vmem:[%s1252 + $0x48] sm:$0xff]
        %v1263 = vld [vmem:[%s1252 + $0x50] sm:$0xff]
        %v1264 = vld [vmem:[%s1252 + $0x58] sm:$0xff]
        %v1265 = vld [vmem:[%s1252 + $0x60] sm:$0xff]
        %v1266 = vld [vmem:[%s1252 + $0x68] sm:$0xff]
        %v1267 = vld [vmem:[%s1252 + $0x70] sm:$0xff]
        %v1268 = vld [vmem:[%s1252 + $0x78] sm:$0xff]
        %v1269 = vrot.slane %v1231, 7
        %v1270 = vrot.slane %v1232, 7
        %v1271 = vrot.slane %v1233, 7
        %v1272 = vrot.slane %v1234, 7
        %v1273 = vrot.slane %v1235, 7
        %v1274 = vrot.slane %v1236, 7
        %v1275 = vrot.slane %v1237, 7
        %v1276 = vsel %vm569, %v1274, %v1275
        %v1277 = vsel %vm569, %v1273, %v1274
        %v1278 = vsel %vm569, %v1272, %v1273
        %v1279 = vsel %vm569, %v1271, %v1272
        %v1280 = vsel %vm569, %v1270, %v1271
        %v1281 = vsel %vm569, %v1269, %v1270
        %v1282 = vsel %vm569, %v1275, %v1269
        %s1283 = scalar_lea.vmem [#allocation8], 768
        %v1284 = vld [vmem:[%s1283] sm:$0xff]
        %v1285 = vld [vmem:[%s1283 + $0x8] sm:$0xff]
        %v1286 = vld [vmem:[%s1283 + $0x10] sm:$0xff]
        %v1287 = vld [vmem:[%s1283 + $0x18] sm:$0xff]
        %v1288 = vld [vmem:[%s1283 + $0x20] sm:$0xff]
        %v1289 = vld [vmem:[%s1283 + $0x28] sm:$0xff]
        %v1290 = vld [vmem:[%s1283 + $0x30] sm:$0xff]
        %v1291 = vld [vmem:[%s1283 + $0x38] sm:$0xff]
        %v1292 = vld [vmem:[%s1283 + $0x40] sm:$0xff]
        %v1293 = vld [vmem:[%s1283 + $0x48] sm:$0xff]
        %v1294 = vld [vmem:[%s1283 + $0x50] sm:$0xff]
        %v1295 = vld [vmem:[%s1283 + $0x58] sm:$0xff]
        %v1296 = vld [vmem:[%s1283 + $0x60] sm:$0xff]
        %v1297 = vld [vmem:[%s1283 + $0x68] sm:$0xff]
        %v1298 = vld [vmem:[%s1283 + $0x70] sm:$0xff]
        %v1299 = vld [vmem:[%s1283 + $0x78] sm:$0xff]
        %1300 = vmatprep.subr.mxu0 0.0
        %1301 = vmatpush1.msra.mxu0 %v1284
        %1302 = vmatprep.subr.mxu0 0.0
        %1303 = vmatpush1.msra.mxu0 %v1285
        %1304 = vmatprep.subr.mxu0 0.0
        %1305 = vmatpush1.msra.mxu0 %v1286
        %1306 = vmatprep.subr.mxu0 0.0
        %1307 = vmatpush1.msra.mxu0 %v1287
        %1308 = vmatprep.subr.mxu0 0.0
        %1309 = vmatpush1.msra.mxu0 %v1288
        %1310 = vmatprep.subr.mxu0 0.0
        %1311 = vmatpush1.msra.mxu0 %v1289
        %1312 = vmatprep.subr.mxu0 0.0
        %1313 = vmatpush1.msra.mxu0 %v1290
        %1314 = vmatprep.subr.mxu0 0.0
        %1315 = vmatpush1.msra.mxu0 %v1291
        %1316 = vmatprep.subr.mxu0 0.0
        %1317 = vmatpush1.msra.mxu0 %v1292
        %1318 = vmatprep.subr.mxu0 0.0
        %1319 = vmatpush1.msra.mxu0 %v1293
        %1320 = vmatprep.subr.mxu0 0.0
        %1321 = vmatpush1.msra.mxu0 %v1294
        %1322 = vmatprep.subr.mxu0 0.0
        %1323 = vmatpush1.msra.mxu0 %v1295
        %1324 = vmatprep.subr.mxu0 0.0
        %1325 = vmatpush1.msra.mxu0 %v1296
        %1326 = vmatprep.subr.mxu0 0.0
        %1327 = vmatpush1.msra.mxu0 %v1297
        %1328 = vmatprep.subr.mxu0 0.0
        %1329 = vmatpush1.msra.mxu0 %v1298
        %1330 = vmatprep.subr.mxu0 0.0
        %1331 = vmatpush1.msra.mxu0 %v1299
        %1332 = vmatprep.subr.mxu0 0.0
        %1333 = vmatpush1.msra.mxu0 0.0
        %1334 = vmatprep.subr.mxu0 0.0
        %1335 = vmatpush1.msra.mxu0 0.0
        %1336 = vmatprep.subr.mxu0 0.0
        %1337 = vmatpush1.msra.mxu0 0.0
        %1338 = vmatprep.subr.mxu0 0.0
        %1339 = vmatpush1.msra.mxu0 0.0
        %1340 = vmatprep.subr.mxu0 0.0
        %1341 = vmatpush1.msra.mxu0 0.0
        %1342 = vmatprep.subr.mxu0 0.0
        %1343 = vmatpush1.msra.mxu0 0.0
        %1344 = vmatprep.subr.mxu0 0.0
        %1345 = vmatpush1.msra.mxu0 0.0
        %1346 = vmatprep.subr.mxu0 0.0
        %1347 = vmatpush1.msra.mxu0 0.0
        %1348 = vmatprep.subr.mxu0 0.0
        %1349 = vmatpush1.msra.mxu0 0.0
        %1350 = vmatprep.subr.mxu0 0.0
        %1351 = vmatpush1.msra.mxu0 0.0
        %1352 = vmatprep.subr.mxu0 0.0
        %1353 = vmatpush1.msra.mxu0 0.0
        %1354 = vmatprep.subr.mxu0 0.0
        %1355 = vmatpush1.msra.mxu0 0.0
        %1356 = vmatprep.subr.mxu0 0.0
        %1357 = vmatpush1.msra.mxu0 0.0
        %1358 = vmatprep.subr.mxu0 0.0
        %1359 = vmatpush1.msra.mxu0 0.0
        %1360 = vmatprep.subr.mxu0 0.0
        %1361 = vmatpush1.msra.mxu0 0.0
        %1362 = vmatprep.subr.mxu0 0.0
        %1363 = vmatpush1.msra.mxu0 0.0
        %1364 = vmatprep.mubr.f32.mxu0 0.0
        %1365 = vmatmul.mubr.f32.gmra.mrb[0].mxu0 %v1282
        %v1366 = vpop.f32.mrb[0].mxu0
        %v1367 = vadd.f32 0.0, %v1366
        %v1368 = vpop.f32.mrb[0].mxu0
        %1369 = vmatprep.mubr.f32.mxu0 0.0
        %1370 = vmatmul.mubr.f32.gmra.mrb[0].mxu0 %v1281
        %v1371 = vpop.f32.mrb[0].mxu0
        %v1372 = vadd.f32 0.0, %v1371
        %v1373 = vpop.f32.mrb[0].mxu0
        %1374 = vmatprep.mubr.f32.mxu0 0.0
        %1375 = vmatmul.mubr.f32.gmra.mrb[0].mxu0 %v1280
        %v1376 = vpop.f32.mrb[0].mxu0
        %v1377 = vadd.f32 0.0, %v1376
        %v1378 = vpop.f32.mrb[0].mxu0
        %1379 = vmatprep.mubr.f32.mxu0 0.0
        %1380 = vmatmul.mubr.f32.gmra.mrb[0].mxu0 %v1279
        %v1381 = vpop.f32.mrb[0].mxu0
        %v1382 = vadd.f32 0.0, %v1381
        %v1383 = vpop.f32.mrb[0].mxu0
        %1384 = vmatprep.mubr.f32.mxu0 0.0
        %1385 = vmatmul.mubr.f32.gmra.mrb[0].mxu0 %v1278
        %v1386 = vpop.f32.mrb[0].mxu0
        %v1387 = vadd.f32 0.0, %v1386
        %v1388 = vpop.f32.mrb[0].mxu0
        %1389 = vmatprep.mubr.f32.mxu0 0.0
        %1390 = vmatmul.mubr.f32.gmra.mrb[0].mxu0 %v1277
        %v1391 = vpop.f32.mrb[0].mxu0
        %v1392 = vadd.f32 0.0, %v1391
        %v1393 = vpop.f32.mrb[0].mxu0
        %1394 = vmatprep.mubr.f32.mxu0 0.0
        %1395 = vmatmul.mubr.f32.gmra.mrb[0].mxu0 %v1276
        %v1396 = vpop.f32.mrb[0].mxu0
        %v1397 = vadd.f32 0.0, %v1396
        %v1398 = vpop.f32.mrb[0].mxu0
        %1399 = vdwg.mxu0
        %1400 = vmatprep.subr.mxu0 0.0
        %1401 = vmatpush1.msra.mxu0 %v1253
        %1402 = vmatprep.subr.mxu0 0.0
        %1403 = vmatpush1.msra.mxu0 %v1254
        %1404 = vmatprep.subr.mxu0 0.0
        %1405 = vmatpush1.msra.mxu0 %v1255
        %1406 = vmatprep.subr.mxu0 0.0
        %1407 = vmatpush1.msra.mxu0 %v1256
        %1408 = vmatprep.subr.mxu0 0.0
        %1409 = vmatpush1.msra.mxu0 %v1257
        %1410 = vmatprep.subr.mxu0 0.0
        %1411 = vmatpush1.msra.mxu0 %v1258
        %1412 = vmatprep.subr.mxu0 0.0
        %1413 = vmatpush1.msra.mxu0 %v1259
        %1414 = vmatprep.subr.mxu0 0.0
        %1415 = vmatpush1.msra.mxu0 %v1260
        %1416 = vmatprep.subr.mxu0 0.0
        %1417 = vmatpush1.msra.mxu0 %v1261
        %1418 = vmatprep.subr.mxu0 0.0
        %1419 = vmatpush1.msra.mxu0 %v1262
        %1420 = vmatprep.subr.mxu0 0.0
        %1421 = vmatpush1.msra.mxu0 %v1263
        %1422 = vmatprep.subr.mxu0 0.0
        %1423 = vmatpush1.msra.mxu0 %v1264
        %1424 = vmatprep.subr.mxu0 0.0
        %1425 = vmatpush1.msra.mxu0 %v1265
        %1426 = vmatprep.subr.mxu0 0.0
        %1427 = vmatpush1.msra.mxu0 %v1266
        %1428 = vmatprep.subr.mxu0 0.0
        %1429 = vmatpush1.msra.mxu0 %v1267
        %1430 = vmatprep.subr.mxu0 0.0
        %1431 = vmatpush1.msra.mxu0 %v1268
        %1432 = vmatprep.subr.mxu0 0.0
        %1433 = vmatpush1.msra.mxu0 0.0
        %1434 = vmatprep.subr.mxu0 0.0
        %1435 = vmatpush1.msra.mxu0 0.0
        %1436 = vmatprep.subr.mxu0 0.0
        %1437 = vmatpush1.msra.mxu0 0.0
        %1438 = vmatprep.subr.mxu0 0.0
        %1439 = vmatpush1.msra.mxu0 0.0
        %1440 = vmatprep.subr.mxu0 0.0
        %1441 = vmatpush1.msra.mxu0 0.0
        %1442 = vmatprep.subr.mxu0 0.0
        %1443 = vmatpush1.msra.mxu0 0.0
        %1444 = vmatprep.subr.mxu0 0.0
        %1445 = vmatpush1.msra.mxu0 0.0
        %1446 = vmatprep.subr.mxu0 0.0
        %1447 = vmatpush1.msra.mxu0 0.0
        %1448 = vmatprep.subr.mxu0 0.0
        %1449 = vmatpush1.msra.mxu0 0.0
        %1450 = vmatprep.subr.mxu0 0.0
        %1451 = vmatpush1.msra.mxu0 0.0
        %1452 = vmatprep.subr.mxu0 0.0
        %1453 = vmatpush1.msra.mxu0 0.0
        %1454 = vmatprep.subr.mxu0 0.0
        %1455 = vmatpush1.msra.mxu0 0.0
        %1456 = vmatprep.subr.mxu0 0.0
        %1457 = vmatpush1.msra.mxu0 0.0
        %1458 = vmatprep.subr.mxu0 0.0
        %1459 = vmatpush1.msra.mxu0 0.0
        %1460 = vmatprep.subr.mxu0 0.0
        %1461 = vmatpush1.msra.mxu0 0.0
        %1462 = vmatprep.subr.mxu0 0.0
        %1463 = vmatpush1.msra.mxu0 0.0
        %1464 = vmatprep.mubr.f32.mxu0 0.0
        %1465 = vmatmul.mubr.f32.gmra.mrb[0].mxu0 %v1251
        %v1466 = vpop.f32.mrb[0].mxu0
        %v1467 = vadd.f32 %v1367, %v1466
        %v1468 = vpop.f32.mrb[0].mxu0
        %1469 = vmatprep.mubr.f32.mxu0 0.0
        %1470 = vmatmul.mubr.f32.gmra.mrb[0].mxu0 %v1250
        %v1471 = vpop.f32.mrb[0].mxu0
        %v1472 = vadd.f32 %v1372, %v1471
        %v1473 = vpop.f32.mrb[0].mxu0
        %1474 = vmatprep.mubr.f32.mxu0 0.0
        %1475 = vmatmul.mubr.f32.gmra.mrb[0].mxu0 %v1249
        %v1476 = vpop.f32.mrb[0].mxu0
        %v1477 = vadd.f32 %v1377, %v1476
        %v1478 = vpop.f32.mrb[0].mxu0
        %1479 = vmatprep.mubr.f32.mxu0 0.0
        %1480 = vmatmul.mubr.f32.gmra.mrb[0].mxu0 %v1248
        %v1481 = vpop.f32.mrb[0].mxu0
        %v1482 = vadd.f32 %v1382, %v1481
        %v1483 = vpop.f32.mrb[0].mxu0
        %1484 = vmatprep.mubr.f32.mxu0 0.0
        %1485 = vmatmul.mubr.f32.gmra.mrb[0].mxu0 %v1247
        %v1486 = vpop.f32.mrb[0].mxu0
        %v1487 = vadd.f32 %v1387, %v1486
        %v1488 = vpop.f32.mrb[0].mxu0
        %1489 = vmatprep.mubr.f32.mxu0 0.0
        %1490 = vmatmul.mubr.f32.gmra.mrb[0].mxu0 %v1246
        %v1491 = vpop.f32.mrb[0].mxu0
        %v1492 = vadd.f32 %v1392, %v1491
        %v1493 = vpop.f32.mrb[0].mxu0
        %1494 = vmatprep.mubr.f32.mxu0 0.0
        %1495 = vmatmul.mubr.f32.gmra.mrb[0].mxu0 %v1245
        %v1496 = vpop.f32.mrb[0].mxu0
        %v1497 = vadd.f32 %v1397, %v1496
        %v1498 = vpop.f32.mrb[0].mxu0
        %1499 = vdwg.mxu0
        %s1500 = scalar_lea.vmem [#allocation8], 896
        %v1501 = vld [vmem:[%s1500] sm:$0xff]
        %v1502 = vld [vmem:[%s1500 + $0x8] sm:$0xff]
        %v1503 = vld [vmem:[%s1500 + $0x10] sm:$0xff]
        %v1504 = vld [vmem:[%s1500 + $0x18] sm:$0xff]
        %v1505 = vld [vmem:[%s1500 + $0x20] sm:$0xff]
        %v1506 = vld [vmem:[%s1500 + $0x28] sm:$0xff]
        %v1507 = vld [vmem:[%s1500 + $0x30] sm:$0xff]
        %v1508 = vld [vmem:[%s1500 + $0x38] sm:$0xff]
        %v1509 = vld [vmem:[%s1500 + $0x40] sm:$0xff]
        %v1510 = vld [vmem:[%s1500 + $0x48] sm:$0xff]
        %v1511 = vld [vmem:[%s1500 + $0x50] sm:$0xff]
        %v1512 = vld [vmem:[%s1500 + $0x58] sm:$0xff]
        %v1513 = vld [vmem:[%s1500 + $0x60] sm:$0xff]
        %v1514 = vld [vmem:[%s1500 + $0x68] sm:$0xff]
        %v1515 = vld [vmem:[%s1500 + $0x70] sm:$0xff]
        %v1516 = vld [vmem:[%s1500 + $0x78] sm:$0xff]
        %1517 = vmatprep.subr.mxu0 0.0
        %1518 = vmatpush1.msra.mxu0 %v1501
        %1519 = vmatprep.subr.mxu0 0.0
        %1520 = vmatpush1.msra.mxu0 %v1502
        %1521 = vmatprep.subr.mxu0 0.0
        %1522 = vmatpush1.msra.mxu0 %v1503
        %1523 = vmatprep.subr.mxu0 0.0
        %1524 = vmatpush1.msra.mxu0 %v1504
        %1525 = vmatprep.subr.mxu0 0.0
        %1526 = vmatpush1.msra.mxu0 %v1505
        %1527 = vmatprep.subr.mxu0 0.0
        %1528 = vmatpush1.msra.mxu0 %v1506
        %1529 = vmatprep.subr.mxu0 0.0
        %1530 = vmatpush1.msra.mxu0 %v1507
        %1531 = vmatprep.subr.mxu0 0.0
        %1532 = vmatpush1.msra.mxu0 %v1508
        %1533 = vmatprep.subr.mxu0 0.0
        %1534 = vmatpush1.msra.mxu0 %v1509
        %1535 = vmatprep.subr.mxu0 0.0
        %1536 = vmatpush1.msra.mxu0 %v1510
        %1537 = vmatprep.subr.mxu0 0.0
        %1538 = vmatpush1.msra.mxu0 %v1511
        %1539 = vmatprep.subr.mxu0 0.0
        %1540 = vmatpush1.msra.mxu0 %v1512
        %1541 = vmatprep.subr.mxu0 0.0
        %1542 = vmatpush1.msra.mxu0 %v1513
        %1543 = vmatprep.subr.mxu0 0.0
        %1544 = vmatpush1.msra.mxu0 %v1514
        %1545 = vmatprep.subr.mxu0 0.0
        %1546 = vmatpush1.msra.mxu0 %v1515
        %1547 = vmatprep.subr.mxu0 0.0
        %1548 = vmatpush1.msra.mxu0 %v1516
        %1549 = vmatprep.subr.mxu0 0.0
        %1550 = vmatpush1.msra.mxu0 0.0
        %1551 = vmatprep.subr.mxu0 0.0
        %1552 = vmatpush1.msra.mxu0 0.0
        %1553 = vmatprep.subr.mxu0 0.0
        %1554 = vmatpush1.msra.mxu0 0.0
        %1555 = vmatprep.subr.mxu0 0.0
        %1556 = vmatpush1.msra.mxu0 0.0
        %1557 = vmatprep.subr.mxu0 0.0
        %1558 = vmatpush1.msra.mxu0 0.0
        %1559 = vmatprep.subr.mxu0 0.0
        %1560 = vmatpush1.msra.mxu0 0.0
        %1561 = vmatprep.subr.mxu0 0.0
        %1562 = vmatpush1.msra.mxu0 0.0
        %1563 = vmatprep.subr.mxu0 0.0
        %1564 = vmatpush1.msra.mxu0 0.0
        %1565 = vmatprep.subr.mxu0 0.0
        %1566 = vmatpush1.msra.mxu0 0.0
        %1567 = vmatprep.subr.mxu0 0.0
        %1568 = vmatpush1.msra.mxu0 0.0
        %1569 = vmatprep.subr.mxu0 0.0
        %1570 = vmatpush1.msra.mxu0 0.0
        %1571 = vmatprep.subr.mxu0 0.0
        %1572 = vmatpush1.msra.mxu0 0.0
        %1573 = vmatprep.subr.mxu0 0.0
        %1574 = vmatpush1.msra.mxu0 0.0
        %1575 = vmatprep.subr.mxu0 0.0
        %1576 = vmatpush1.msra.mxu0 0.0
        %1577 = vmatprep.subr.mxu0 0.0
        %1578 = vmatpush1.msra.mxu0 0.0
        %1579 = vmatprep.subr.mxu0 0.0
        %1580 = vmatpush1.msra.mxu0 0.0
        %1581 = vmatprep.mubr.f32.mxu0 0.0
        %1582 = vmatmul.mubr.f32.gmra.mrb[0].mxu0 %v1231
        %v1583 = vpop.f32.mrb[0].mxu0
        %v1584 = vadd.f32 0.0, %v1583
        %v1585 = vpop.f32.mrb[0].mxu0
        %1586 = vmatprep.mubr.f32.mxu0 0.0
        %1587 = vmatmul.mubr.f32.gmra.mrb[0].mxu0 %v1232
        %v1588 = vpop.f32.mrb[0].mxu0
        %v1589 = vadd.f32 0.0, %v1588
        %v1590 = vpop.f32.mrb[0].mxu0
        %1591 = vmatprep.mubr.f32.mxu0 0.0
        %1592 = vmatmul.mubr.f32.gmra.mrb[0].mxu0 %v1233
        %v1593 = vpop.f32.mrb[0].mxu0
        %v1594 = vadd.f32 0.0, %v1593
        %v1595 = vpop.f32.mrb[0].mxu0
        %1596 = vmatprep.mubr.f32.mxu0 0.0
        %1597 = vmatmul.mubr.f32.gmra.mrb[0].mxu0 %v1234
        %v1598 = vpop.f32.mrb[0].mxu0
        %v1599 = vadd.f32 0.0, %v1598
        %v1600 = vpop.f32.mrb[0].mxu0
        %1601 = vmatprep.mubr.f32.mxu0 0.0
        %1602 = vmatmul.mubr.f32.gmra.mrb[0].mxu0 %v1235
        %v1603 = vpop.f32.mrb[0].mxu0
        %v1604 = vadd.f32 0.0, %v1603
        %v1605 = vpop.f32.mrb[0].mxu0
        %1606 = vmatprep.mubr.f32.mxu0 0.0
        %1607 = vmatmul.mubr.f32.gmra.mrb[0].mxu0 %v1236
        %v1608 = vpop.f32.mrb[0].mxu0
        %v1609 = vadd.f32 0.0, %v1608
        %v1610 = vpop.f32.mrb[0].mxu0
        %1611 = vmatprep.mubr.f32.mxu0 0.0
        %1612 = vmatmul.mubr.f32.gmra.mrb[0].mxu0 %v1237
        %v1613 = vpop.f32.mrb[0].mxu0
        %v1614 = vadd.f32 0.0, %v1613
        %v1615 = vpop.f32.mrb[0].mxu0
        %1616 = vdwg.mxu0
        %v1617 = vadd.f32 %v1467, %v1584
        %v1618 = vadd.f32 %v1472, %v1589
        %v1619 = vadd.f32 %v1477, %v1594
        %v1620 = vadd.f32 %v1482, %v1599
        %v1621 = vadd.f32 %v1487, %v1604
        %v1622 = vadd.f32 %v1492, %v1609
        %v1623 = vadd.f32 %v1497, %v1614
        %v1624 = vrot.slane %v1231, 1
        %v1625 = vrot.slane %v1232, 1
        %v1626 = vrot.slane %v1233, 1
        %v1627 = vrot.slane %v1234, 1
        %v1628 = vrot.slane %v1235, 1
        %v1629 = vrot.slane %v1236, 1
        %v1630 = vrot.slane %v1237, 1
        %v1631 = vsel %vm925, %v1629, %v1630
        %v1632 = vsel %vm925, %v1628, %v1629
        %v1633 = vsel %vm925, %v1627, %v1628
        %v1634 = vsel %vm925, %v1626, %v1627
        %v1635 = vsel %vm925, %v1625, %v1626
        %v1636 = vsel %vm925, %v1624, %v1625
        %v1637 = vsel %vm925, %v1630, %v1624
        %s1638 = scalar_lea.vmem [#allocation8], 1024
        %v1639 = vld [vmem:[%s1638] sm:$0xff]
        %v1640 = vld [vmem:[%s1638 + $0x8] sm:$0xff]
        %v1641 = vld [vmem:[%s1638 + $0x10] sm:$0xff]
        %v1642 = vld [vmem:[%s1638 + $0x18] sm:$0xff]
        %v1643 = vld [vmem:[%s1638 + $0x20] sm:$0xff]
        %v1644 = vld [vmem:[%s1638 + $0x28] sm:$0xff]
        %v1645 = vld [vmem:[%s1638 + $0x30] sm:$0xff]
        %v1646 = vld [vmem:[%s1638 + $0x38] sm:$0xff]
        %v1647 = vld [vmem:[%s1638 + $0x40] sm:$0xff]
        %v1648 = vld [vmem:[%s1638 + $0x48] sm:$0xff]
        %v1649 = vld [vmem:[%s1638 + $0x50] sm:$0xff]
        %v1650 = vld [vmem:[%s1638 + $0x58] sm:$0xff]
        %v1651 = vld [vmem:[%s1638 + $0x60] sm:$0xff]
        %v1652 = vld [vmem:[%s1638 + $0x68] sm:$0xff]
        %v1653 = vld [vmem:[%s1638 + $0x70] sm:$0xff]
        %v1654 = vld [vmem:[%s1638 + $0x78] sm:$0xff]
        %1655 = vmatprep.subr.mxu0 0.0
        %1656 = vmatpush1.msra.mxu0 %v1639
        %1657 = vmatprep.subr.mxu0 0.0
        %1658 = vmatpush1.msra.mxu0 %v1640
        %1659 = vmatprep.subr.mxu0 0.0
        %1660 = vmatpush1.msra.mxu0 %v1641
        %1661 = vmatprep.subr.mxu0 0.0
        %1662 = vmatpush1.msra.mxu0 %v1642
        %1663 = vmatprep.subr.mxu0 0.0
        %1664 = vmatpush1.msra.mxu0 %v1643
        %1665 = vmatprep.subr.mxu0 0.0
        %1666 = vmatpush1.msra.mxu0 %v1644
        %1667 = vmatprep.subr.mxu0 0.0
        %1668 = vmatpush1.msra.mxu0 %v1645
        %1669 = vmatprep.subr.mxu0 0.0
        %1670 = vmatpush1.msra.mxu0 %v1646
        %1671 = vmatprep.subr.mxu0 0.0
        %1672 = vmatpush1.msra.mxu0 %v1647
        %1673 = vmatprep.subr.mxu0 0.0
        %1674 = vmatpush1.msra.mxu0 %v1648
        %1675 = vmatprep.subr.mxu0 0.0
        %1676 = vmatpush1.msra.mxu0 %v1649
        %1677 = vmatprep.subr.mxu0 0.0
        %1678 = vmatpush1.msra.mxu0 %v1650
        %1679 = vmatprep.subr.mxu0 0.0
        %1680 = vmatpush1.msra.mxu0 %v1651
        %1681 = vmatprep.subr.mxu0 0.0
        %1682 = vmatpush1.msra.mxu0 %v1652
        %1683 = vmatprep.subr.mxu0 0.0
        %1684 = vmatpush1.msra.mxu0 %v1653
        %1685 = vmatprep.subr.mxu0 0.0
        %1686 = vmatpush1.msra.mxu0 %v1654
        %1687 = vmatprep.subr.mxu0 0.0
        %1688 = vmatpush1.msra.mxu0 0.0
        %1689 = vmatprep.subr.mxu0 0.0
        %1690 = vmatpush1.msra.mxu0 0.0
        %1691 = vmatprep.subr.mxu0 0.0
        %1692 = vmatpush1.msra.mxu0 0.0
        %1693 = vmatprep.subr.mxu0 0.0
        %1694 = vmatpush1.msra.mxu0 0.0
        %1695 = vmatprep.subr.mxu0 0.0
        %1696 = vmatpush1.msra.mxu0 0.0
        %1697 = vmatprep.subr.mxu0 0.0
        %1698 = vmatpush1.msra.mxu0 0.0
        %1699 = vmatprep.subr.mxu0 0.0
        %1700 = vmatpush1.msra.mxu0 0.0
        %1701 = vmatprep.subr.mxu0 0.0
        %1702 = vmatpush1.msra.mxu0 0.0
        %1703 = vmatprep.subr.mxu0 0.0
        %1704 = vmatpush1.msra.mxu0 0.0
        %1705 = vmatprep.subr.mxu0 0.0
        %1706 = vmatpush1.msra.mxu0 0.0
        %1707 = vmatprep.subr.mxu0 0.0
        %1708 = vmatpush1.msra.mxu0 0.0
        %1709 = vmatprep.subr.mxu0 0.0
        %1710 = vmatpush1.msra.mxu0 0.0
        %1711 = vmatprep.subr.mxu0 0.0
        %1712 = vmatpush1.msra.mxu0 0.0
        %1713 = vmatprep.subr.mxu0 0.0
        %1714 = vmatpush1.msra.mxu0 0.0
        %1715 = vmatprep.subr.mxu0 0.0
        %1716 = vmatpush1.msra.mxu0 0.0
        %1717 = vmatprep.subr.mxu0 0.0
        %1718 = vmatpush1.msra.mxu0 0.0
        %1719 = vmatprep.mubr.f32.mxu0 0.0
        %1720 = vmatmul.mubr.f32.gmra.mrb[0].mxu0 %v1636
        %v1721 = vpop.f32.mrb[0].mxu0
        %v1722 = vadd.f32 0.0, %v1721
        %v1723 = vpop.f32.mrb[0].mxu0
        %1724 = vmatprep.mubr.f32.mxu0 0.0
        %1725 = vmatmul.mubr.f32.gmra.mrb[0].mxu0 %v1635
        %v1726 = vpop.f32.mrb[0].mxu0
        %v1727 = vadd.f32 0.0, %v1726
        %v1728 = vpop.f32.mrb[0].mxu0
        %1729 = vmatprep.mubr.f32.mxu0 0.0
        %1730 = vmatmul.mubr.f32.gmra.mrb[0].mxu0 %v1634
        %v1731 = vpop.f32.mrb[0].mxu0
        %v1732 = vadd.f32 0.0, %v1731
        %v1733 = vpop.f32.mrb[0].mxu0
        %1734 = vmatprep.mubr.f32.mxu0 0.0
        %1735 = vmatmul.mubr.f32.gmra.mrb[0].mxu0 %v1633
        %v1736 = vpop.f32.mrb[0].mxu0
        %v1737 = vadd.f32 0.0, %v1736
        %v1738 = vpop.f32.mrb[0].mxu0
        %1739 = vmatprep.mubr.f32.mxu0 0.0
        %1740 = vmatmul.mubr.f32.gmra.mrb[0].mxu0 %v1632
        %v1741 = vpop.f32.mrb[0].mxu0
        %v1742 = vadd.f32 0.0, %v1741
        %v1743 = vpop.f32.mrb[0].mxu0
        %1744 = vmatprep.mubr.f32.mxu0 0.0
        %1745 = vmatmul.mubr.f32.gmra.mrb[0].mxu0 %v1631
        %v1746 = vpop.f32.mrb[0].mxu0
        %v1747 = vadd.f32 0.0, %v1746
        %v1748 = vpop.f32.mrb[0].mxu0
        %1749 = vmatprep.mubr.f32.mxu0 0.0
        %1750 = vmatmul.mubr.f32.gmra.mrb[0].mxu0 %v1637
        %v1751 = vpop.f32.mrb[0].mxu0
        %v1752 = vadd.f32 0.0, %v1751
        %v1753 = vpop.f32.mrb[0].mxu0
        %1754 = vdwg.mxu0
        %v1755 = vadd.f32 %v1617, %v1722
        %v1756 = vadd.f32 %v1618, %v1727
        %v1757 = vadd.f32 %v1619, %v1732
        %v1758 = vadd.f32 %v1620, %v1737
        %v1759 = vadd.f32 %v1621, %v1742
        %v1760 = vadd.f32 %v1622, %v1747
        %v1761 = vadd.f32 %v1623, %v1752
        %v1762 = vrot.slane %v1231, 2
        %v1763 = vrot.slane %v1232, 2
        %v1764 = vrot.slane %v1233, 2
        %v1765 = vrot.slane %v1234, 2
        %v1766 = vrot.slane %v1235, 2
        %v1767 = vrot.slane %v1236, 2
        %v1768 = vrot.slane %v1237, 2
        %v1769 = vsel %vm1064, %v1767, %v1768
        %v1770 = vsel %vm1064, %v1766, %v1767
        %v1771 = vsel %vm1064, %v1765, %v1766
        %v1772 = vsel %vm1064, %v1764, %v1765
        %v1773 = vsel %vm1064, %v1763, %v1764
        %v1774 = vsel %vm1064, %v1762, %v1763
        %v1775 = vsel %vm1064, %v1768, %v1762
        %s1776 = scalar_lea.vmem [#allocation8], 1152
        %v1777 = vld [vmem:[%s1776] sm:$0xff]
        %v1778 = vld [vmem:[%s1776 + $0x8] sm:$0xff]
        %v1779 = vld [vmem:[%s1776 + $0x10] sm:$0xff]
        %v1780 = vld [vmem:[%s1776 + $0x18] sm:$0xff]
        %v1781 = vld [vmem:[%s1776 + $0x20] sm:$0xff]
        %v1782 = vld [vmem:[%s1776 + $0x28] sm:$0xff]
        %v1783 = vld [vmem:[%s1776 + $0x30] sm:$0xff]
        %v1784 = vld [vmem:[%s1776 + $0x38] sm:$0xff]
        %v1785 = vld [vmem:[%s1776 + $0x40] sm:$0xff]
        %v1786 = vld [vmem:[%s1776 + $0x48] sm:$0xff]
        %v1787 = vld [vmem:[%s1776 + $0x50] sm:$0xff]
        %v1788 = vld [vmem:[%s1776 + $0x58] sm:$0xff]
        %v1789 = vld [vmem:[%s1776 + $0x60] sm:$0xff]
        %v1790 = vld [vmem:[%s1776 + $0x68] sm:$0xff]
        %v1791 = vld [vmem:[%s1776 + $0x70] sm:$0xff]
        %v1792 = vld [vmem:[%s1776 + $0x78] sm:$0xff]
        %1793 = vmatprep.subr.mxu0 0.0
        %1794 = vmatpush1.msra.mxu0 %v1777
        %1795 = vmatprep.subr.mxu0 0.0
        %1796 = vmatpush1.msra.mxu0 %v1778
        %1797 = vmatprep.subr.mxu0 0.0
        %1798 = vmatpush1.msra.mxu0 %v1779
        %1799 = vmatprep.subr.mxu0 0.0
        %1800 = vmatpush1.msra.mxu0 %v1780
        %1801 = vmatprep.subr.mxu0 0.0
        %1802 = vmatpush1.msra.mxu0 %v1781
        %1803 = vmatprep.subr.mxu0 0.0
        %1804 = vmatpush1.msra.mxu0 %v1782
        %1805 = vmatprep.subr.mxu0 0.0
        %1806 = vmatpush1.msra.mxu0 %v1783
        %1807 = vmatprep.subr.mxu0 0.0
        %1808 = vmatpush1.msra.mxu0 %v1784
        %1809 = vmatprep.subr.mxu0 0.0
        %1810 = vmatpush1.msra.mxu0 %v1785
        %1811 = vmatprep.subr.mxu0 0.0
        %1812 = vmatpush1.msra.mxu0 %v1786
        %1813 = vmatprep.subr.mxu0 0.0
        %1814 = vmatpush1.msra.mxu0 %v1787
        %1815 = vmatprep.subr.mxu0 0.0
        %1816 = vmatpush1.msra.mxu0 %v1788
        %1817 = vmatprep.subr.mxu0 0.0
        %1818 = vmatpush1.msra.mxu0 %v1789
        %1819 = vmatprep.subr.mxu0 0.0
        %1820 = vmatpush1.msra.mxu0 %v1790
        %1821 = vmatprep.subr.mxu0 0.0
        %1822 = vmatpush1.msra.mxu0 %v1791
        %1823 = vmatprep.subr.mxu0 0.0
        %1824 = vmatpush1.msra.mxu0 %v1792
        %1825 = vmatprep.subr.mxu0 0.0
        %1826 = vmatpush1.msra.mxu0 0.0
        %1827 = vmatprep.subr.mxu0 0.0
        %1828 = vmatpush1.msra.mxu0 0.0
        %1829 = vmatprep.subr.mxu0 0.0
        %1830 = vmatpush1.msra.mxu0 0.0
        %1831 = vmatprep.subr.mxu0 0.0
        %1832 = vmatpush1.msra.mxu0 0.0
        %1833 = vmatprep.subr.mxu0 0.0
        %1834 = vmatpush1.msra.mxu0 0.0
        %1835 = vmatprep.subr.mxu0 0.0
        %1836 = vmatpush1.msra.mxu0 0.0
        %1837 = vmatprep.subr.mxu0 0.0
        %1838 = vmatpush1.msra.mxu0 0.0
        %1839 = vmatprep.subr.mxu0 0.0
        %1840 = vmatpush1.msra.mxu0 0.0
        %1841 = vmatprep.subr.mxu0 0.0
        %1842 = vmatpush1.msra.mxu0 0.0
        %1843 = vmatprep.subr.mxu0 0.0
        %1844 = vmatpush1.msra.mxu0 0.0
        %1845 = vmatprep.subr.mxu0 0.0
        %1846 = vmatpush1.msra.mxu0 0.0
        %1847 = vmatprep.subr.mxu0 0.0
        %1848 = vmatpush1.msra.mxu0 0.0
        %1849 = vmatprep.subr.mxu0 0.0
        %1850 = vmatpush1.msra.mxu0 0.0
        %1851 = vmatprep.subr.mxu0 0.0
        %1852 = vmatpush1.msra.mxu0 0.0
        %1853 = vmatprep.subr.mxu0 0.0
        %1854 = vmatpush1.msra.mxu0 0.0
        %1855 = vmatprep.subr.mxu0 0.0
        %1856 = vmatpush1.msra.mxu0 0.0
        %1857 = vmatprep.mubr.f32.mxu0 0.0
        %1858 = vmatmul.mubr.f32.gmra.mrb[0].mxu0 %v1774
        %v1859 = vpop.f32.mrb[0].mxu0
        %v1860 = vadd.f32 0.0, %v1859
        %v1861 = vpop.f32.mrb[0].mxu0
        %1862 = vmatprep.mubr.f32.mxu0 0.0
        %1863 = vmatmul.mubr.f32.gmra.mrb[0].mxu0 %v1773
        %v1864 = vpop.f32.mrb[0].mxu0
        %v1865 = vadd.f32 0.0, %v1864
        %v1866 = vpop.f32.mrb[0].mxu0
        %1867 = vmatprep.mubr.f32.mxu0 0.0
        %1868 = vmatmul.mubr.f32.gmra.mrb[0].mxu0 %v1772
        %v1869 = vpop.f32.mrb[0].mxu0
        %v1870 = vadd.f32 0.0, %v1869
        %v1871 = vpop.f32.mrb[0].mxu0
        %1872 = vmatprep.mubr.f32.mxu0 0.0
        %1873 = vmatmul.mubr.f32.gmra.mrb[0].mxu0 %v1771
        %v1874 = vpop.f32.mrb[0].mxu0
        %v1875 = vadd.f32 0.0, %v1874
        %v1876 = vpop.f32.mrb[0].mxu0
        %1877 = vmatprep.mubr.f32.mxu0 0.0
        %1878 = vmatmul.mubr.f32.gmra.mrb[0].mxu0 %v1770
        %v1879 = vpop.f32.mrb[0].mxu0
        %v1880 = vadd.f32 0.0, %v1879
        %v1881 = vpop.f32.mrb[0].mxu0
        %1882 = vmatprep.mubr.f32.mxu0 0.0
        %1883 = vmatmul.mubr.f32.gmra.mrb[0].mxu0 %v1769
        %v1884 = vpop.f32.mrb[0].mxu0
        %v1885 = vadd.f32 0.0, %v1884
        %v1886 = vpop.f32.mrb[0].mxu0
        %1887 = vmatprep.mubr.f32.mxu0 0.0
        %1888 = vmatmul.mubr.f32.gmra.mrb[0].mxu0 %v1775
        %v1889 = vpop.f32.mrb[0].mxu0
        %v1890 = vadd.f32 0.0, %v1889
        %v1891 = vpop.f32.mrb[0].mxu0
        %1892 = vdwg.mxu0
        %v1893 = vadd.f32 %v1755, %v1860
        %v1894 = vadd.f32 %v1756, %v1865
        %v1895 = vadd.f32 %v1757, %v1870
        %v1896 = vadd.f32 %v1758, %v1875
        %v1897 = vadd.f32 %v1759, %v1880
        %v1898 = vadd.f32 %v1760, %v1885
        %v1899 = vadd.f32 %v1761, %v1890
        %s1900 = scalar_lea.vmem [#allocation9], 1
        %v1901 = vld [vmem:[%s1900] sm:$0x1]
        %v1903 = vlaneseq
        %v1904 = vshrl.u32 %v1903, 7
        %v1905 = vsub.s32 0, %v1904
        %v1906 = vrot.slane %v1901, %v1905
        %v1908 = vadd.f32 %v1893, %v1906
        %v1909 = vadd.f32 %v1894, %v1906
        %v1910 = vadd.f32 %v1895, %v1906
        %v1911 = vadd.f32 %v1896, %v1906
        %v1912 = vadd.f32 %v1897, %v1906
        %v1913 = vadd.f32 %v1898, %v1906
        %v1914 = vadd.f32 %v1899, %v1906
        %v1915 = vsel %vm350, %v1908, 0.0
        %v1916 = vsel %vm351, %v1909, 0.0
        %v1917 = vsel %vm352, %v1910, 0.0
        %v1918 = vsel %vm353, %v1911, 0.0
        %v1919 = vsel %vm354, %v1912, 0.0
        %v1920 = vsel %vm355, %v1913, 0.0
        %v1921 = vsel %vm356, %v1914, 0.0
        %v1922 = vtanh.pop %v1915
        %v1923 = vtanh.pop %v1916
        %v1924 = vtanh.pop %v1917
        %v1925 = vtanh.pop %v1918
        %v1926 = vtanh.pop %v1919
        %v1927 = vtanh.pop %v1920
        %v1928 = vtanh.pop %v1921
        %1929 = vst [vmem:[#allocation2] sm:$0xff] %v1922
        %1930 = vst [vmem:[#allocation2 + $0x8] sm:$0xff] %v1923
        %1931 = vst [vmem:[#allocation2 + $0x10] sm:$0xff] %v1924
        %1932 = vst [vmem:[#allocation2 + $0x18] sm:$0xff] %v1925
        %1933 = vst [vmem:[#allocation2 + $0x20] sm:$0xff] %v1926
        %1934 = vst [vmem:[#allocation2 + $0x28] sm:$0xff] %v1927
        %1935 = vst [vmem:[#allocation2 + $0x30] sm:$0xff] %v1928
        %v1936 = vld [vmem:[#allocation2] sm:$0xff]
        %v1937 = vld [vmem:[#allocation2 + $0x8] sm:$0xff]
        %v1938 = vld [vmem:[#allocation2 + $0x10] sm:$0xff]
        %v1939 = vld [vmem:[#allocation2 + $0x18] sm:$0xff]
        %v1940 = vld [vmem:[#allocation2 + $0x20] sm:$0xff]
        %v1941 = vld [vmem:[#allocation2 + $0x28] sm:$0xff]
        %v1942 = vld [vmem:[#allocation2 + $0x30] sm:$0xff]
        %v1943 = vrot.slane %v1936, 6
        %v1944 = vrot.slane %v1937, 6
        %v1945 = vrot.slane %v1938, 6
        %v1946 = vrot.slane %v1939, 6
        %v1947 = vrot.slane %v1940, 6
        %v1948 = vrot.slane %v1941, 6
        %v1949 = vrot.slane %v1942, 6
        %v1950 = vsel %vm538, %v1948, %v1949
        %v1951 = vsel %vm538, %v1947, %v1948
        %v1952 = vsel %vm538, %v1946, %v1947
        %v1953 = vsel %vm538, %v1945, %v1946
        %v1954 = vsel %vm538, %v1944, %v1945
        %v1955 = vsel %vm538, %v1943, %v1944
        %v1956 = vsel %vm538, %v1949, %v1943
        %s1957 = scalar_lea.vmem [#allocation8], 1280
        %v1958 = vld [vmem:[%s1957] sm:$0xff]
        %v1959 = vld [vmem:[%s1957 + $0x8] sm:$0xff]
        %v1960 = vld [vmem:[%s1957 + $0x10] sm:$0xff]
        %v1961 = vld [vmem:[%s1957 + $0x18] sm:$0xff]
        %v1962 = vld [vmem:[%s1957 + $0x20] sm:$0xff]
        %v1963 = vld [vmem:[%s1957 + $0x28] sm:$0xff]
        %v1964 = vld [vmem:[%s1957 + $0x30] sm:$0xff]
        %v1965 = vld [vmem:[%s1957 + $0x38] sm:$0xff]
        %v1966 = vld [vmem:[%s1957 + $0x40] sm:$0xff]
        %v1967 = vld [vmem:[%s1957 + $0x48] sm:$0xff]
        %v1968 = vld [vmem:[%s1957 + $0x50] sm:$0xff]
        %v1969 = vld [vmem:[%s1957 + $0x58] sm:$0xff]
        %v1970 = vld [vmem:[%s1957 + $0x60] sm:$0xff]
        %v1971 = vld [vmem:[%s1957 + $0x68] sm:$0xff]
        %v1972 = vld [vmem:[%s1957 + $0x70] sm:$0xff]
        %v1973 = vld [vmem:[%s1957 + $0x78] sm:$0xff]
        %v1974 = vrot.slane %v1936, 7
        %v1975 = vrot.slane %v1937, 7
        %v1976 = vrot.slane %v1938, 7
        %v1977 = vrot.slane %v1939, 7
        %v1978 = vrot.slane %v1940, 7
        %v1979 = vrot.slane %v1941, 7
        %v1980 = vrot.slane %v1942, 7
        %v1981 = vsel %vm569, %v1979, %v1980
        %v1982 = vsel %vm569, %v1978, %v1979
        %v1983 = vsel %vm569, %v1977, %v1978
        %v1984 = vsel %vm569, %v1976, %v1977
        %v1985 = vsel %vm569, %v1975, %v1976
        %v1986 = vsel %vm569, %v1974, %v1975
        %v1987 = vsel %vm569, %v1980, %v1974
        %s1988 = scalar_lea.vmem [#allocation8], 1408
        %v1989 = vld [vmem:[%s1988] sm:$0xff]
        %v1990 = vld [vmem:[%s1988 + $0x8] sm:$0xff]
        %v1991 = vld [vmem:[%s1988 + $0x10] sm:$0xff]
        %v1992 = vld [vmem:[%s1988 + $0x18] sm:$0xff]
        %v1993 = vld [vmem:[%s1988 + $0x20] sm:$0xff]
        %v1994 = vld [vmem:[%s1988 + $0x28] sm:$0xff]
        %v1995 = vld [vmem:[%s1988 + $0x30] sm:$0xff]
        %v1996 = vld [vmem:[%s1988 + $0x38] sm:$0xff]
        %v1997 = vld [vmem:[%s1988 + $0x40] sm:$0xff]
        %v1998 = vld [vmem:[%s1988 + $0x48] sm:$0xff]
        %v1999 = vld [vmem:[%s1988 + $0x50] sm:$0xff]
        %v2000 = vld [vmem:[%s1988 + $0x58] sm:$0xff]
        %v2001 = vld [vmem:[%s1988 + $0x60] sm:$0xff]
        %v2002 = vld [vmem:[%s1988 + $0x68] sm:$0xff]
        %v2003 = vld [vmem:[%s1988 + $0x70] sm:$0xff]
        %v2004 = vld [vmem:[%s1988 + $0x78] sm:$0xff]
        %2005 = vmatprep.subr.mxu0 0.0
        %2006 = vmatpush1.msra.mxu0 %v1989
        %2007 = vmatprep.subr.mxu0 0.0
        %2008 = vmatpush1.msra.mxu0 %v1990
        %2009 = vmatprep.subr.mxu0 0.0
        %2010 = vmatpush1.msra.mxu0 %v1991
        %2011 = vmatprep.subr.mxu0 0.0
        %2012 = vmatpush1.msra.mxu0 %v1992
        %2013 = vmatprep.subr.mxu0 0.0
        %2014 = vmatpush1.msra.mxu0 %v1993
        %2015 = vmatprep.subr.mxu0 0.0
        %2016 = vmatpush1.msra.mxu0 %v1994
        %2017 = vmatprep.subr.mxu0 0.0
        %2018 = vmatpush1.msra.mxu0 %v1995
        %2019 = vmatprep.subr.mxu0 0.0
        %2020 = vmatpush1.msra.mxu0 %v1996
        %2021 = vmatprep.subr.mxu0 0.0
        %2022 = vmatpush1.msra.mxu0 %v1997
        %2023 = vmatprep.subr.mxu0 0.0
        %2024 = vmatpush1.msra.mxu0 %v1998
        %2025 = vmatprep.subr.mxu0 0.0
        %2026 = vmatpush1.msra.mxu0 %v1999
        %2027 = vmatprep.subr.mxu0 0.0
        %2028 = vmatpush1.msra.mxu0 %v2000
        %2029 = vmatprep.subr.mxu0 0.0
        %2030 = vmatpush1.msra.mxu0 %v2001
        %2031 = vmatprep.subr.mxu0 0.0
        %2032 = vmatpush1.msra.mxu0 %v2002
        %2033 = vmatprep.subr.mxu0 0.0
        %2034 = vmatpush1.msra.mxu0 %v2003
        %2035 = vmatprep.subr.mxu0 0.0
        %2036 = vmatpush1.msra.mxu0 %v2004
        %2037 = vmatprep.subr.mxu0 0.0
        %2038 = vmatpush1.msra.mxu0 0.0
        %2039 = vmatprep.subr.mxu0 0.0
        %2040 = vmatpush1.msra.mxu0 0.0
        %2041 = vmatprep.subr.mxu0 0.0
        %2042 = vmatpush1.msra.mxu0 0.0
        %2043 = vmatprep.subr.mxu0 0.0
        %2044 = vmatpush1.msra.mxu0 0.0
        %2045 = vmatprep.subr.mxu0 0.0
        %2046 = vmatpush1.msra.mxu0 0.0
        %2047 = vmatprep.subr.mxu0 0.0
        %2048 = vmatpush1.msra.mxu0 0.0
        %2049 = vmatprep.subr.mxu0 0.0
        %2050 = vmatpush1.msra.mxu0 0.0
        %2051 = vmatprep.subr.mxu0 0.0
        %2052 = vmatpush1.msra.mxu0 0.0
        %2053 = vmatprep.subr.mxu0 0.0
        %2054 = vmatpush1.msra.mxu0 0.0
        %2055 = vmatprep.subr.mxu0 0.0
        %2056 = vmatpush1.msra.mxu0 0.0
        %2057 = vmatprep.subr.mxu0 0.0
        %2058 = vmatpush1.msra.mxu0 0.0
        %2059 = vmatprep.subr.mxu0 0.0
        %2060 = vmatpush1.msra.mxu0 0.0
        %2061 = vmatprep.subr.mxu0 0.0
        %2062 = vmatpush1.msra.mxu0 0.0
        %2063 = vmatprep.subr.mxu0 0.0
        %2064 = vmatpush1.msra.mxu0 0.0
        %2065 = vmatprep.subr.mxu0 0.0
        %2066 = vmatpush1.msra.mxu0 0.0
        %2067 = vmatprep.subr.mxu0 0.0
        %2068 = vmatpush1.msra.mxu0 0.0
        %2069 = vmatprep.mubr.f32.mxu0 0.0
        %2070 = vmatmul.mubr.f32.gmra.mrb[0].mxu0 %v1987
        %v2071 = vpop.f32.mrb[0].mxu0
        %v2072 = vadd.f32 0.0, %v2071
        %v2073 = vpop.f32.mrb[0].mxu0
        %2074 = vmatprep.mubr.f32.mxu0 0.0
        %2075 = vmatmul.mubr.f32.gmra.mrb[0].mxu0 %v1986
        %v2076 = vpop.f32.mrb[0].mxu0
        %v2077 = vadd.f32 0.0, %v2076
        %v2078 = vpop.f32.mrb[0].mxu0
        %2079 = vmatprep.mubr.f32.mxu0 0.0
        %2080 = vmatmul.mubr.f32.gmra.mrb[0].mxu0 %v1985
        %v2081 = vpop.f32.mrb[0].mxu0
        %v2082 = vadd.f32 0.0, %v2081
        %v2083 = vpop.f32.mrb[0].mxu0
        %2084 = vmatprep.mubr.f32.mxu0 0.0
        %2085 = vmatmul.mubr.f32.gmra.mrb[0].mxu0 %v1984
        %v2086 = vpop.f32.mrb[0].mxu0
        %v2087 = vadd.f32 0.0, %v2086
        %v2088 = vpop.f32.mrb[0].mxu0
        %2089 = vmatprep.mubr.f32.mxu0 0.0
        %2090 = vmatmul.mubr.f32.gmra.mrb[0].mxu0 %v1983
        %v2091 = vpop.f32.mrb[0].mxu0
        %v2092 = vadd.f32 0.0, %v2091
        %v2093 = vpop.f32.mrb[0].mxu0
        %2094 = vmatprep.mubr.f32.mxu0 0.0
        %2095 = vmatmul.mubr.f32.gmra.mrb[0].mxu0 %v1982
        %v2096 = vpop.f32.mrb[0].mxu0
        %v2097 = vadd.f32 0.0, %v2096
        %v2098 = vpop.f32.mrb[0].mxu0
        %2099 = vmatprep.mubr.f32.mxu0 0.0
        %2100 = vmatmul.mubr.f32.gmra.mrb[0].mxu0 %v1981
        %v2101 = vpop.f32.mrb[0].mxu0
        %v2102 = vadd.f32 0.0, %v2101
        %v2103 = vpop.f32.mrb[0].mxu0
        %2104 = vdwg.mxu0
        %2105 = vmatprep.subr.mxu0 0.0
        %2106 = vmatpush1.msra.mxu0 %v1958
        %2107 = vmatprep.subr.mxu0 0.0
        %2108 = vmatpush1.msra.mxu0 %v1959
        %2109 = vmatprep.subr.mxu0 0.0
        %2110 = vmatpush1.msra.mxu0 %v1960
        %2111 = vmatprep.subr.mxu0 0.0
        %2112 = vmatpush1.msra.mxu0 %v1961
        %2113 = vmatprep.subr.mxu0 0.0
        %2114 = vmatpush1.msra.mxu0 %v1962
        %2115 = vmatprep.subr.mxu0 0.0
        %2116 = vmatpush1.msra.mxu0 %v1963
        %2117 = vmatprep.subr.mxu0 0.0
        %2118 = vmatpush1.msra.mxu0 %v1964
        %2119 = vmatprep.subr.mxu0 0.0
        %2120 = vmatpush1.msra.mxu0 %v1965
        %2121 = vmatprep.subr.mxu0 0.0
        %2122 = vmatpush1.msra.mxu0 %v1966
        %2123 = vmatprep.subr.mxu0 0.0
        %2124 = vmatpush1.msra.mxu0 %v1967
        %2125 = vmatprep.subr.mxu0 0.0
        %2126 = vmatpush1.msra.mxu0 %v1968
        %2127 = vmatprep.subr.mxu0 0.0
        %2128 = vmatpush1.msra.mxu0 %v1969
        %2129 = vmatprep.subr.mxu0 0.0
        %2130 = vmatpush1.msra.mxu0 %v1970
        %2131 = vmatprep.subr.mxu0 0.0
        %2132 = vmatpush1.msra.mxu0 %v1971
        %2133 = vmatprep.subr.mxu0 0.0
        %2134 = vmatpush1.msra.mxu0 %v1972
        %2135 = vmatprep.subr.mxu0 0.0
        %2136 = vmatpush1.msra.mxu0 %v1973
        %2137 = vmatprep.subr.mxu0 0.0
        %2138 = vmatpush1.msra.mxu0 0.0
        %2139 = vmatprep.subr.mxu0 0.0
        %2140 = vmatpush1.msra.mxu0 0.0
        %2141 = vmatprep.subr.mxu0 0.0
        %2142 = vmatpush1.msra.mxu0 0.0
        %2143 = vmatprep.subr.mxu0 0.0
        %2144 = vmatpush1.msra.mxu0 0.0
        %2145 = vmatprep.subr.mxu0 0.0
        %2146 = vmatpush1.msra.mxu0 0.0
        %2147 = vmatprep.subr.mxu0 0.0
        %2148 = vmatpush1.msra.mxu0 0.0
        %2149 = vmatprep.subr.mxu0 0.0
        %2150 = vmatpush1.msra.mxu0 0.0
        %2151 = vmatprep.subr.mxu0 0.0
        %2152 = vmatpush1.msra.mxu0 0.0
        %2153 = vmatprep.subr.mxu0 0.0
        %2154 = vmatpush1.msra.mxu0 0.0
        %2155 = vmatprep.subr.mxu0 0.0
        %2156 = vmatpush1.msra.mxu0 0.0
        %2157 = vmatprep.subr.mxu0 0.0
        %2158 = vmatpush1.msra.mxu0 0.0
        %2159 = vmatprep.subr.mxu0 0.0
        %2160 = vmatpush1.msra.mxu0 0.0
        %2161 = vmatprep.subr.mxu0 0.0
        %2162 = vmatpush1.msra.mxu0 0.0
        %2163 = vmatprep.subr.mxu0 0.0
        %2164 = vmatpush1.msra.mxu0 0.0
        %2165 = vmatprep.subr.mxu0 0.0
        %2166 = vmatpush1.msra.mxu0 0.0
        %2167 = vmatprep.subr.mxu0 0.0
        %2168 = vmatpush1.msra.mxu0 0.0
        %2169 = vmatprep.mubr.f32.mxu0 0.0
        %2170 = vmatmul.mubr.f32.gmra.mrb[0].mxu0 %v1956
        %v2171 = vpop.f32.mrb[0].mxu0
        %v2172 = vadd.f32 %v2072, %v2171
        %v2173 = vpop.f32.mrb[0].mxu0
        %2174 = vmatprep.mubr.f32.mxu0 0.0
        %2175 = vmatmul.mubr.f32.gmra.mrb[0].mxu0 %v1955
        %v2176 = vpop.f32.mrb[0].mxu0
        %v2177 = vadd.f32 %v2077, %v2176
        %v2178 = vpop.f32.mrb[0].mxu0
        %2179 = vmatprep.mubr.f32.mxu0 0.0
        %2180 = vmatmul.mubr.f32.gmra.mrb[0].mxu0 %v1954
        %v2181 = vpop.f32.mrb[0].mxu0
        %v2182 = vadd.f32 %v2082, %v2181
        %v2183 = vpop.f32.mrb[0].mxu0
        %2184 = vmatprep.mubr.f32.mxu0 0.0
        %2185 = vmatmul.mubr.f32.gmra.mrb[0].mxu0 %v1953
        %v2186 = vpop.f32.mrb[0].mxu0
        %v2187 = vadd.f32 %v2087, %v2186
        %v2188 = vpop.f32.mrb[0].mxu0
        %2189 = vmatprep.mubr.f32.mxu0 0.0
        %2190 = vmatmul.mubr.f32.gmra.mrb[0].mxu0 %v1952
        %v2191 = vpop.f32.mrb[0].mxu0
        %v2192 = vadd.f32 %v2092, %v2191
        %v2193 = vpop.f32.mrb[0].mxu0
        %2194 = vmatprep.mubr.f32.mxu0 0.0
        %2195 = vmatmul.mubr.f32.gmra.mrb[0].mxu0 %v1951
        %v2196 = vpop.f32.mrb[0].mxu0
        %v2197 = vadd.f32 %v2097, %v2196
        %v2198 = vpop.f32.mrb[0].mxu0
        %2199 = vmatprep.mubr.f32.mxu0 0.0
        %2200 = vmatmul.mubr.f32.gmra.mrb[0].mxu0 %v1950
        %v2201 = vpop.f32.mrb[0].mxu0
        %v2202 = vadd.f32 %v2102, %v2201
        %v2203 = vpop.f32.mrb[0].mxu0
        %2204 = vdwg.mxu0
        %s2205 = scalar_lea.vmem [#allocation8], 1536
        %v2206 = vld [vmem:[%s2205] sm:$0xff]
        %v2207 = vld [vmem:[%s2205 + $0x8] sm:$0xff]
        %v2208 = vld [vmem:[%s2205 + $0x10] sm:$0xff]
        %v2209 = vld [vmem:[%s2205 + $0x18] sm:$0xff]
        %v2210 = vld [vmem:[%s2205 + $0x20] sm:$0xff]
        %v2211 = vld [vmem:[%s2205 + $0x28] sm:$0xff]
        %v2212 = vld [vmem:[%s2205 + $0x30] sm:$0xff]
        %v2213 = vld [vmem:[%s2205 + $0x38] sm:$0xff]
        %v2214 = vld [vmem:[%s2205 + $0x40] sm:$0xff]
        %v2215 = vld [vmem:[%s2205 + $0x48] sm:$0xff]
        %v2216 = vld [vmem:[%s2205 + $0x50] sm:$0xff]
        %v2217 = vld [vmem:[%s2205 + $0x58] sm:$0xff]
        %v2218 = vld [vmem:[%s2205 + $0x60] sm:$0xff]
        %v2219 = vld [vmem:[%s2205 + $0x68] sm:$0xff]
        %v2220 = vld [vmem:[%s2205 + $0x70] sm:$0xff]
        %v2221 = vld [vmem:[%s2205 + $0x78] sm:$0xff]
        %2222 = vmatprep.subr.mxu0 0.0
        %2223 = vmatpush1.msra.mxu0 %v2206
        %2224 = vmatprep.subr.mxu0 0.0
        %2225 = vmatpush1.msra.mxu0 %v2207
        %2226 = vmatprep.subr.mxu0 0.0
        %2227 = vmatpush1.msra.mxu0 %v2208
        %2228 = vmatprep.subr.mxu0 0.0
        %2229 = vmatpush1.msra.mxu0 %v2209
        %2230 = vmatprep.subr.mxu0 0.0
        %2231 = vmatpush1.msra.mxu0 %v2210
        %2232 = vmatprep.subr.mxu0 0.0
        %2233 = vmatpush1.msra.mxu0 %v2211
        %2234 = vmatprep.subr.mxu0 0.0
        %2235 = vmatpush1.msra.mxu0 %v2212
        %2236 = vmatprep.subr.mxu0 0.0
        %2237 = vmatpush1.msra.mxu0 %v2213
        %2238 = vmatprep.subr.mxu0 0.0
        %2239 = vmatpush1.msra.mxu0 %v2214
        %2240 = vmatprep.subr.mxu0 0.0
        %2241 = vmatpush1.msra.mxu0 %v2215
        %2242 = vmatprep.subr.mxu0 0.0
        %2243 = vmatpush1.msra.mxu0 %v2216
        %2244 = vmatprep.subr.mxu0 0.0
        %2245 = vmatpush1.msra.mxu0 %v2217
        %2246 = vmatprep.subr.mxu0 0.0
        %2247 = vmatpush1.msra.mxu0 %v2218
        %2248 = vmatprep.subr.mxu0 0.0
        %2249 = vmatpush1.msra.mxu0 %v2219
        %2250 = vmatprep.subr.mxu0 0.0
        %2251 = vmatpush1.msra.mxu0 %v2220
        %2252 = vmatprep.subr.mxu0 0.0
        %2253 = vmatpush1.msra.mxu0 %v2221
        %2254 = vmatprep.subr.mxu0 0.0
        %2255 = vmatpush1.msra.mxu0 0.0
        %2256 = vmatprep.subr.mxu0 0.0
        %2257 = vmatpush1.msra.mxu0 0.0
        %2258 = vmatprep.subr.mxu0 0.0
        %2259 = vmatpush1.msra.mxu0 0.0
        %2260 = vmatprep.subr.mxu0 0.0
        %2261 = vmatpush1.msra.mxu0 0.0
        %2262 = vmatprep.subr.mxu0 0.0
        %2263 = vmatpush1.msra.mxu0 0.0
        %2264 = vmatprep.subr.mxu0 0.0
        %2265 = vmatpush1.msra.mxu0 0.0
        %2266 = vmatprep.subr.mxu0 0.0
        %2267 = vmatpush1.msra.mxu0 0.0
        %2268 = vmatprep.subr.mxu0 0.0
        %2269 = vmatpush1.msra.mxu0 0.0
        %2270 = vmatprep.subr.mxu0 0.0
        %2271 = vmatpush1.msra.mxu0 0.0
        %2272 = vmatprep.subr.mxu0 0.0
        %2273 = vmatpush1.msra.mxu0 0.0
        %2274 = vmatprep.subr.mxu0 0.0
        %2275 = vmatpush1.msra.mxu0 0.0
        %2276 = vmatprep.subr.mxu0 0.0
        %2277 = vmatpush1.msra.mxu0 0.0
        %2278 = vmatprep.subr.mxu0 0.0
        %2279 = vmatpush1.msra.mxu0 0.0
        %2280 = vmatprep.subr.mxu0 0.0
        %2281 = vmatpush1.msra.mxu0 0.0
        %2282 = vmatprep.subr.mxu0 0.0
        %2283 = vmatpush1.msra.mxu0 0.0
        %2284 = vmatprep.subr.mxu0 0.0
        %2285 = vmatpush1.msra.mxu0 0.0
        %2286 = vmatprep.mubr.f32.mxu0 0.0
        %2287 = vmatmul.mubr.f32.gmra.mrb[0].mxu0 %v1936
        %v2288 = vpop.f32.mrb[0].mxu0
        %v2289 = vadd.f32 0.0, %v2288
        %v2290 = vpop.f32.mrb[0].mxu0
        %2291 = vmatprep.mubr.f32.mxu0 0.0
        %2292 = vmatmul.mubr.f32.gmra.mrb[0].mxu0 %v1937
        %v2293 = vpop.f32.mrb[0].mxu0
        %v2294 = vadd.f32 0.0, %v2293
        %v2295 = vpop.f32.mrb[0].mxu0
        %2296 = vmatprep.mubr.f32.mxu0 0.0
        %2297 = vmatmul.mubr.f32.gmra.mrb[0].mxu0 %v1938
        %v2298 = vpop.f32.mrb[0].mxu0
        %v2299 = vadd.f32 0.0, %v2298
        %v2300 = vpop.f32.mrb[0].mxu0
        %2301 = vmatprep.mubr.f32.mxu0 0.0
        %2302 = vmatmul.mubr.f32.gmra.mrb[0].mxu0 %v1939
        %v2303 = vpop.f32.mrb[0].mxu0
        %v2304 = vadd.f32 0.0, %v2303
        %v2305 = vpop.f32.mrb[0].mxu0
        %2306 = vmatprep.mubr.f32.mxu0 0.0
        %2307 = vmatmul.mubr.f32.gmra.mrb[0].mxu0 %v1940
        %v2308 = vpop.f32.mrb[0].mxu0
        %v2309 = vadd.f32 0.0, %v2308
        %v2310 = vpop.f32.mrb[0].mxu0
        %2311 = vmatprep.mubr.f32.mxu0 0.0
        %2312 = vmatmul.mubr.f32.gmra.mrb[0].mxu0 %v1941
        %v2313 = vpop.f32.mrb[0].mxu0
        %v2314 = vadd.f32 0.0, %v2313
        %v2315 = vpop.f32.mrb[0].mxu0
        %2316 = vmatprep.mubr.f32.mxu0 0.0
        %2317 = vmatmul.mubr.f32.gmra.mrb[0].mxu0 %v1942
        %v2318 = vpop.f32.mrb[0].mxu0
        %v2319 = vadd.f32 0.0, %v2318
        %v2320 = vpop.f32.mrb[0].mxu0
        %2321 = vdwg.mxu0
        %v2322 = vadd.f32 %v2172, %v2289
        %v2323 = vadd.f32 %v2177, %v2294
        %v2324 = vadd.f32 %v2182, %v2299
        %v2325 = vadd.f32 %v2187, %v2304
        %v2326 = vadd.f32 %v2192, %v2309
        %v2327 = vadd.f32 %v2197, %v2314
        %v2328 = vadd.f32 %v2202, %v2319
        %v2329 = vrot.slane %v1936, 1
        %v2330 = vrot.slane %v1937, 1
        %v2331 = vrot.slane %v1938, 1
        %v2332 = vrot.slane %v1939, 1
        %v2333 = vrot.slane %v1940, 1
        %v2334 = vrot.slane %v1941, 1
        %v2335 = vrot.slane %v1942, 1
        %v2336 = vsel %vm925, %v2334, %v2335
        %v2337 = vsel %vm925, %v2333, %v2334
        %v2338 = vsel %vm925, %v2332, %v2333
        %v2339 = vsel %vm925, %v2331, %v2332
        %v2340 = vsel %vm925, %v2330, %v2331
        %v2341 = vsel %vm925, %v2329, %v2330
        %v2342 = vsel %vm925, %v2335, %v2329
        %s2343 = scalar_lea.vmem [#allocation8], 1664
        %v2344 = vld [vmem:[%s2343] sm:$0xff]
        %v2345 = vld [vmem:[%s2343 + $0x8] sm:$0xff]
        %v2346 = vld [vmem:[%s2343 + $0x10] sm:$0xff]
        %v2347 = vld [vmem:[%s2343 + $0x18] sm:$0xff]
        %v2348 = vld [vmem:[%s2343 + $0x20] sm:$0xff]
        %v2349 = vld [vmem:[%s2343 + $0x28] sm:$0xff]
        %v2350 = vld [vmem:[%s2343 + $0x30] sm:$0xff]
        %v2351 = vld [vmem:[%s2343 + $0x38] sm:$0xff]
        %v2352 = vld [vmem:[%s2343 + $0x40] sm:$0xff]
        %v2353 = vld [vmem:[%s2343 + $0x48] sm:$0xff]
        %v2354 = vld [vmem:[%s2343 + $0x50] sm:$0xff]
        %v2355 = vld [vmem:[%s2343 + $0x58] sm:$0xff]
        %v2356 = vld [vmem:[%s2343 + $0x60] sm:$0xff]
        %v2357 = vld [vmem:[%s2343 + $0x68] sm:$0xff]
        %v2358 = vld [vmem:[%s2343 + $0x70] sm:$0xff]
        %v2359 = vld [vmem:[%s2343 + $0x78] sm:$0xff]
        %2360 = vmatprep.subr.mxu0 0.0
        %2361 = vmatpush1.msra.mxu0 %v2344
        %2362 = vmatprep.subr.mxu0 0.0
        %2363 = vmatpush1.msra.mxu0 %v2345
        %2364 = vmatprep.subr.mxu0 0.0
        %2365 = vmatpush1.msra.mxu0 %v2346
        %2366 = vmatprep.subr.mxu0 0.0
        %2367 = vmatpush1.msra.mxu0 %v2347
        %2368 = vmatprep.subr.mxu0 0.0
        %2369 = vmatpush1.msra.mxu0 %v2348
        %2370 = vmatprep.subr.mxu0 0.0
        %2371 = vmatpush1.msra.mxu0 %v2349
        %2372 = vmatprep.subr.mxu0 0.0
        %2373 = vmatpush1.msra.mxu0 %v2350
        %2374 = vmatprep.subr.mxu0 0.0
        %2375 = vmatpush1.msra.mxu0 %v2351
        %2376 = vmatprep.subr.mxu0 0.0
        %2377 = vmatpush1.msra.mxu0 %v2352
        %2378 = vmatprep.subr.mxu0 0.0
        %2379 = vmatpush1.msra.mxu0 %v2353
        %2380 = vmatprep.subr.mxu0 0.0
        %2381 = vmatpush1.msra.mxu0 %v2354
        %2382 = vmatprep.subr.mxu0 0.0
        %2383 = vmatpush1.msra.mxu0 %v2355
        %2384 = vmatprep.subr.mxu0 0.0
        %2385 = vmatpush1.msra.mxu0 %v2356
        %2386 = vmatprep.subr.mxu0 0.0
        %2387 = vmatpush1.msra.mxu0 %v2357
        %2388 = vmatprep.subr.mxu0 0.0
        %2389 = vmatpush1.msra.mxu0 %v2358
        %2390 = vmatprep.subr.mxu0 0.0
        %2391 = vmatpush1.msra.mxu0 %v2359
        %2392 = vmatprep.subr.mxu0 0.0
        %2393 = vmatpush1.msra.mxu0 0.0
        %2394 = vmatprep.subr.mxu0 0.0
        %2395 = vmatpush1.msra.mxu0 0.0
        %2396 = vmatprep.subr.mxu0 0.0
        %2397 = vmatpush1.msra.mxu0 0.0
        %2398 = vmatprep.subr.mxu0 0.0
        %2399 = vmatpush1.msra.mxu0 0.0
        %2400 = vmatprep.subr.mxu0 0.0
        %2401 = vmatpush1.msra.mxu0 0.0
        %2402 = vmatprep.subr.mxu0 0.0
        %2403 = vmatpush1.msra.mxu0 0.0
        %2404 = vmatprep.subr.mxu0 0.0
        %2405 = vmatpush1.msra.mxu0 0.0
        %2406 = vmatprep.subr.mxu0 0.0
        %2407 = vmatpush1.msra.mxu0 0.0
        %2408 = vmatprep.subr.mxu0 0.0
        %2409 = vmatpush1.msra.mxu0 0.0
        %2410 = vmatprep.subr.mxu0 0.0
        %2411 = vmatpush1.msra.mxu0 0.0
        %2412 = vmatprep.subr.mxu0 0.0
        %2413 = vmatpush1.msra.mxu0 0.0
        %2414 = vmatprep.subr.mxu0 0.0
        %2415 = vmatpush1.msra.mxu0 0.0
        %2416 = vmatprep.subr.mxu0 0.0
        %2417 = vmatpush1.msra.mxu0 0.0
        %2418 = vmatprep.subr.mxu0 0.0
        %2419 = vmatpush1.msra.mxu0 0.0
        %2420 = vmatprep.subr.mxu0 0.0
        %2421 = vmatpush1.msra.mxu0 0.0
        %2422 = vmatprep.subr.mxu0 0.0
        %2423 = vmatpush1.msra.mxu0 0.0
        %2424 = vmatprep.mubr.f32.mxu0 0.0
        %2425 = vmatmul.mubr.f32.gmra.mrb[0].mxu0 %v2341
        %v2426 = vpop.f32.mrb[0].mxu0
        %v2427 = vadd.f32 0.0, %v2426
        %v2428 = vpop.f32.mrb[0].mxu0
        %2429 = vmatprep.mubr.f32.mxu0 0.0
        %2430 = vmatmul.mubr.f32.gmra.mrb[0].mxu0 %v2340
        %v2431 = vpop.f32.mrb[0].mxu0
        %v2432 = vadd.f32 0.0, %v2431
        %v2433 = vpop.f32.mrb[0].mxu0
        %2434 = vmatprep.mubr.f32.mxu0 0.0
        %2435 = vmatmul.mubr.f32.gmra.mrb[0].mxu0 %v2339
        %v2436 = vpop.f32.mrb[0].mxu0
        %v2437 = vadd.f32 0.0, %v2436
        %v2438 = vpop.f32.mrb[0].mxu0
        %2439 = vmatprep.mubr.f32.mxu0 0.0
        %2440 = vmatmul.mubr.f32.gmra.mrb[0].mxu0 %v2338
        %v2441 = vpop.f32.mrb[0].mxu0
        %v2442 = vadd.f32 0.0, %v2441
        %v2443 = vpop.f32.mrb[0].mxu0
        %2444 = vmatprep.mubr.f32.mxu0 0.0
        %2445 = vmatmul.mubr.f32.gmra.mrb[0].mxu0 %v2337
        %v2446 = vpop.f32.mrb[0].mxu0
        %v2447 = vadd.f32 0.0, %v2446
        %v2448 = vpop.f32.mrb[0].mxu0
        %2449 = vmatprep.mubr.f32.mxu0 0.0
        %2450 = vmatmul.mubr.f32.gmra.mrb[0].mxu0 %v2336
        %v2451 = vpop.f32.mrb[0].mxu0
        %v2452 = vadd.f32 0.0, %v2451
        %v2453 = vpop.f32.mrb[0].mxu0
        %2454 = vmatprep.mubr.f32.mxu0 0.0
        %2455 = vmatmul.mubr.f32.gmra.mrb[0].mxu0 %v2342
        %v2456 = vpop.f32.mrb[0].mxu0
        %v2457 = vadd.f32 0.0, %v2456
        %v2458 = vpop.f32.mrb[0].mxu0
        %2459 = vdwg.mxu0
        %v2460 = vadd.f32 %v2322, %v2427
        %v2461 = vadd.f32 %v2323, %v2432
        %v2462 = vadd.f32 %v2324, %v2437
        %v2463 = vadd.f32 %v2325, %v2442
        %v2464 = vadd.f32 %v2326, %v2447
        %v2465 = vadd.f32 %v2327, %v2452
        %v2466 = vadd.f32 %v2328, %v2457
        %v2467 = vrot.slane %v1936, 2
        %v2468 = vrot.slane %v1937, 2
        %v2469 = vrot.slane %v1938, 2
        %v2470 = vrot.slane %v1939, 2
        %v2471 = vrot.slane %v1940, 2
        %v2472 = vrot.slane %v1941, 2
        %v2473 = vrot.slane %v1942, 2
        %v2474 = vsel %vm1064, %v2472, %v2473
        %v2475 = vsel %vm1064, %v2471, %v2472
        %v2476 = vsel %vm1064, %v2470, %v2471
        %v2477 = vsel %vm1064, %v2469, %v2470
        %v2478 = vsel %vm1064, %v2468, %v2469
        %v2479 = vsel %vm1064, %v2467, %v2468
        %v2480 = vsel %vm1064, %v2473, %v2467
        %s2481 = scalar_lea.vmem [#allocation8], 1792
        %v2482 = vld [vmem:[%s2481] sm:$0xff]
        %v2483 = vld [vmem:[%s2481 + $0x8] sm:$0xff]
        %v2484 = vld [vmem:[%s2481 + $0x10] sm:$0xff]
        %v2485 = vld [vmem:[%s2481 + $0x18] sm:$0xff]
        %v2486 = vld [vmem:[%s2481 + $0x20] sm:$0xff]
        %v2487 = vld [vmem:[%s2481 + $0x28] sm:$0xff]
        %v2488 = vld [vmem:[%s2481 + $0x30] sm:$0xff]
        %v2489 = vld [vmem:[%s2481 + $0x38] sm:$0xff]
        %v2490 = vld [vmem:[%s2481 + $0x40] sm:$0xff]
        %v2491 = vld [vmem:[%s2481 + $0x48] sm:$0xff]
        %v2492 = vld [vmem:[%s2481 + $0x50] sm:$0xff]
        %v2493 = vld [vmem:[%s2481 + $0x58] sm:$0xff]
        %v2494 = vld [vmem:[%s2481 + $0x60] sm:$0xff]
        %v2495 = vld [vmem:[%s2481 + $0x68] sm:$0xff]
        %v2496 = vld [vmem:[%s2481 + $0x70] sm:$0xff]
        %v2497 = vld [vmem:[%s2481 + $0x78] sm:$0xff]
        %2498 = vmatprep.subr.mxu0 0.0
        %2499 = vmatpush1.msra.mxu0 %v2482
        %2500 = vmatprep.subr.mxu0 0.0
        %2501 = vmatpush1.msra.mxu0 %v2483
        %2502 = vmatprep.subr.mxu0 0.0
        %2503 = vmatpush1.msra.mxu0 %v2484
        %2504 = vmatprep.subr.mxu0 0.0
        %2505 = vmatpush1.msra.mxu0 %v2485
        %2506 = vmatprep.subr.mxu0 0.0
        %2507 = vmatpush1.msra.mxu0 %v2486
        %2508 = vmatprep.subr.mxu0 0.0
        %2509 = vmatpush1.msra.mxu0 %v2487
        %2510 = vmatprep.subr.mxu0 0.0
        %2511 = vmatpush1.msra.mxu0 %v2488
        %2512 = vmatprep.subr.mxu0 0.0
        %2513 = vmatpush1.msra.mxu0 %v2489
        %2514 = vmatprep.subr.mxu0 0.0
        %2515 = vmatpush1.msra.mxu0 %v2490
        %2516 = vmatprep.subr.mxu0 0.0
        %2517 = vmatpush1.msra.mxu0 %v2491
        %2518 = vmatprep.subr.mxu0 0.0
        %2519 = vmatpush1.msra.mxu0 %v2492
        %2520 = vmatprep.subr.mxu0 0.0
        %2521 = vmatpush1.msra.mxu0 %v2493
        %2522 = vmatprep.subr.mxu0 0.0
        %2523 = vmatpush1.msra.mxu0 %v2494
        %2524 = vmatprep.subr.mxu0 0.0
        %2525 = vmatpush1.msra.mxu0 %v2495
        %2526 = vmatprep.subr.mxu0 0.0
        %2527 = vmatpush1.msra.mxu0 %v2496
        %2528 = vmatprep.subr.mxu0 0.0
        %2529 = vmatpush1.msra.mxu0 %v2497
        %2530 = vmatprep.subr.mxu0 0.0
        %2531 = vmatpush1.msra.mxu0 0.0
        %2532 = vmatprep.subr.mxu0 0.0
        %2533 = vmatpush1.msra.mxu0 0.0
        %2534 = vmatprep.subr.mxu0 0.0
        %2535 = vmatpush1.msra.mxu0 0.0
        %2536 = vmatprep.subr.mxu0 0.0
        %2537 = vmatpush1.msra.mxu0 0.0
        %2538 = vmatprep.subr.mxu0 0.0
        %2539 = vmatpush1.msra.mxu0 0.0
        %2540 = vmatprep.subr.mxu0 0.0
        %2541 = vmatpush1.msra.mxu0 0.0
        %2542 = vmatprep.subr.mxu0 0.0
        %2543 = vmatpush1.msra.mxu0 0.0
        %2544 = vmatprep.subr.mxu0 0.0
        %2545 = vmatpush1.msra.mxu0 0.0
        %2546 = vmatprep.subr.mxu0 0.0
        %2547 = vmatpush1.msra.mxu0 0.0
        %2548 = vmatprep.subr.mxu0 0.0
        %2549 = vmatpush1.msra.mxu0 0.0
        %2550 = vmatprep.subr.mxu0 0.0
        %2551 = vmatpush1.msra.mxu0 0.0
        %2552 = vmatprep.subr.mxu0 0.0
        %2553 = vmatpush1.msra.mxu0 0.0
        %2554 = vmatprep.subr.mxu0 0.0
        %2555 = vmatpush1.msra.mxu0 0.0
        %2556 = vmatprep.subr.mxu0 0.0
        %2557 = vmatpush1.msra.mxu0 0.0
        %2558 = vmatprep.subr.mxu0 0.0
        %2559 = vmatpush1.msra.mxu0 0.0
        %2560 = vmatprep.subr.mxu0 0.0
        %2561 = vmatpush1.msra.mxu0 0.0
        %2562 = vmatprep.mubr.f32.mxu0 0.0
        %2563 = vmatmul.mubr.f32.gmra.mrb[0].mxu0 %v2479
        %v2564 = vpop.f32.mrb[0].mxu0
        %v2565 = vadd.f32 0.0, %v2564
        %v2566 = vpop.f32.mrb[0].mxu0
        %2567 = vmatprep.mubr.f32.mxu0 0.0
        %2568 = vmatmul.mubr.f32.gmra.mrb[0].mxu0 %v2478
        %v2569 = vpop.f32.mrb[0].mxu0
        %v2570 = vadd.f32 0.0, %v2569
        %v2571 = vpop.f32.mrb[0].mxu0
        %2572 = vmatprep.mubr.f32.mxu0 0.0
        %2573 = vmatmul.mubr.f32.gmra.mrb[0].mxu0 %v2477
        %v2574 = vpop.f32.mrb[0].mxu0
        %v2575 = vadd.f32 0.0, %v2574
        %v2576 = vpop.f32.mrb[0].mxu0
        %2577 = vmatprep.mubr.f32.mxu0 0.0
        %2578 = vmatmul.mubr.f32.gmra.mrb[0].mxu0 %v2476
        %v2579 = vpop.f32.mrb[0].mxu0
        %v2580 = vadd.f32 0.0, %v2579
        %v2581 = vpop.f32.mrb[0].mxu0
        %2582 = vmatprep.mubr.f32.mxu0 0.0
        %2583 = vmatmul.mubr.f32.gmra.mrb[0].mxu0 %v2475
        %v2584 = vpop.f32.mrb[0].mxu0
        %v2585 = vadd.f32 0.0, %v2584
        %v2586 = vpop.f32.mrb[0].mxu0
        %2587 = vmatprep.mubr.f32.mxu0 0.0
        %2588 = vmatmul.mubr.f32.gmra.mrb[0].mxu0 %v2474
        %v2589 = vpop.f32.mrb[0].mxu0
        %v2590 = vadd.f32 0.0, %v2589
        %v2591 = vpop.f32.mrb[0].mxu0
        %2592 = vmatprep.mubr.f32.mxu0 0.0
        %2593 = vmatmul.mubr.f32.gmra.mrb[0].mxu0 %v2480
        %v2594 = vpop.f32.mrb[0].mxu0
        %v2595 = vadd.f32 0.0, %v2594
        %v2596 = vpop.f32.mrb[0].mxu0
        %2597 = vdwg.mxu0
        %v2598 = vadd.f32 %v2460, %v2565
        %v2599 = vadd.f32 %v2461, %v2570
        %v2600 = vadd.f32 %v2462, %v2575
        %v2601 = vadd.f32 %v2463, %v2580
        %v2602 = vadd.f32 %v2464, %v2585
        %v2603 = vadd.f32 %v2465, %v2590
        %v2604 = vadd.f32 %v2466, %v2595
        %s2605 = scalar_lea.vmem [#allocation9], 2
        %v2606 = vld [vmem:[%s2605] sm:$0x1]
        %v2608 = vlaneseq
        %v2609 = vshrl.u32 %v2608, 7
        %v2610 = vsub.s32 0, %v2609
        %v2611 = vrot.slane %v2606, %v2610
        %v2613 = vadd.f32 %v2598, %v2611
        %v2614 = vadd.f32 %v2599, %v2611
        %v2615 = vadd.f32 %v2600, %v2611
        %v2616 = vadd.f32 %v2601, %v2611
        %v2617 = vadd.f32 %v2602, %v2611
        %v2618 = vadd.f32 %v2603, %v2611
        %v2619 = vadd.f32 %v2604, %v2611
        %v2620 = vsel %vm350, %v2613, 0.0
        %v2621 = vsel %vm351, %v2614, 0.0
        %v2622 = vsel %vm352, %v2615, 0.0
        %v2623 = vsel %vm353, %v2616, 0.0
        %v2624 = vsel %vm354, %v2617, 0.0
        %v2625 = vsel %vm355, %v2618, 0.0
        %v2626 = vsel %vm356, %v2619, 0.0
        %v2627 = vtanh.pop %v2620
        %v2628 = vtanh.pop %v2621
        %v2629 = vtanh.pop %v2622
        %v2630 = vtanh.pop %v2623
        %v2631 = vtanh.pop %v2624
        %v2632 = vtanh.pop %v2625
        %v2633 = vtanh.pop %v2626
        %2634 = vst [vmem:[#allocation3] sm:$0xff] %v2627
        %2635 = vst [vmem:[#allocation3 + $0x8] sm:$0xff] %v2628
        %2636 = vst [vmem:[#allocation3 + $0x10] sm:$0xff] %v2629
        %2637 = vst [vmem:[#allocation3 + $0x18] sm:$0xff] %v2630
        %2638 = vst [vmem:[#allocation3 + $0x20] sm:$0xff] %v2631
        %2639 = vst [vmem:[#allocation3 + $0x28] sm:$0xff] %v2632
        %2640 = vst [vmem:[#allocation3 + $0x30] sm:$0xff] %v2633
        %v2641 = vld [vmem:[#allocation3] sm:$0xff]
        %v2642 = vld [vmem:[#allocation3 + $0x8] sm:$0xff]
        %v2643 = vld [vmem:[#allocation3 + $0x10] sm:$0xff]
        %v2644 = vld [vmem:[#allocation3 + $0x18] sm:$0xff]
        %v2645 = vld [vmem:[#allocation3 + $0x20] sm:$0xff]
        %v2646 = vld [vmem:[#allocation3 + $0x28] sm:$0xff]
        %v2647 = vld [vmem:[#allocation3 + $0x30] sm:$0xff]
        %v2648 = vrot.slane %v2641, 6
        %v2649 = vrot.slane %v2642, 6
        %v2650 = vrot.slane %v2643, 6
        %v2651 = vrot.slane %v2644, 6
        %v2652 = vrot.slane %v2645, 6
        %v2653 = vrot.slane %v2646, 6
        %v2654 = vrot.slane %v2647, 6
        %v2655 = vsel %vm538, %v2653, %v2654
        %v2656 = vsel %vm538, %v2652, %v2653
        %v2657 = vsel %vm538, %v2651, %v2652
        %v2658 = vsel %vm538, %v2650, %v2651
        %v2659 = vsel %vm538, %v2649, %v2650
        %v2660 = vsel %vm538, %v2648, %v2649
        %v2661 = vsel %vm538, %v2654, %v2648
        %s2662 = scalar_lea.vmem [#allocation8], 1920
        %v2663 = vld [vmem:[%s2662] sm:$0xff]
        %v2664 = vld [vmem:[%s2662 + $0x8] sm:$0xff]
        %v2665 = vld [vmem:[%s2662 + $0x10] sm:$0xff]
        %v2666 = vld [vmem:[%s2662 + $0x18] sm:$0xff]
        %v2667 = vld [vmem:[%s2662 + $0x20] sm:$0xff]
        %v2668 = vld [vmem:[%s2662 + $0x28] sm:$0xff]
        %v2669 = vld [vmem:[%s2662 + $0x30] sm:$0xff]
        %v2670 = vld [vmem:[%s2662 + $0x38] sm:$0xff]
        %v2671 = vld [vmem:[%s2662 + $0x40] sm:$0xff]
        %v2672 = vld [vmem:[%s2662 + $0x48] sm:$0xff]
        %v2673 = vld [vmem:[%s2662 + $0x50] sm:$0xff]
        %v2674 = vld [vmem:[%s2662 + $0x58] sm:$0xff]
        %v2675 = vld [vmem:[%s2662 + $0x60] sm:$0xff]
        %v2676 = vld [vmem:[%s2662 + $0x68] sm:$0xff]
        %v2677 = vld [vmem:[%s2662 + $0x70] sm:$0xff]
        %v2678 = vld [vmem:[%s2662 + $0x78] sm:$0xff]
        %v2679 = vrot.slane %v2641, 7
        %v2680 = vrot.slane %v2642, 7
        %v2681 = vrot.slane %v2643, 7
        %v2682 = vrot.slane %v2644, 7
        %v2683 = vrot.slane %v2645, 7
        %v2684 = vrot.slane %v2646, 7
        %v2685 = vrot.slane %v2647, 7
        %v2686 = vsel %vm569, %v2684, %v2685
        %v2687 = vsel %vm569, %v2683, %v2684
        %v2688 = vsel %vm569, %v2682, %v2683
        %v2689 = vsel %vm569, %v2681, %v2682
        %v2690 = vsel %vm569, %v2680, %v2681
        %v2691 = vsel %vm569, %v2679, %v2680
        %v2692 = vsel %vm569, %v2685, %v2679
        %s2693 = scalar_lea.vmem [#allocation8], 2048
        %v2694 = vld [vmem:[%s2693] sm:$0xff]
        %v2695 = vld [vmem:[%s2693 + $0x8] sm:$0xff]
        %v2696 = vld [vmem:[%s2693 + $0x10] sm:$0xff]
        %v2697 = vld [vmem:[%s2693 + $0x18] sm:$0xff]
        %v2698 = vld [vmem:[%s2693 + $0x20] sm:$0xff]
        %v2699 = vld [vmem:[%s2693 + $0x28] sm:$0xff]
        %v2700 = vld [vmem:[%s2693 + $0x30] sm:$0xff]
        %v2701 = vld [vmem:[%s2693 + $0x38] sm:$0xff]
        %v2702 = vld [vmem:[%s2693 + $0x40] sm:$0xff]
        %v2703 = vld [vmem:[%s2693 + $0x48] sm:$0xff]
        %v2704 = vld [vmem:[%s2693 + $0x50] sm:$0xff]
        %v2705 = vld [vmem:[%s2693 + $0x58] sm:$0xff]
        %v2706 = vld [vmem:[%s2693 + $0x60] sm:$0xff]
        %v2707 = vld [vmem:[%s2693 + $0x68] sm:$0xff]
        %v2708 = vld [vmem:[%s2693 + $0x70] sm:$0xff]
        %v2709 = vld [vmem:[%s2693 + $0x78] sm:$0xff]
        %2710 = vmatprep.subr.mxu0 0.0
        %2711 = vmatpush1.msra.mxu0 %v2694
        %2712 = vmatprep.subr.mxu0 0.0
        %2713 = vmatpush1.msra.mxu0 %v2695
        %2714 = vmatprep.subr.mxu0 0.0
        %2715 = vmatpush1.msra.mxu0 %v2696
        %2716 = vmatprep.subr.mxu0 0.0
        %2717 = vmatpush1.msra.mxu0 %v2697
        %2718 = vmatprep.subr.mxu0 0.0
        %2719 = vmatpush1.msra.mxu0 %v2698
        %2720 = vmatprep.subr.mxu0 0.0
        %2721 = vmatpush1.msra.mxu0 %v2699
        %2722 = vmatprep.subr.mxu0 0.0
        %2723 = vmatpush1.msra.mxu0 %v2700
        %2724 = vmatprep.subr.mxu0 0.0
        %2725 = vmatpush1.msra.mxu0 %v2701
        %2726 = vmatprep.subr.mxu0 0.0
        %2727 = vmatpush1.msra.mxu0 %v2702
        %2728 = vmatprep.subr.mxu0 0.0
        %2729 = vmatpush1.msra.mxu0 %v2703
        %2730 = vmatprep.subr.mxu0 0.0
        %2731 = vmatpush1.msra.mxu0 %v2704
        %2732 = vmatprep.subr.mxu0 0.0
        %2733 = vmatpush1.msra.mxu0 %v2705
        %2734 = vmatprep.subr.mxu0 0.0
        %2735 = vmatpush1.msra.mxu0 %v2706
        %2736 = vmatprep.subr.mxu0 0.0
        %2737 = vmatpush1.msra.mxu0 %v2707
        %2738 = vmatprep.subr.mxu0 0.0
        %2739 = vmatpush1.msra.mxu0 %v2708
        %2740 = vmatprep.subr.mxu0 0.0
        %2741 = vmatpush1.msra.mxu0 %v2709
        %2742 = vmatprep.subr.mxu0 0.0
        %2743 = vmatpush1.msra.mxu0 0.0
        %2744 = vmatprep.subr.mxu0 0.0
        %2745 = vmatpush1.msra.mxu0 0.0
        %2746 = vmatprep.subr.mxu0 0.0
        %2747 = vmatpush1.msra.mxu0 0.0
        %2748 = vmatprep.subr.mxu0 0.0
        %2749 = vmatpush1.msra.mxu0 0.0
        %2750 = vmatprep.subr.mxu0 0.0
        %2751 = vmatpush1.msra.mxu0 0.0
        %2752 = vmatprep.subr.mxu0 0.0
        %2753 = vmatpush1.msra.mxu0 0.0
        %2754 = vmatprep.subr.mxu0 0.0
        %2755 = vmatpush1.msra.mxu0 0.0
        %2756 = vmatprep.subr.mxu0 0.0
        %2757 = vmatpush1.msra.mxu0 0.0
        %2758 = vmatprep.subr.mxu0 0.0
        %2759 = vmatpush1.msra.mxu0 0.0
        %2760 = vmatprep.subr.mxu0 0.0
        %2761 = vmatpush1.msra.mxu0 0.0
        %2762 = vmatprep.subr.mxu0 0.0
        %2763 = vmatpush1.msra.mxu0 0.0
        %2764 = vmatprep.subr.mxu0 0.0
        %2765 = vmatpush1.msra.mxu0 0.0
        %2766 = vmatprep.subr.mxu0 0.0
        %2767 = vmatpush1.msra.mxu0 0.0
        %2768 = vmatprep.subr.mxu0 0.0
        %2769 = vmatpush1.msra.mxu0 0.0
        %2770 = vmatprep.subr.mxu0 0.0
        %2771 = vmatpush1.msra.mxu0 0.0
        %2772 = vmatprep.subr.mxu0 0.0
        %2773 = vmatpush1.msra.mxu0 0.0
        %2774 = vmatprep.mubr.f32.mxu0 0.0
        %2775 = vmatmul.mubr.f32.gmra.mrb[0].mxu0 %v2692
        %v2776 = vpop.f32.mrb[0].mxu0
        %v2777 = vpop.f32.mrb[0].mxu0
        %2778 = vmatprep.mubr.f32.mxu0 0.0
        %2779 = vmatmul.mubr.f32.gmra.mrb[0].mxu0 %v2691
        %v2780 = vpop.f32.mrb[0].mxu0
        %v2781 = vpop.f32.mrb[0].mxu0
        %2782 = vmatprep.mubr.f32.mxu0 0.0
        %2783 = vmatmul.mubr.f32.gmra.mrb[0].mxu0 %v2690
        %v2784 = vpop.f32.mrb[0].mxu0
        %v2785 = vadd.f32 0.0, %v2784
        %v2786 = vpop.f32.mrb[0].mxu0
        %2787 = vmatprep.mubr.f32.mxu0 0.0
        %2788 = vmatmul.mubr.f32.gmra.mrb[0].mxu0 %v2689
        %v2789 = vpop.f32.mrb[0].mxu0
        %v2790 = vadd.f32 0.0, %v2789
        %v2791 = vpop.f32.mrb[0].mxu0
        %2792 = vmatprep.mubr.f32.mxu0 0.0
        %2793 = vmatmul.mubr.f32.gmra.mrb[0].mxu0 %v2688
        %v2794 = vpop.f32.mrb[0].mxu0
        %v2795 = vadd.f32 0.0, %v2794
        %v2796 = vpop.f32.mrb[0].mxu0
        %2797 = vmatprep.mubr.f32.mxu0 0.0
        %2798 = vmatmul.mubr.f32.gmra.mrb[0].mxu0 %v2687
        %v2799 = vpop.f32.mrb[0].mxu0
        %v2800 = vpop.f32.mrb[0].mxu0
        %2801 = vmatprep.mubr.f32.mxu0 0.0
        %2802 = vmatmul.mubr.f32.gmra.mrb[0].mxu0 %v2686
        %v2803 = vpop.f32.mrb[0].mxu0
        %v2804 = vpop.f32.mrb[0].mxu0
        %2805 = vdwg.mxu0
        %2806 = vmatprep.subr.mxu0 0.0
        %2807 = vmatpush1.msra.mxu0 %v2663
        %2808 = vmatprep.subr.mxu0 0.0
        %2809 = vmatpush1.msra.mxu0 %v2664
        %2810 = vmatprep.subr.mxu0 0.0
        %2811 = vmatpush1.msra.mxu0 %v2665
        %2812 = vmatprep.subr.mxu0 0.0
        %2813 = vmatpush1.msra.mxu0 %v2666
        %2814 = vmatprep.subr.mxu0 0.0
        %2815 = vmatpush1.msra.mxu0 %v2667
        %2816 = vmatprep.subr.mxu0 0.0
        %2817 = vmatpush1.msra.mxu0 %v2668
        %2818 = vmatprep.subr.mxu0 0.0
        %2819 = vmatpush1.msra.mxu0 %v2669
        %2820 = vmatprep.subr.mxu0 0.0
        %2821 = vmatpush1.msra.mxu0 %v2670
        %2822 = vmatprep.subr.mxu0 0.0
        %2823 = vmatpush1.msra.mxu0 %v2671
        %2824 = vmatprep.subr.mxu0 0.0
        %2825 = vmatpush1.msra.mxu0 %v2672
        %2826 = vmatprep.subr.mxu0 0.0
        %2827 = vmatpush1.msra.mxu0 %v2673
        %2828 = vmatprep.subr.mxu0 0.0
        %2829 = vmatpush1.msra.mxu0 %v2674
        %2830 = vmatprep.subr.mxu0 0.0
        %2831 = vmatpush1.msra.mxu0 %v2675
        %2832 = vmatprep.subr.mxu0 0.0
        %2833 = vmatpush1.msra.mxu0 %v2676
        %2834 = vmatprep.subr.mxu0 0.0
        %2835 = vmatpush1.msra.mxu0 %v2677
        %2836 = vmatprep.subr.mxu0 0.0
        %2837 = vmatpush1.msra.mxu0 %v2678
        %2838 = vmatprep.subr.mxu0 0.0
        %2839 = vmatpush1.msra.mxu0 0.0
        %2840 = vmatprep.subr.mxu0 0.0
        %2841 = vmatpush1.msra.mxu0 0.0
        %2842 = vmatprep.subr.mxu0 0.0
        %2843 = vmatpush1.msra.mxu0 0.0
        %2844 = vmatprep.subr.mxu0 0.0
        %2845 = vmatpush1.msra.mxu0 0.0
        %2846 = vmatprep.subr.mxu0 0.0
        %2847 = vmatpush1.msra.mxu0 0.0
        %2848 = vmatprep.subr.mxu0 0.0
        %2849 = vmatpush1.msra.mxu0 0.0
        %2850 = vmatprep.subr.mxu0 0.0
        %2851 = vmatpush1.msra.mxu0 0.0
        %2852 = vmatprep.subr.mxu0 0.0
        %2853 = vmatpush1.msra.mxu0 0.0
        %2854 = vmatprep.subr.mxu0 0.0
        %2855 = vmatpush1.msra.mxu0 0.0
        %2856 = vmatprep.subr.mxu0 0.0
        %2857 = vmatpush1.msra.mxu0 0.0
        %2858 = vmatprep.subr.mxu0 0.0
        %2859 = vmatpush1.msra.mxu0 0.0
        %2860 = vmatprep.subr.mxu0 0.0
        %2861 = vmatpush1.msra.mxu0 0.0
        %2862 = vmatprep.subr.mxu0 0.0
        %2863 = vmatpush1.msra.mxu0 0.0
        %2864 = vmatprep.subr.mxu0 0.0
        %2865 = vmatpush1.msra.mxu0 0.0
        %2866 = vmatprep.subr.mxu0 0.0
        %2867 = vmatpush1.msra.mxu0 0.0
        %2868 = vmatprep.subr.mxu0 0.0
        %2869 = vmatpush1.msra.mxu0 0.0
        %2870 = vmatprep.mubr.f32.mxu0 0.0
        %2871 = vmatmul.mubr.f32.gmra.mrb[0].mxu0 %v2661
        %v2872 = vpop.f32.mrb[0].mxu0
        %v2873 = vpop.f32.mrb[0].mxu0
        %2874 = vmatprep.mubr.f32.mxu0 0.0
        %2875 = vmatmul.mubr.f32.gmra.mrb[0].mxu0 %v2660
        %v2876 = vpop.f32.mrb[0].mxu0
        %v2877 = vpop.f32.mrb[0].mxu0
        %2878 = vmatprep.mubr.f32.mxu0 0.0
        %2879 = vmatmul.mubr.f32.gmra.mrb[0].mxu0 %v2659
        %v2880 = vpop.f32.mrb[0].mxu0
        %v2881 = vadd.f32 %v2785, %v2880
        %v2882 = vpop.f32.mrb[0].mxu0
        %2883 = vmatprep.mubr.f32.mxu0 0.0
        %2884 = vmatmul.mubr.f32.gmra.mrb[0].mxu0 %v2658
        %v2885 = vpop.f32.mrb[0].mxu0
        %v2886 = vadd.f32 %v2790, %v2885
        %v2887 = vpop.f32.mrb[0].mxu0
        %2888 = vmatprep.mubr.f32.mxu0 0.0
        %2889 = vmatmul.mubr.f32.gmra.mrb[0].mxu0 %v2657
        %v2890 = vpop.f32.mrb[0].mxu0
        %v2891 = vadd.f32 %v2795, %v2890
        %v2892 = vpop.f32.mrb[0].mxu0
        %2893 = vmatprep.mubr.f32.mxu0 0.0
        %2894 = vmatmul.mubr.f32.gmra.mrb[0].mxu0 %v2656
        %v2895 = vpop.f32.mrb[0].mxu0
        %v2896 = vpop.f32.mrb[0].mxu0
        %2897 = vmatprep.mubr.f32.mxu0 0.0
        %2898 = vmatmul.mubr.f32.gmra.mrb[0].mxu0 %v2655
        %v2899 = vpop.f32.mrb[0].mxu0
        %v2900 = vpop.f32.mrb[0].mxu0
        %2901 = vdwg.mxu0
        %s2902 = scalar_lea.vmem [#allocation8], 2176
        %v2903 = vld [vmem:[%s2902] sm:$0xff]
        %v2904 = vld [vmem:[%s2902 + $0x8] sm:$0xff]
        %v2905 = vld [vmem:[%s2902 + $0x10] sm:$0xff]
        %v2906 = vld [vmem:[%s2902 + $0x18] sm:$0xff]
        %v2907 = vld [vmem:[%s2902 + $0x20] sm:$0xff]
        %v2908 = vld [vmem:[%s2902 + $0x28] sm:$0xff]
        %v2909 = vld [vmem:[%s2902 + $0x30] sm:$0xff]
        %v2910 = vld [vmem:[%s2902 + $0x38] sm:$0xff]
        %v2911 = vld [vmem:[%s2902 + $0x40] sm:$0xff]
        %v2912 = vld [vmem:[%s2902 + $0x48] sm:$0xff]
        %v2913 = vld [vmem:[%s2902 + $0x50] sm:$0xff]
        %v2914 = vld [vmem:[%s2902 + $0x58] sm:$0xff]
        %v2915 = vld [vmem:[%s2902 + $0x60] sm:$0xff]
        %v2916 = vld [vmem:[%s2902 + $0x68] sm:$0xff]
        %v2917 = vld [vmem:[%s2902 + $0x70] sm:$0xff]
        %v2918 = vld [vmem:[%s2902 + $0x78] sm:$0xff]
        %2919 = vmatprep.subr.mxu0 0.0
        %2920 = vmatpush1.msra.mxu0 %v2903
        %2921 = vmatprep.subr.mxu0 0.0
        %2922 = vmatpush1.msra.mxu0 %v2904
        %2923 = vmatprep.subr.mxu0 0.0
        %2924 = vmatpush1.msra.mxu0 %v2905
        %2925 = vmatprep.subr.mxu0 0.0
        %2926 = vmatpush1.msra.mxu0 %v2906
        %2927 = vmatprep.subr.mxu0 0.0
        %2928 = vmatpush1.msra.mxu0 %v2907
        %2929 = vmatprep.subr.mxu0 0.0
        %2930 = vmatpush1.msra.mxu0 %v2908
        %2931 = vmatprep.subr.mxu0 0.0
        %2932 = vmatpush1.msra.mxu0 %v2909
        %2933 = vmatprep.subr.mxu0 0.0
        %2934 = vmatpush1.msra.mxu0 %v2910
        %2935 = vmatprep.subr.mxu0 0.0
        %2936 = vmatpush1.msra.mxu0 %v2911
        %2937 = vmatprep.subr.mxu0 0.0
        %2938 = vmatpush1.msra.mxu0 %v2912
        %2939 = vmatprep.subr.mxu0 0.0
        %2940 = vmatpush1.msra.mxu0 %v2913
        %2941 = vmatprep.subr.mxu0 0.0
        %2942 = vmatpush1.msra.mxu0 %v2914
        %2943 = vmatprep.subr.mxu0 0.0
        %2944 = vmatpush1.msra.mxu0 %v2915
        %2945 = vmatprep.subr.mxu0 0.0
        %2946 = vmatpush1.msra.mxu0 %v2916
        %2947 = vmatprep.subr.mxu0 0.0
        %2948 = vmatpush1.msra.mxu0 %v2917
        %2949 = vmatprep.subr.mxu0 0.0
        %2950 = vmatpush1.msra.mxu0 %v2918
        %2951 = vmatprep.subr.mxu0 0.0
        %2952 = vmatpush1.msra.mxu0 0.0
        %2953 = vmatprep.subr.mxu0 0.0
        %2954 = vmatpush1.msra.mxu0 0.0
        %2955 = vmatprep.subr.mxu0 0.0
        %2956 = vmatpush1.msra.mxu0 0.0
        %2957 = vmatprep.subr.mxu0 0.0
        %2958 = vmatpush1.msra.mxu0 0.0
        %2959 = vmatprep.subr.mxu0 0.0
        %2960 = vmatpush1.msra.mxu0 0.0
        %2961 = vmatprep.subr.mxu0 0.0
        %2962 = vmatpush1.msra.mxu0 0.0
        %2963 = vmatprep.subr.mxu0 0.0
        %2964 = vmatpush1.msra.mxu0 0.0
        %2965 = vmatprep.subr.mxu0 0.0
        %2966 = vmatpush1.msra.mxu0 0.0
        %2967 = vmatprep.subr.mxu0 0.0
        %2968 = vmatpush1.msra.mxu0 0.0
        %2969 = vmatprep.subr.mxu0 0.0
        %2970 = vmatpush1.msra.mxu0 0.0
        %2971 = vmatprep.subr.mxu0 0.0
        %2972 = vmatpush1.msra.mxu0 0.0
        %2973 = vmatprep.subr.mxu0 0.0
        %2974 = vmatpush1.msra.mxu0 0.0
        %2975 = vmatprep.subr.mxu0 0.0
        %2976 = vmatpush1.msra.mxu0 0.0
        %2977 = vmatprep.subr.mxu0 0.0
        %2978 = vmatpush1.msra.mxu0 0.0
        %2979 = vmatprep.subr.mxu0 0.0
        %2980 = vmatpush1.msra.mxu0 0.0
        %2981 = vmatprep.subr.mxu0 0.0
        %2982 = vmatpush1.msra.mxu0 0.0
        %2983 = vmatprep.mubr.f32.mxu0 0.0
        %2984 = vmatmul.mubr.f32.gmra.mrb[0].mxu0 %v2641
        %v2985 = vpop.f32.mrb[0].mxu0
        %v2986 = vpop.f32.mrb[0].mxu0
        %2987 = vmatprep.mubr.f32.mxu0 0.0
        %2988 = vmatmul.mubr.f32.gmra.mrb[0].mxu0 %v2642
        %v2989 = vpop.f32.mrb[0].mxu0
        %v2990 = vpop.f32.mrb[0].mxu0
        %2991 = vmatprep.mubr.f32.mxu0 0.0
        %2992 = vmatmul.mubr.f32.gmra.mrb[0].mxu0 %v2643
        %v2993 = vpop.f32.mrb[0].mxu0
        %v2994 = vadd.f32 0.0, %v2993
        %v2995 = vpop.f32.mrb[0].mxu0
        %2996 = vmatprep.mubr.f32.mxu0 0.0
        %2997 = vmatmul.mubr.f32.gmra.mrb[0].mxu0 %v2644
        %v2998 = vpop.f32.mrb[0].mxu0
        %v2999 = vadd.f32 0.0, %v2998
        %v3000 = vpop.f32.mrb[0].mxu0
        %3001 = vmatprep.mubr.f32.mxu0 0.0
        %3002 = vmatmul.mubr.f32.gmra.mrb[0].mxu0 %v2645
        %v3003 = vpop.f32.mrb[0].mxu0
        %v3004 = vadd.f32 0.0, %v3003
        %v3005 = vpop.f32.mrb[0].mxu0
        %3006 = vmatprep.mubr.f32.mxu0 0.0
        %3007 = vmatmul.mubr.f32.gmra.mrb[0].mxu0 %v2646
        %v3008 = vpop.f32.mrb[0].mxu0
        %v3009 = vpop.f32.mrb[0].mxu0
        %3010 = vmatprep.mubr.f32.mxu0 0.0
        %3011 = vmatmul.mubr.f32.gmra.mrb[0].mxu0 %v2647
        %v3012 = vpop.f32.mrb[0].mxu0
        %v3013 = vpop.f32.mrb[0].mxu0
        %3014 = vdwg.mxu0
        %v3015 = vadd.f32 %v2881, %v2994
        %v3016 = vadd.f32 %v2886, %v2999
        %v3017 = vadd.f32 %v2891, %v3004
        %v3018 = vrot.slane %v2641, 1
        %v3019 = vrot.slane %v2642, 1
        %v3020 = vrot.slane %v2643, 1
        %v3021 = vrot.slane %v2644, 1
        %v3022 = vrot.slane %v2645, 1
        %v3023 = vrot.slane %v2646, 1
        %v3024 = vrot.slane %v2647, 1
        %v3025 = vsel %vm925, %v3023, %v3024
        %v3026 = vsel %vm925, %v3022, %v3023
        %v3027 = vsel %vm925, %v3021, %v3022
        %v3028 = vsel %vm925, %v3020, %v3021
        %v3029 = vsel %vm925, %v3019, %v3020
        %v3030 = vsel %vm925, %v3018, %v3019
        %v3031 = vsel %vm925, %v3024, %v3018
        %s3032 = scalar_lea.vmem [#allocation8], 2304
        %v3033 = vld [vmem:[%s3032] sm:$0xff]
        %v3034 = vld [vmem:[%s3032 + $0x8] sm:$0xff]
        %v3035 = vld [vmem:[%s3032 + $0x10] sm:$0xff]
        %v3036 = vld [vmem:[%s3032 + $0x18] sm:$0xff]
        %v3037 = vld [vmem:[%s3032 + $0x20] sm:$0xff]
        %v3038 = vld [vmem:[%s3032 + $0x28] sm:$0xff]
        %v3039 = vld [vmem:[%s3032 + $0x30] sm:$0xff]
        %v3040 = vld [vmem:[%s3032 + $0x38] sm:$0xff]
        %v3041 = vld [vmem:[%s3032 + $0x40] sm:$0xff]
        %v3042 = vld [vmem:[%s3032 + $0x48] sm:$0xff]
        %v3043 = vld [vmem:[%s3032 + $0x50] sm:$0xff]
        %v3044 = vld [vmem:[%s3032 + $0x58] sm:$0xff]
        %v3045 = vld [vmem:[%s3032 + $0x60] sm:$0xff]
        %v3046 = vld [vmem:[%s3032 + $0x68] sm:$0xff]
        %v3047 = vld [vmem:[%s3032 + $0x70] sm:$0xff]
        %v3048 = vld [vmem:[%s3032 + $0x78] sm:$0xff]
        %3049 = vmatprep.subr.mxu0 0.0
        %3050 = vmatpush1.msra.mxu0 %v3033
        %3051 = vmatprep.subr.mxu0 0.0
        %3052 = vmatpush1.msra.mxu0 %v3034
        %3053 = vmatprep.subr.mxu0 0.0
        %3054 = vmatpush1.msra.mxu0 %v3035
        %3055 = vmatprep.subr.mxu0 0.0
        %3056 = vmatpush1.msra.mxu0 %v3036
        %3057 = vmatprep.subr.mxu0 0.0
        %3058 = vmatpush1.msra.mxu0 %v3037
        %3059 = vmatprep.subr.mxu0 0.0
        %3060 = vmatpush1.msra.mxu0 %v3038
        %3061 = vmatprep.subr.mxu0 0.0
        %3062 = vmatpush1.msra.mxu0 %v3039
        %3063 = vmatprep.subr.mxu0 0.0
        %3064 = vmatpush1.msra.mxu0 %v3040
        %3065 = vmatprep.subr.mxu0 0.0
        %3066 = vmatpush1.msra.mxu0 %v3041
        %3067 = vmatprep.subr.mxu0 0.0
        %3068 = vmatpush1.msra.mxu0 %v3042
        %3069 = vmatprep.subr.mxu0 0.0
        %3070 = vmatpush1.msra.mxu0 %v3043
        %3071 = vmatprep.subr.mxu0 0.0
        %3072 = vmatpush1.msra.mxu0 %v3044
        %3073 = vmatprep.subr.mxu0 0.0
        %3074 = vmatpush1.msra.mxu0 %v3045
        %3075 = vmatprep.subr.mxu0 0.0
        %3076 = vmatpush1.msra.mxu0 %v3046
        %3077 = vmatprep.subr.mxu0 0.0
        %3078 = vmatpush1.msra.mxu0 %v3047
        %3079 = vmatprep.subr.mxu0 0.0
        %3080 = vmatpush1.msra.mxu0 %v3048
        %3081 = vmatprep.subr.mxu0 0.0
        %3082 = vmatpush1.msra.mxu0 0.0
        %3083 = vmatprep.subr.mxu0 0.0
        %3084 = vmatpush1.msra.mxu0 0.0
        %3085 = vmatprep.subr.mxu0 0.0
        %3086 = vmatpush1.msra.mxu0 0.0
        %3087 = vmatprep.subr.mxu0 0.0
        %3088 = vmatpush1.msra.mxu0 0.0
        %3089 = vmatprep.subr.mxu0 0.0
        %3090 = vmatpush1.msra.mxu0 0.0
        %3091 = vmatprep.subr.mxu0 0.0
        %3092 = vmatpush1.msra.mxu0 0.0
        %3093 = vmatprep.subr.mxu0 0.0
        %3094 = vmatpush1.msra.mxu0 0.0
        %3095 = vmatprep.subr.mxu0 0.0
        %3096 = vmatpush1.msra.mxu0 0.0
        %3097 = vmatprep.subr.mxu0 0.0
        %3098 = vmatpush1.msra.mxu0 0.0
        %3099 = vmatprep.subr.mxu0 0.0
        %3100 = vmatpush1.msra.mxu0 0.0
        %3101 = vmatprep.subr.mxu0 0.0
        %3102 = vmatpush1.msra.mxu0 0.0
        %3103 = vmatprep.subr.mxu0 0.0
        %3104 = vmatpush1.msra.mxu0 0.0
        %3105 = vmatprep.subr.mxu0 0.0
        %3106 = vmatpush1.msra.mxu0 0.0
        %3107 = vmatprep.subr.mxu0 0.0
        %3108 = vmatpush1.msra.mxu0 0.0
        %3109 = vmatprep.subr.mxu0 0.0
        %3110 = vmatpush1.msra.mxu0 0.0
        %3111 = vmatprep.subr.mxu0 0.0
        %3112 = vmatpush1.msra.mxu0 0.0
        %3113 = vmatprep.mubr.f32.mxu0 0.0
        %3114 = vmatmul.mubr.f32.gmra.mrb[0].mxu0 %v3030
        %v3115 = vpop.f32.mrb[0].mxu0
        %v3116 = vpop.f32.mrb[0].mxu0
        %3117 = vmatprep.mubr.f32.mxu0 0.0
        %3118 = vmatmul.mubr.f32.gmra.mrb[0].mxu0 %v3029
        %v3119 = vpop.f32.mrb[0].mxu0
        %v3120 = vpop.f32.mrb[0].mxu0
        %3121 = vmatprep.mubr.f32.mxu0 0.0
        %3122 = vmatmul.mubr.f32.gmra.mrb[0].mxu0 %v3028
        %v3123 = vpop.f32.mrb[0].mxu0
        %v3124 = vadd.f32 0.0, %v3123
        %v3125 = vpop.f32.mrb[0].mxu0
        %3126 = vmatprep.mubr.f32.mxu0 0.0
        %3127 = vmatmul.mubr.f32.gmra.mrb[0].mxu0 %v3027
        %v3128 = vpop.f32.mrb[0].mxu0
        %v3129 = vadd.f32 0.0, %v3128
        %v3130 = vpop.f32.mrb[0].mxu0
        %3131 = vmatprep.mubr.f32.mxu0 0.0
        %3132 = vmatmul.mubr.f32.gmra.mrb[0].mxu0 %v3026
        %v3133 = vpop.f32.mrb[0].mxu0
        %v3134 = vadd.f32 0.0, %v3133
        %v3135 = vpop.f32.mrb[0].mxu0
        %3136 = vmatprep.mubr.f32.mxu0 0.0
        %3137 = vmatmul.mubr.f32.gmra.mrb[0].mxu0 %v3025
        %v3138 = vpop.f32.mrb[0].mxu0
        %v3139 = vpop.f32.mrb[0].mxu0
        %3140 = vmatprep.mubr.f32.mxu0 0.0
        %3141 = vmatmul.mubr.f32.gmra.mrb[0].mxu0 %v3031
        %v3142 = vpop.f32.mrb[0].mxu0
        %v3143 = vpop.f32.mrb[0].mxu0
        %3144 = vdwg.mxu0
        %v3145 = vadd.f32 %v3015, %v3124
        %v3146 = vadd.f32 %v3016, %v3129
        %v3147 = vadd.f32 %v3017, %v3134
        %v3148 = vrot.slane %v2641, 2
        %v3149 = vrot.slane %v2642, 2
        %v3150 = vrot.slane %v2643, 2
        %v3151 = vrot.slane %v2644, 2
        %v3152 = vrot.slane %v2645, 2
        %v3153 = vrot.slane %v2646, 2
        %v3154 = vrot.slane %v2647, 2
        %v3155 = vsel %vm1064, %v3153, %v3154
        %v3156 = vsel %vm1064, %v3152, %v3153
        %v3157 = vsel %vm1064, %v3151, %v3152
        %v3158 = vsel %vm1064, %v3150, %v3151
        %v3159 = vsel %vm1064, %v3149, %v3150
        %v3160 = vsel %vm1064, %v3148, %v3149
        %v3161 = vsel %vm1064, %v3154, %v3148
        %s3162 = scalar_lea.vmem [#allocation8], 2432
        %v3163 = vld [vmem:[%s3162] sm:$0xff]
        %v3164 = vld [vmem:[%s3162 + $0x8] sm:$0xff]
        %v3165 = vld [vmem:[%s3162 + $0x10] sm:$0xff]
        %v3166 = vld [vmem:[%s3162 + $0x18] sm:$0xff]
        %v3167 = vld [vmem:[%s3162 + $0x20] sm:$0xff]
        %v3168 = vld [vmem:[%s3162 + $0x28] sm:$0xff]
        %v3169 = vld [vmem:[%s3162 + $0x30] sm:$0xff]
        %v3170 = vld [vmem:[%s3162 + $0x38] sm:$0xff]
        %v3171 = vld [vmem:[%s3162 + $0x40] sm:$0xff]
        %v3172 = vld [vmem:[%s3162 + $0x48] sm:$0xff]
        %v3173 = vld [vmem:[%s3162 + $0x50] sm:$0xff]
        %v3174 = vld [vmem:[%s3162 + $0x58] sm:$0xff]
        %v3175 = vld [vmem:[%s3162 + $0x60] sm:$0xff]
        %v3176 = vld [vmem:[%s3162 + $0x68] sm:$0xff]
        %v3177 = vld [vmem:[%s3162 + $0x70] sm:$0xff]
        %v3178 = vld [vmem:[%s3162 + $0x78] sm:$0xff]
        %3179 = vmatprep.subr.mxu0 0.0
        %3180 = vmatpush1.msra.mxu0 %v3163
        %3181 = vmatprep.subr.mxu0 0.0
        %3182 = vmatpush1.msra.mxu0 %v3164
        %3183 = vmatprep.subr.mxu0 0.0
        %3184 = vmatpush1.msra.mxu0 %v3165
        %3185 = vmatprep.subr.mxu0 0.0
        %3186 = vmatpush1.msra.mxu0 %v3166
        %3187 = vmatprep.subr.mxu0 0.0
        %3188 = vmatpush1.msra.mxu0 %v3167
        %3189 = vmatprep.subr.mxu0 0.0
        %3190 = vmatpush1.msra.mxu0 %v3168
        %3191 = vmatprep.subr.mxu0 0.0
        %3192 = vmatpush1.msra.mxu0 %v3169
        %3193 = vmatprep.subr.mxu0 0.0
        %3194 = vmatpush1.msra.mxu0 %v3170
        %3195 = vmatprep.subr.mxu0 0.0
        %3196 = vmatpush1.msra.mxu0 %v3171
        %3197 = vmatprep.subr.mxu0 0.0
        %3198 = vmatpush1.msra.mxu0 %v3172
        %3199 = vmatprep.subr.mxu0 0.0
        %3200 = vmatpush1.msra.mxu0 %v3173
        %3201 = vmatprep.subr.mxu0 0.0
        %3202 = vmatpush1.msra.mxu0 %v3174
        %3203 = vmatprep.subr.mxu0 0.0
        %3204 = vmatpush1.msra.mxu0 %v3175
        %3205 = vmatprep.subr.mxu0 0.0
        %3206 = vmatpush1.msra.mxu0 %v3176
        %3207 = vmatprep.subr.mxu0 0.0
        %3208 = vmatpush1.msra.mxu0 %v3177
        %3209 = vmatprep.subr.mxu0 0.0
        %3210 = vmatpush1.msra.mxu0 %v3178
        %3211 = vmatprep.subr.mxu0 0.0
        %3212 = vmatpush1.msra.mxu0 0.0
        %3213 = vmatprep.subr.mxu0 0.0
        %3214 = vmatpush1.msra.mxu0 0.0
        %3215 = vmatprep.subr.mxu0 0.0
        %3216 = vmatpush1.msra.mxu0 0.0
        %3217 = vmatprep.subr.mxu0 0.0
        %3218 = vmatpush1.msra.mxu0 0.0
        %3219 = vmatprep.subr.mxu0 0.0
        %3220 = vmatpush1.msra.mxu0 0.0
        %3221 = vmatprep.subr.mxu0 0.0
        %3222 = vmatpush1.msra.mxu0 0.0
        %3223 = vmatprep.subr.mxu0 0.0
        %3224 = vmatpush1.msra.mxu0 0.0
        %3225 = vmatprep.subr.mxu0 0.0
        %3226 = vmatpush1.msra.mxu0 0.0
        %3227 = vmatprep.subr.mxu0 0.0
        %3228 = vmatpush1.msra.mxu0 0.0
        %3229 = vmatprep.subr.mxu0 0.0
        %3230 = vmatpush1.msra.mxu0 0.0
        %3231 = vmatprep.subr.mxu0 0.0
        %3232 = vmatpush1.msra.mxu0 0.0
        %3233 = vmatprep.subr.mxu0 0.0
        %3234 = vmatpush1.msra.mxu0 0.0
        %3235 = vmatprep.subr.mxu0 0.0
        %3236 = vmatpush1.msra.mxu0 0.0
        %3237 = vmatprep.subr.mxu0 0.0
        %3238 = vmatpush1.msra.mxu0 0.0
        %3239 = vmatprep.subr.mxu0 0.0
        %3240 = vmatpush1.msra.mxu0 0.0
        %3241 = vmatprep.subr.mxu0 0.0
        %3242 = vmatpush1.msra.mxu0 0.0
        %3243 = vmatprep.mubr.f32.mxu0 0.0
        %3244 = vmatmul.mubr.f32.gmra.mrb[0].mxu0 %v3160
        %v3245 = vpop.f32.mrb[0].mxu0
        %v3246 = vpop.f32.mrb[0].mxu0
        %3247 = vmatprep.mubr.f32.mxu0 0.0
        %3248 = vmatmul.mubr.f32.gmra.mrb[0].mxu0 %v3159
        %v3249 = vpop.f32.mrb[0].mxu0
        %v3250 = vpop.f32.mrb[0].mxu0
        %3251 = vmatprep.mubr.f32.mxu0 0.0
        %3252 = vmatmul.mubr.f32.gmra.mrb[0].mxu0 %v3158
        %v3253 = vpop.f32.mrb[0].mxu0
        %v3254 = vadd.f32 0.0, %v3253
        %v3255 = vpop.f32.mrb[0].mxu0
        %3256 = vmatprep.mubr.f32.mxu0 0.0
        %3257 = vmatmul.mubr.f32.gmra.mrb[0].mxu0 %v3157
        %v3258 = vpop.f32.mrb[0].mxu0
        %v3259 = vadd.f32 0.0, %v3258
        %v3260 = vpop.f32.mrb[0].mxu0
        %3261 = vmatprep.mubr.f32.mxu0 0.0
        %3262 = vmatmul.mubr.f32.gmra.mrb[0].mxu0 %v3156
        %v3263 = vpop.f32.mrb[0].mxu0
        %v3264 = vadd.f32 0.0, %v3263
        %v3265 = vpop.f32.mrb[0].mxu0
        %3266 = vmatprep.mubr.f32.mxu0 0.0
        %3267 = vmatmul.mubr.f32.gmra.mrb[0].mxu0 %v3155
        %v3268 = vpop.f32.mrb[0].mxu0
        %v3269 = vpop.f32.mrb[0].mxu0
        %3270 = vmatprep.mubr.f32.mxu0 0.0
        %3271 = vmatmul.mubr.f32.gmra.mrb[0].mxu0 %v3161
        %v3272 = vpop.f32.mrb[0].mxu0
        %v3273 = vpop.f32.mrb[0].mxu0
        %3274 = vdwg.mxu0
        %v3275 = vadd.f32 %v3145, %v3254
        %v3276 = vadd.f32 %v3146, %v3259
        %v3277 = vadd.f32 %v3147, %v3264
        %s3278 = scalar_lea.vmem [#allocation9], 3
        %v3279 = vld [vmem:[%s3278] sm:$0x1]
        %v3281 = vlaneseq
        %v3282 = vshrl.u32 %v3281, 7
        %v3283 = vsub.s32 0, %v3282
        %v3284 = vrot.slane %v3279, %v3283
        %v3286 = vadd.f32 %v3275, %v3284
        %v3287 = vadd.f32 %v3276, %v3284
        %v3288 = vadd.f32 %v3277, %v3284
        %3289 = vst [vmem:[%s317] sm:$0xff] %v3286
        %3290 = vst [vmem:[%s317 + $0x8] sm:$0xff] %v3287
        %3291 = vst [vmem:[%s317 + $0x10] sm:$0xff] %v3288
        %p3292 = scmp.lt.s32.totalorder %s23, 1
        %s3293 = scalar_select %p3292, %s23, 1
        %p3294 = scmp.lt.s32.totalorder %s24, 0
        %s3295 = scalar_select %p3294, %s24, 0
        %s3296 = smul.addr %s3295, 3
        %s3297 = smul.addr %s3293, 3
        %s3298 = sadd.s32 %s3296, %s3297
        %s3299 = smul.addr %s3298, 8
        %s3300 = scalar_lea.vmem %s5, %s3299
        // Predicated region
        $region57: #{postnet_forward.1} parent=39 // pred_check
          %p3301 = pneg %p163
        $region58: #{postnet_forward.1} parent=39 // pred_check_branch
          %3303 = sbr.rel (%p3301) target = $region60
        $region59: #{postnet_forward.1} parent=39 // pred_region
          _
        $region60: #{postnet_forward.1} parent=39 // pred_fallthru
          _
      $region40: #{postnet_forward.1} parent=5 // pred_fallthru
        _
      %p3304 = scmp.le.s32.totalorder 2, %s14
      // Predicated region
      $region61: #{postnet_forward.1} parent=5 // pred_check
        %p3305 = pneg %p3304
      $region62: #{postnet_forward.1} parent=5 // pred_check_branch
        %3307 = sbr.rel (%p3305) target = $region64
      $region63: #{postnet_forward.1} parent=5 // pred_region
        %s3308 = ssub.s32 %s14, 2
        // Predicated region
        $region65: #{postnet_forward.1} parent=63 // pred_check
          %p3309 = pneg %p169
        $region66: #{postnet_forward.1} parent=63 // pred_check_branch
          %3311 = sbr.rel (%p3309) target = $region68
        $region67: #{postnet_forward.1} parent=63 // pred_region
          %p3312 = scmp.lt.s32.totalorder %s25, 1
          %s3313 = scalar_select %p3312, %s25, 1
          %p3314 = scmp.lt.s32.totalorder %s26, 0
          %s3315 = scalar_select %p3314, %s26, 0
          %s3316 = smul.addr %s3315, 3
          %s3317 = smul.addr %s3313, 3
          %s3318 = sadd.s32 %s3316, %s3317
          %s3319 = smul.addr %s3318, 8
          %s3320 = scalar_lea.vmem %s5, %s3319
        $region68: #{postnet_forward.1} parent=63 // pred_fallthru
          _
      $region64: #{postnet_forward.1} parent=5 // pred_fallthru
        _
    $region6: #{postnet_forward.1} parent=1 // loop_footer
      %s18 = sadd.s32 1, %s14
    $region7: #{postnet_forward.1} parent=1 // loop_footer_branch
      %13 = sbr.rel target = $region3
    $region8: #{postnet_forward.1} parent=1 // loop_exit
      _
    %3321 = vsyncpa [#allocation5], 1
    %s3322 = scalar_lea.sflag [#allocation5], 1
    %3323 = vsyncpa %s3322, 1
    %3324 = vsyncpa [#allocation7], 1
    %3325 = vsyncpa [#allocation10], 1

</llo_original>
